<compile_context>
chip_gen: v7x
topology: tpu7x:2x2x1
jax: 0.10.0
libtpu: 0.0.40
codegen_flags: <defaults>
</compile_context>

<pallas_src>
import math

import numpy as np
import jax
import jax.numpy as jnp
from jax.experimental import pallas as pl
from jax.experimental.pallas import tpu as pltpu

# ---------------- model hyper-parameters (small, consistent with the module) --
B = 2            # batch
N = 8            # sequence length (number of context points)
BN = B * N       # batch folded into rows
IN_DIM = 3       # input_dim of the LatentEncoder (x has 1 feature, y_d has 2)
H = 32           # num_hidden
NH = 4           # attention heads
DH = H // NH     # per-head hidden
L = 16           # num_latent
LN_EPS = 1e-5
SCALE = 1.0 / math.sqrt(DH)


# ------------------------------- Pallas kernel --------------------------------
def latent_encoder_kernel(enc_ref, eps_ref, bias_ref, pool_ref,
                          wi_ref, wqkv_ref, wfres_ref, wfattn_ref,
                          wp_ref, whead_ref, vecs_ref, out_ref):
    # vecs rows: [bi, bf0, gamma0, beta0, bf1, gamma1, beta1, bp, b_head]
    bi = vecs_ref[0:1]                                           # (1, H)

    x = enc_ref[...]                                             # (BN, IN_DIM)
    h = jnp.dot(x, wi_ref[...], preferred_element_type=jnp.float32) + bi

    attn_bias = bias_ref[...]                                    # (BN, BN) block-diag mask

    # two self-attention blocks (statically unrolled)
    for l in range(2):
        residual = h                                             # (BN, H)
        bf = vecs_ref[1 + 3 * l:2 + 3 * l]
        gamma = vecs_ref[2 + 3 * l:3 + 3 * l]
        beta = vecs_ref[3 + 3 * l:4 + 3 * l]

        # fused per-head QKV projection: one batched matmul per layer
        hb = jnp.broadcast_to(h[None], (NH, BN, H))              # (NH, BN, H)
        qkv = jnp.einsum('hnd,hdk->hnk', hb, wqkv_ref[l],
                         preferred_element_type=jnp.float32)     # (NH, BN, 3*DH)
        q = qkv[..., 0:DH]
        k = qkv[..., DH:2 * DH]
        v = qkv[..., 2 * DH:3 * DH]

        # head-batched scores with block-diagonal (per-batch) mask
        s = jnp.einsum('hqd,hkd->hqk', q, k,
                       preferred_element_type=jnp.float32) * SCALE + attn_bias
        s = s - jnp.max(s, axis=-1, keepdims=True)
        p = jnp.exp(s)
        p = p * pl.reciprocal(jnp.sum(p, axis=-1, keepdims=True), approx=True)
        o = jnp.einsum('hqk,hkd->hqd', p, v,
                       preferred_element_type=jnp.float32)       # (NH, BN, DH)

        # final_linear split: residual part + per-head attn part (no concats)
        attn_proj = jnp.sum(
            jnp.einsum('hqd,hdo->hqo', o, wfattn_ref[l],
                       preferred_element_type=jnp.float32),
            axis=0)                                              # (BN, H)
        r = (jnp.dot(residual, wfres_ref[l], preferred_element_type=jnp.float32)
             + attn_proj + bf)
        r = r + residual                                         # residual add

        # LayerNorm over the feature dim
        mean = jnp.mean(r, axis=-1, keepdims=True)
        var = jnp.mean((r - mean) ** 2, axis=-1, keepdims=True)
        h = (r - mean) * jax.lax.rsqrt(var + LN_EPS) * gamma + beta

    # per-batch mean over the sequence via a constant pooling matmul
    hid = jnp.dot(pool_ref[...], h, preferred_element_type=jnp.float32)  # (B, H)

    # penultimate layer + relu
    bp = vecs_ref[7:8]
    hid = jnp.maximum(
        jnp.dot(hid, wp_ref[...], preferred_element_type=jnp.float32) + bp, 0.0)

    # fused mu / log_sigma head
    bhead = vecs_ref[8:9]                                        # (1, 2L)
    head = jnp.dot(hid, whead_ref[...],
                   preferred_element_type=jnp.float32) + bhead   # (B, 2L) = [mu | ls]
    mu = head[:, 0:L]
    log_sigma = head[:, L:2 * L]
    z = eps_ref[...] * jnp.exp(0.5 * log_sigma) + mu             # reparameterisation

    # single lane-dense packed output: [mu | log_sigma | z]
    out_ref[...] = jnp.concatenate([head, z], axis=-1)           # (B, 3L)


# --------------------------- host-side weight packing --------------------------
def pack_params(params):
    (wi, bi, wq, wk, wv, wf, bf, gamma, beta, wp, bp, wm, bm, ws, bs) = params
    # per-head fused QKV weights: (2, NH, H, 3*DH)
    wq_h = wq.reshape(2, H, NH, DH).transpose(0, 2, 1, 3)
    wk_h = wk.reshape(2, H, NH, DH).transpose(0, 2, 1, 3)
    wv_h = wv.reshape(2, H, NH, DH).transpose(0, 2, 1, 3)
    wqkv_h = jnp.concatenate([wq_h, wk_h, wv_h], axis=-1)
    # final_linear split: residual rows / attention rows (per head)
    wf_res = wf[:, :H, :]                                        # (2, H, H)
    wf_attn_h = wf[:, H:, :].reshape(2, NH, DH, H)               # (2, NH, DH, H)
    # fused mu / log_sigma head
    w_head = jnp.concatenate([wm, ws], axis=-1)                  # (H, 2L)
    b_head = jnp.concatenate([bm, bs], axis=-1)                  # (1, 2L)
    # all bias / scale row vectors in one slab
    vecs = jnp.concatenate([bi, bf[0], gamma[0], beta[0],
                            bf[1], gamma[1], beta[1], bp, b_head], axis=0)  # (9, H)
    return (wi, wqkv_h, wf_res, wf_attn_h, wp, w_head, vecs)


# ------------------------------- wrapper ---------------------------------------
@jax.jit
def latent_encoder_forward(x, y, packed, eps):
    b = y.shape[0]
    n = x.shape[1]
    # glue: y.view(b, -1, 4, 2)[:, :, 0, :] and the feature concat (fused in jit)
    y_d = y.reshape(b, -1, 4, 2)[:, :, 0, :]                     # (B, N, 2)
    enc_in = jnp.concatenate([x, y_d], axis=-1).reshape(b * n, IN_DIM)

    # trace-time constants: block-diagonal attention mask + mean-pool matrix
    bid = np.arange(b * n) // n
    attn_bias = jnp.asarray(
        np.where(bid[:, None] == bid[None, :], 0.0, -1e30), dtype=jnp.float32)
    pool = jnp.asarray(
        np.where(np.arange(b)[:, None] == bid[None, :], 1.0 / n, 0.0),
        dtype=jnp.float32)

    vmem = pl.BlockSpec(memory_space=pltpu.MemorySpace.VMEM)
    out = pl.pallas_call(
        latent_encoder_kernel,
        out_shape=jax.ShapeDtypeStruct((b, 3 * L), jnp.float32),
        in_specs=[vmem] * (4 + len(packed)),
        out_specs=vmem,
    )(enc_in, eps, attn_bias, pool, *packed)

    return out[:, :L], out[:, L:2 * L], out[:, 2 * L:3 * L]


# ------------------------ deterministic parameter init -------------------------
def xavier_uniform(key, in_dim, out_dim, gain=1.0):
    bound = gain * math.sqrt(6.0 / (in_dim + out_dim))
    return jax.random.uniform(key, (in_dim, out_dim), jnp.float32, -bound, bound)


def linear_bias(key, in_dim, out_dim):
    bound = 1.0 / math.sqrt(in_dim)
    return jax.random.uniform(key, (1, out_dim), jnp.float32, -bound, bound)


def init_params(key):
    ks = iter(jax.random.split(key, 32))
    relu_gain = math.sqrt(2.0)

    # torch nn.Linear stores weight as (out, in); here weights are stored (in, out)
    # so y = x @ W is equivalent to torch's x @ W.T.
    wi = xavier_uniform(next(ks), IN_DIM, H)
    bi = linear_bias(next(ks), IN_DIM, H)

    wq = jnp.stack([xavier_uniform(next(ks), H, H) for _ in range(2)])
    wk = jnp.stack([xavier_uniform(next(ks), H, H) for _ in range(2)])
    wv = jnp.stack([xavier_uniform(next(ks), H, H) for _ in range(2)])
    wf = jnp.stack([xavier_uniform(next(ks), 2 * H, H) for _ in range(2)])
    bf = jnp.stack([linear_bias(next(ks), 2 * H, H) for _ in range(2)])
    gamma = jnp.ones((2, 1, H), jnp.float32)
    beta = jnp.zeros((2, 1, H), jnp.float32)

    wp = xavier_uniform(next(ks), H, H, gain=relu_gain)
    bp = linear_bias(next(ks), H, H)
    wm = xavier_uniform(next(ks), H, L)
    bm = linear_bias(next(ks), H, L)
    ws = xavier_uniform(next(ks), H, L)
    bs = linear_bias(next(ks), H, L)

    return (wi, bi, wq, wk, wv, wf, bf, gamma, beta, wp, bp, wm, bm, ws, bs)


# ------------------------------ pure-JAX reference ------------------------------
def reference_forward(x, y, params, eps):
    (wi, bi, wq, wk, wv, wf, bf, gamma, beta, wp, bp, wm, bm, ws, bs) = params
    b = y.shape[0]
    y_d = y.reshape(b, -1, 4, 2)[:, :, 0, :]
    h = jnp.concatenate([x, y_d], axis=-1) @ wi + bi              # (B, N, H)
    for l in range(2):
        residual = h
        q = (h @ wq[l]).reshape(b, N, NH, DH).transpose(0, 2, 1, 3)
        k = (h @ wk[l]).reshape(b, N, NH, DH).transpose(0, 2, 1, 3)
        v = (h @ wv[l]).reshape(b, N, NH, DH).transpose(0, 2, 1, 3)
        s = jnp.einsum('bhqd,bhkd->bhqk', q, k) / math.sqrt(DH)
        p = jax.nn.softmax(s, axis=-1)
        o = jnp.einsum('bhqk,bhkd->bhqd', p, v).transpose(0, 2, 1, 3).reshape(b, N, H)
        r = jnp.concatenate([residual, o], axis=-1) @ wf[l] + bf[l]
        r = r + residual
        mean = r.mean(-1, keepdims=True)
        var = ((r - mean) ** 2).mean(-1, keepdims=True)
        h = (r - mean) / jnp.sqrt(var + LN_EPS) * gamma[l] + beta[l]
    hid = h.mean(axis=1)
    hid = jax.nn.relu(hid @ wp + bp)
    mu = hid @ wm + bm
    ls = hid @ ws + bs
    z = eps * jnp.exp(0.5 * ls) + mu
    return mu, ls, z


# ----------------------------------- main ---------------------------------------
if __name__ == "__main__":
    key = jax.random.PRNGKey(0)
    k_param, k_x, k_y, k_eps = jax.random.split(key, 4)

    params = init_params(k_param)
    packed = pack_params(params)

    x = jax.random.normal(k_x, (B, N, 1), jnp.float32)            # x features
    y = jax.random.normal(k_y, (B, N, 8), jnp.float32)            # y (views to (B,N,4,2))
    eps = jax.random.normal(k_eps, (B, L), jnp.float32)           # reparam noise

    mu, log_sigma, z = latent_encoder_forward(x, y, packed, eps)
    jax.block_until_ready((mu, log_sigma, z))

    mu_r, ls_r, z_r = reference_forward(x, y, params, eps)
    assert jnp.allclose(mu, mu_r, atol=3e-3, rtol=3e-3)
    assert jnp.allclose(log_sigma, ls_r, atol=3e-3, rtol=3e-3)
    assert jnp.allclose(z, z_r, atol=3e-3, rtol=3e-3)

    print("KERNEL_OK")
</pallas_src>

<mosaic_0001>
module attributes {stable_mosaic.version = 11 : i64} {
  func.func @latent_encoder_kernel(%arg0: memref<16x3xf32, #tpu.memory_space<vmem>>, %arg1: memref<2x16xf32, #tpu.memory_space<vmem>>, %arg2: memref<16x16xf32, #tpu.memory_space<vmem>>, %arg3: memref<2x16xf32, #tpu.memory_space<vmem>>, %arg4: memref<3x32xf32, #tpu.memory_space<vmem>>, %arg5: memref<2x4x32x24xf32, #tpu.memory_space<vmem>>, %arg6: memref<2x32x32xf32, #tpu.memory_space<vmem>>, %arg7: memref<2x4x8x32xf32, #tpu.memory_space<vmem>>, %arg8: memref<32x32xf32, #tpu.memory_space<vmem>>, %arg9: memref<32x32xf32, #tpu.memory_space<vmem>>, %arg10: memref<9x32xf32, #tpu.memory_space<vmem>>, %arg11: memref<2x48xf32, #tpu.memory_space<vmem>>) attributes {dimension_semantics = [], scalar_prefetch = 0 : i64, scratch_operands = 0 : i64, tpu.core_type = #tpu.core_type<tc>} {
    %c0 = arith.constant 0 : index
    %c0_0 = arith.constant 0 : index
    %0 = vector.load %arg10[%c0, %c0_0] : memref<9x32xf32, #tpu.memory_space<vmem>>, vector<1x32xf32>
    %c0_1 = arith.constant 0 : index
    %c0_2 = arith.constant 0 : index
    %1 = vector.load %arg0[%c0_1, %c0_2] : memref<16x3xf32, #tpu.memory_space<vmem>>, vector<16x3xf32>
    %c0_3 = arith.constant 0 : index
    %c0_4 = arith.constant 0 : index
    %2 = vector.load %arg4[%c0_3, %c0_4] : memref<3x32xf32, #tpu.memory_space<vmem>>, vector<3x32xf32>
    %cst = arith.constant dense<0.000000e+00> : vector<16x32xf32>
    %3 = tpu.matmul %1, %2, %cst {dimension_numbers = #tpu.dot_dimension_numbers<[1], [0], [0], [1], [0, 0, 1, 1], [], []>} : vector<16x3xf32>, vector<3x32xf32>, vector<16x32xf32> -> vector<16x32xf32>
    %4 = vector.broadcast %0 : vector<1x32xf32> to vector<16x32xf32>
    %5 = arith.addf %3, %4 : vector<16x32xf32>
    %c0_5 = arith.constant 0 : index
    %c0_6 = arith.constant 0 : index
    %6 = vector.load %arg2[%c0_5, %c0_6] : memref<16x16xf32, #tpu.memory_space<vmem>>, vector<16x16xf32>
    %c1 = arith.constant 1 : index
    %c0_7 = arith.constant 0 : index
    %7 = vector.load %arg10[%c1, %c0_7] : memref<9x32xf32, #tpu.memory_space<vmem>>, vector<1x32xf32>
    %c2 = arith.constant 2 : index
    %c0_8 = arith.constant 0 : index
    %8 = vector.load %arg10[%c2, %c0_8] : memref<9x32xf32, #tpu.memory_space<vmem>>, vector<1x32xf32>
    %c3 = arith.constant 3 : index
    %c0_9 = arith.constant 0 : index
    %9 = vector.load %arg10[%c3, %c0_9] : memref<9x32xf32, #tpu.memory_space<vmem>>, vector<1x32xf32>
    %10 = vector.shape_cast %5 : vector<16x32xf32> to vector<1x16x32xf32>
    %11 = vector.shape_cast %10 : vector<1x16x32xf32> to vector<1x16x32xf32>
    %12 = vector.broadcast %11 : vector<1x16x32xf32> to vector<4x16x32xf32>
    %c0_10 = arith.constant 0 : index
    %c0_11 = arith.constant 0 : index
    %c0_12 = arith.constant 0 : index
    %c0_13 = arith.constant 0 : index
    %13 = vector.load %arg5[%c0_10, %c0_11, %c0_12, %c0_13] : memref<2x4x32x24xf32, #tpu.memory_space<vmem>>, vector<1x4x32x24xf32>
    %14 = vector.shape_cast %13 : vector<1x4x32x24xf32> to vector<4x32x24xf32>
    "tpu.trace_start"() <{level = 10 : i32, message = "hnd,hdk->hnk"}> : () -> ()
    %cst_14 = arith.constant dense<0.000000e+00> : vector<4x16x24xf32>
    %15 = tpu.matmul %12, %14, %cst_14 {dimension_numbers = #tpu.dot_dimension_numbers<[2], [1], [1], [2], [0, 0, 0, 1, 1, 2], [0], [0]>} : vector<4x16x32xf32>, vector<4x32x24xf32>, vector<4x16x24xf32> -> vector<4x16x24xf32>
    "tpu.trace_stop"() : () -> ()
    %16 = vector.extract_strided_slice %15 {offsets = [0, 0, 0], sizes = [4, 16, 8], strides = [1, 1, 1]} : vector<4x16x24xf32> to vector<4x16x8xf32>
    %17 = vector.extract_strided_slice %15 {offsets = [0, 0, 8], sizes = [4, 16, 8], strides = [1, 1, 1]} : vector<4x16x24xf32> to vector<4x16x8xf32>
    %18 = vector.extract_strided_slice %15 {offsets = [0, 0, 16], sizes = [4, 16, 8], strides = [1, 1, 1]} : vector<4x16x24xf32> to vector<4x16x8xf32>
    "tpu.trace_start"() <{level = 10 : i32, message = "hqd,hkd->hqk"}> : () -> ()
    %cst_15 = arith.constant dense<0.000000e+00> : vector<4x16x16xf32>
    %19 = tpu.matmul %16, %17, %cst_15 {dimension_numbers = #tpu.dot_dimension_numbers<[2], [2], [1], [1], [0, 0, 0, 1, 1, 1], [0], [0]>} : vector<4x16x8xf32>, vector<4x16x8xf32>, vector<4x16x16xf32> -> vector<4x16x16xf32>
    "tpu.trace_stop"() : () -> ()
    %cst_16 = arith.constant 0.353553385 : f32
    %20 = vector.broadcast %cst_16 : f32 to vector<4x16x16xf32>
    %21 = arith.mulf %19, %20 : vector<4x16x16xf32>
    %22 = vector.shape_cast %6 : vector<16x16xf32> to vector<1x16x16xf32>
    %23 = vector.broadcast %22 : vector<1x16x16xf32> to vector<4x16x16xf32>
    %24 = arith.addf %21, %23 : vector<4x16x16xf32>
    %cst_17 = arith.constant dense<0xFF800000> : vector<4x16xf32>
    %25 = vector.multi_reduction <maximumf>, %24, %cst_17 [2] : vector<4x16x16xf32> to vector<4x16xf32>
    %26 = vector.shape_cast %25 : vector<4x16xf32> to vector<4x16x1xf32>
    %27 = vector.broadcast %26 : vector<4x16x1xf32> to vector<4x16x16xf32>
    %28 = arith.subf %24, %27 : vector<4x16x16xf32>
    %29 = math.exp %28 : vector<4x16x16xf32>
    %cst_18 = arith.constant dense<0.000000e+00> : vector<4x16xf32>
    %30 = vector.multi_reduction <add>, %29, %cst_18 [2] : vector<4x16x16xf32> to vector<4x16xf32>
    %31 = vector.shape_cast %30 : vector<4x16xf32> to vector<4x16x1xf32>
    %32 = tpu.reciprocal %31 {approx = true} : vector<4x16x1xf32> -> vector<4x16x1xf32>
    %33 = vector.broadcast %32 : vector<4x16x1xf32> to vector<4x16x16xf32>
    %34 = arith.mulf %29, %33 : vector<4x16x16xf32>
    "tpu.trace_start"() <{level = 10 : i32, message = "hqk,hkd->hqd"}> : () -> ()
    %cst_19 = arith.constant dense<0.000000e+00> : vector<4x16x8xf32>
    %35 = tpu.matmul %34, %18, %cst_19 {dimension_numbers = #tpu.dot_dimension_numbers<[2], [1], [1], [2], [0, 0, 0, 1, 1, 2], [0], [0]>} : vector<4x16x16xf32>, vector<4x16x8xf32>, vector<4x16x8xf32> -> vector<4x16x8xf32>
    "tpu.trace_stop"() : () -> ()
    %c0_20 = arith.constant 0 : index
    %c0_21 = arith.constant 0 : index
    %c0_22 = arith.constant 0 : index
    %c0_23 = arith.constant 0 : index
    %36 = vector.load %arg7[%c0_20, %c0_21, %c0_22, %c0_23] : memref<2x4x8x32xf32, #tpu.memory_space<vmem>>, vector<1x4x8x32xf32>
    %37 = vector.shape_cast %36 : vector<1x4x8x32xf32> to vector<4x8x32xf32>
    "tpu.trace_start"() <{level = 10 : i32, message = "hqd,hdo->hqo"}> : () -> ()
    %cst_24 = arith.constant dense<0.000000e+00> : vector<4x16x32xf32>
    %38 = tpu.matmul %35, %37, %cst_24 {dimension_numbers = #tpu.dot_dimension_numbers<[2], [1], [1], [2], [0, 0, 0, 1, 1, 2], [0], [0]>} : vector<4x16x8xf32>, vector<4x8x32xf32>, vector<4x16x32xf32> -> vector<4x16x32xf32>
    "tpu.trace_stop"() : () -> ()
    %cst_25 = arith.constant dense<0.000000e+00> : vector<16x32xf32>
    %39 = vector.multi_reduction <add>, %38, %cst_25 [0] : vector<4x16x32xf32> to vector<16x32xf32>
    %c0_26 = arith.constant 0 : index
    %c0_27 = arith.constant 0 : index
    %c0_28 = arith.constant 0 : index
    %40 = vector.load %arg6[%c0_26, %c0_27, %c0_28] : memref<2x32x32xf32, #tpu.memory_space<vmem>>, vector<1x32x32xf32>
    %41 = vector.shape_cast %40 : vector<1x32x32xf32> to vector<32x32xf32>
    %cst_29 = arith.constant dense<0.000000e+00> : vector<16x32xf32>
    %42 = tpu.matmul %5, %41, %cst_29 {dimension_numbers = #tpu.dot_dimension_numbers<[1], [0], [0], [1], [0, 0, 1, 1], [], []>} : vector<16x32xf32>, vector<32x32xf32>, vector<16x32xf32> -> vector<16x32xf32>
    %43 = arith.addf %42, %39 : vector<16x32xf32>
    %44 = vector.broadcast %7 : vector<1x32xf32> to vector<16x32xf32>
    %45 = arith.addf %43, %44 : vector<16x32xf32>
    %46 = arith.addf %45, %5 : vector<16x32xf32>
    %cst_30 = arith.constant dense<0.000000e+00> : vector<16xf32>
    %47 = vector.multi_reduction <add>, %46, %cst_30 [1] : vector<16x32xf32> to vector<16xf32>
    %48 = vector.shape_cast %47 : vector<16xf32> to vector<16x1xf32>
    %cst_31 = arith.constant 3.200000e+01 : f32
    %49 = vector.broadcast %cst_31 : f32 to vector<16x1xf32>
    %50 = arith.divf %48, %49 : vector<16x1xf32>
    %51 = vector.broadcast %50 : vector<16x1xf32> to vector<16x32xf32>
    %52 = arith.subf %46, %51 : vector<16x32xf32>
    %53 = arith.mulf %52, %52 : vector<16x32xf32>
    %cst_32 = arith.constant dense<0.000000e+00> : vector<16xf32>
    %54 = vector.multi_reduction <add>, %53, %cst_32 [1] : vector<16x32xf32> to vector<16xf32>
    %55 = vector.shape_cast %54 : vector<16xf32> to vector<16x1xf32>
    %cst_33 = arith.constant 3.200000e+01 : f32
    %56 = vector.broadcast %cst_33 : f32 to vector<16x1xf32>
    %57 = arith.divf %55, %56 : vector<16x1xf32>
    %58 = vector.broadcast %50 : vector<16x1xf32> to vector<16x32xf32>
    %59 = arith.subf %46, %58 : vector<16x32xf32>
    %cst_34 = arith.constant 9.99999974E-6 : f32
    %60 = vector.broadcast %cst_34 : f32 to vector<16x1xf32>
    %61 = arith.addf %57, %60 : vector<16x1xf32>
    %62 = math.rsqrt %61 : vector<16x1xf32>
    %63 = vector.broadcast %62 : vector<16x1xf32> to vector<16x32xf32>
    %64 = arith.mulf %59, %63 : vector<16x32xf32>
    %65 = vector.broadcast %8 : vector<1x32xf32> to vector<16x32xf32>
    %66 = arith.mulf %64, %65 : vector<16x32xf32>
    %67 = vector.broadcast %9 : vector<1x32xf32> to vector<16x32xf32>
    %68 = arith.addf %66, %67 : vector<16x32xf32>
    %c4 = arith.constant 4 : index
    %c0_35 = arith.constant 0 : index
    %69 = vector.load %arg10[%c4, %c0_35] : memref<9x32xf32, #tpu.memory_space<vmem>>, vector<1x32xf32>
    %c5 = arith.constant 5 : index
    %c0_36 = arith.constant 0 : index
    %70 = vector.load %arg10[%c5, %c0_36] : memref<9x32xf32, #tpu.memory_space<vmem>>, vector<1x32xf32>
    %c6 = arith.constant 6 : index
    %c0_37 = arith.constant 0 : index
    %71 = vector.load %arg10[%c6, %c0_37] : memref<9x32xf32, #tpu.memory_space<vmem>>, vector<1x32xf32>
    %72 = vector.shape_cast %68 : vector<16x32xf32> to vector<1x16x32xf32>
    %73 = vector.shape_cast %72 : vector<1x16x32xf32> to vector<1x16x32xf32>
    %74 = vector.broadcast %73 : vector<1x16x32xf32> to vector<4x16x32xf32>
    %c1_38 = arith.constant 1 : index
    %c0_39 = arith.constant 0 : index
    %c0_40 = arith.constant 0 : index
    %c0_41 = arith.constant 0 : index
    %75 = vector.load %arg5[%c1_38, %c0_39, %c0_40, %c0_41] : memref<2x4x32x24xf32, #tpu.memory_space<vmem>>, vector<1x4x32x24xf32>
    %76 = vector.shape_cast %75 : vector<1x4x32x24xf32> to vector<4x32x24xf32>
    "tpu.trace_start"() <{level = 10 : i32, message = "hnd,hdk->hnk"}> : () -> ()
    %cst_42 = arith.constant dense<0.000000e+00> : vector<4x16x24xf32>
    %77 = tpu.matmul %74, %76, %cst_42 {dimension_numbers = #tpu.dot_dimension_numbers<[2], [1], [1], [2], [0, 0, 0, 1, 1, 2], [0], [0]>} : vector<4x16x32xf32>, vector<4x32x24xf32>, vector<4x16x24xf32> -> vector<4x16x24xf32>
    "tpu.trace_stop"() : () -> ()
    %78 = vector.extract_strided_slice %77 {offsets = [0, 0, 0], sizes = [4, 16, 8], strides = [1, 1, 1]} : vector<4x16x24xf32> to vector<4x16x8xf32>
    %79 = vector.extract_strided_slice %77 {offsets = [0, 0, 8], sizes = [4, 16, 8], strides = [1, 1, 1]} : vector<4x16x24xf32> to vector<4x16x8xf32>
    %80 = vector.extract_strided_slice %77 {offsets = [0, 0, 16], sizes = [4, 16, 8], strides = [1, 1, 1]} : vector<4x16x24xf32> to vector<4x16x8xf32>
    "tpu.trace_start"() <{level = 10 : i32, message = "hqd,hkd->hqk"}> : () -> ()
    %cst_43 = arith.constant dense<0.000000e+00> : vector<4x16x16xf32>
    %81 = tpu.matmul %78, %79, %cst_43 {dimension_numbers = #tpu.dot_dimension_numbers<[2], [2], [1], [1], [0, 0, 0, 1, 1, 1], [0], [0]>} : vector<4x16x8xf32>, vector<4x16x8xf32>, vector<4x16x16xf32> -> vector<4x16x16xf32>
    "tpu.trace_stop"() : () -> ()
    %cst_44 = arith.constant 0.353553385 : f32
    %82 = vector.broadcast %cst_44 : f32 to vector<4x16x16xf32>
    %83 = arith.mulf %81, %82 : vector<4x16x16xf32>
    %84 = vector.shape_cast %6 : vector<16x16xf32> to vector<1x16x16xf32>
    %85 = vector.broadcast %84 : vector<1x16x16xf32> to vector<4x16x16xf32>
    %86 = arith.addf %83, %85 : vector<4x16x16xf32>
    %cst_45 = arith.constant dense<0xFF800000> : vector<4x16xf32>
    %87 = vector.multi_reduction <maximumf>, %86, %cst_45 [2] : vector<4x16x16xf32> to vector<4x16xf32>
    %88 = vector.shape_cast %87 : vector<4x16xf32> to vector<4x16x1xf32>
    %89 = vector.broadcast %88 : vector<4x16x1xf32> to vector<4x16x16xf32>
    %90 = arith.subf %86, %89 : vector<4x16x16xf32>
    %91 = math.exp %90 : vector<4x16x16xf32>
    %cst_46 = arith.constant dense<0.000000e+00> : vector<4x16xf32>
    %92 = vector.multi_reduction <add>, %91, %cst_46 [2] : vector<4x16x16xf32> to vector<4x16xf32>
    %93 = vector.shape_cast %92 : vector<4x16xf32> to vector<4x16x1xf32>
    %94 = tpu.reciprocal %93 {approx = true} : vector<4x16x1xf32> -> vector<4x16x1xf32>
    %95 = vector.broadcast %94 : vector<4x16x1xf32> to vector<4x16x16xf32>
    %96 = arith.mulf %91, %95 : vector<4x16x16xf32>
    "tpu.trace_start"() <{level = 10 : i32, message = "hqk,hkd->hqd"}> : () -> ()
    %cst_47 = arith.constant dense<0.000000e+00> : vector<4x16x8xf32>
    %97 = tpu.matmul %96, %80, %cst_47 {dimension_numbers = #tpu.dot_dimension_numbers<[2], [1], [1], [2], [0, 0, 0, 1, 1, 2], [0], [0]>} : vector<4x16x16xf32>, vector<4x16x8xf32>, vector<4x16x8xf32> -> vector<4x16x8xf32>
    "tpu.trace_stop"() : () -> ()
    %c1_48 = arith.constant 1 : index
    %c0_49 = arith.constant 0 : index
    %c0_50 = arith.constant 0 : index
    %c0_51 = arith.constant 0 : index
    %98 = vector.load %arg7[%c1_48, %c0_49, %c0_50, %c0_51] : memref<2x4x8x32xf32, #tpu.memory_space<vmem>>, vector<1x4x8x32xf32>
    %99 = vector.shape_cast %98 : vector<1x4x8x32xf32> to vector<4x8x32xf32>
    "tpu.trace_start"() <{level = 10 : i32, message = "hqd,hdo->hqo"}> : () -> ()
    %cst_52 = arith.constant dense<0.000000e+00> : vector<4x16x32xf32>
    %100 = tpu.matmul %97, %99, %cst_52 {dimension_numbers = #tpu.dot_dimension_numbers<[2], [1], [1], [2], [0, 0, 0, 1, 1, 2], [0], [0]>} : vector<4x16x8xf32>, vector<4x8x32xf32>, vector<4x16x32xf32> -> vector<4x16x32xf32>
    "tpu.trace_stop"() : () -> ()
    %cst_53 = arith.constant dense<0.000000e+00> : vector<16x32xf32>
    %101 = vector.multi_reduction <add>, %100, %cst_53 [0] : vector<4x16x32xf32> to vector<16x32xf32>
    %c1_54 = arith.constant 1 : index
    %c0_55 = arith.constant 0 : index
    %c0_56 = arith.constant 0 : index
    %102 = vector.load %arg6[%c1_54, %c0_55, %c0_56] : memref<2x32x32xf32, #tpu.memory_space<vmem>>, vector<1x32x32xf32>
    %103 = vector.shape_cast %102 : vector<1x32x32xf32> to vector<32x32xf32>
    %cst_57 = arith.constant dense<0.000000e+00> : vector<16x32xf32>
    %104 = tpu.matmul %68, %103, %cst_57 {dimension_numbers = #tpu.dot_dimension_numbers<[1], [0], [0], [1], [0, 0, 1, 1], [], []>} : vector<16x32xf32>, vector<32x32xf32>, vector<16x32xf32> -> vector<16x32xf32>
    %105 = arith.addf %104, %101 : vector<16x32xf32>
    %106 = vector.broadcast %69 : vector<1x32xf32> to vector<16x32xf32>
    %107 = arith.addf %105, %106 : vector<16x32xf32>
    %108 = arith.addf %107, %68 : vector<16x32xf32>
    %cst_58 = arith.constant dense<0.000000e+00> : vector<16xf32>
    %109 = vector.multi_reduction <add>, %108, %cst_58 [1] : vector<16x32xf32> to vector<16xf32>
    %110 = vector.shape_cast %109 : vector<16xf32> to vector<16x1xf32>
    %cst_59 = arith.constant 3.200000e+01 : f32
    %111 = vector.broadcast %cst_59 : f32 to vector<16x1xf32>
    %112 = arith.divf %110, %111 : vector<16x1xf32>
    %113 = vector.broadcast %112 : vector<16x1xf32> to vector<16x32xf32>
    %114 = arith.subf %108, %113 : vector<16x32xf32>
    %115 = arith.mulf %114, %114 : vector<16x32xf32>
    %cst_60 = arith.constant dense<0.000000e+00> : vector<16xf32>
    %116 = vector.multi_reduction <add>, %115, %cst_60 [1] : vector<16x32xf32> to vector<16xf32>
    %117 = vector.shape_cast %116 : vector<16xf32> to vector<16x1xf32>
    %cst_61 = arith.constant 3.200000e+01 : f32
    %118 = vector.broadcast %cst_61 : f32 to vector<16x1xf32>
    %119 = arith.divf %117, %118 : vector<16x1xf32>
    %120 = vector.broadcast %112 : vector<16x1xf32> to vector<16x32xf32>
    %121 = arith.subf %108, %120 : vector<16x32xf32>
    %cst_62 = arith.constant 9.99999974E-6 : f32
    %122 = vector.broadcast %cst_62 : f32 to vector<16x1xf32>
    %123 = arith.addf %119, %122 : vector<16x1xf32>
    %124 = math.rsqrt %123 : vector<16x1xf32>
    %125 = vector.broadcast %124 : vector<16x1xf32> to vector<16x32xf32>
    %126 = arith.mulf %121, %125 : vector<16x32xf32>
    %127 = vector.broadcast %70 : vector<1x32xf32> to vector<16x32xf32>
    %128 = arith.mulf %126, %127 : vector<16x32xf32>
    %129 = vector.broadcast %71 : vector<1x32xf32> to vector<16x32xf32>
    %130 = arith.addf %128, %129 : vector<16x32xf32>
    %c0_63 = arith.constant 0 : index
    %c0_64 = arith.constant 0 : index
    %131 = vector.load %arg3[%c0_63, %c0_64] : memref<2x16xf32, #tpu.memory_space<vmem>>, vector<2x16xf32>
    %cst_65 = arith.constant dense<0.000000e+00> : vector<2x32xf32>
    %132 = tpu.matmul %131, %130, %cst_65 {dimension_numbers = #tpu.dot_dimension_numbers<[1], [0], [0], [1], [0, 0, 1, 1], [], []>} : vector<2x16xf32>, vector<16x32xf32>, vector<2x32xf32> -> vector<2x32xf32>
    %c7 = arith.constant 7 : index
    %c0_66 = arith.constant 0 : index
    %133 = vector.load %arg10[%c7, %c0_66] : memref<9x32xf32, #tpu.memory_space<vmem>>, vector<1x32xf32>
    %c0_67 = arith.constant 0 : index
    %c0_68 = arith.constant 0 : index
    %134 = vector.load %arg8[%c0_67, %c0_68] : memref<32x32xf32, #tpu.memory_space<vmem>>, vector<32x32xf32>
    %cst_69 = arith.constant dense<0.000000e+00> : vector<2x32xf32>
    %135 = tpu.matmul %132, %134, %cst_69 {dimension_numbers = #tpu.dot_dimension_numbers<[1], [0], [0], [1], [0, 0, 1, 1], [], []>} : vector<2x32xf32>, vector<32x32xf32>, vector<2x32xf32> -> vector<2x32xf32>
    %136 = vector.broadcast %133 : vector<1x32xf32> to vector<2x32xf32>
    %137 = arith.addf %135, %136 : vector<2x32xf32>
    %cst_70 = arith.constant 0.000000e+00 : f32
    %138 = vector.broadcast %cst_70 : f32 to vector<2x32xf32>
    %139 = arith.maximumf %137, %138 : vector<2x32xf32>
    %c8 = arith.constant 8 : index
    %c0_71 = arith.constant 0 : index
    %140 = vector.load %arg10[%c8, %c0_71] : memref<9x32xf32, #tpu.memory_space<vmem>>, vector<1x32xf32>
    %c0_72 = arith.constant 0 : index
    %c0_73 = arith.constant 0 : index
    %141 = vector.load %arg9[%c0_72, %c0_73] : memref<32x32xf32, #tpu.memory_space<vmem>>, vector<32x32xf32>
    %cst_74 = arith.constant dense<0.000000e+00> : vector<2x32xf32>
    %142 = tpu.matmul %139, %141, %cst_74 {dimension_numbers = #tpu.dot_dimension_numbers<[1], [0], [0], [1], [0, 0, 1, 1], [], []>} : vector<2x32xf32>, vector<32x32xf32>, vector<2x32xf32> -> vector<2x32xf32>
    %143 = vector.broadcast %140 : vector<1x32xf32> to vector<2x32xf32>
    %144 = arith.addf %142, %143 : vector<2x32xf32>
    %145 = vector.extract_strided_slice %144 {offsets = [0, 0], sizes = [2, 16], strides = [1, 1]} : vector<2x32xf32> to vector<2x16xf32>
    %146 = vector.extract_strided_slice %144 {offsets = [0, 16], sizes = [2, 16], strides = [1, 1]} : vector<2x32xf32> to vector<2x16xf32>
    %c0_75 = arith.constant 0 : index
    %c0_76 = arith.constant 0 : index
    %147 = vector.load %arg1[%c0_75, %c0_76] : memref<2x16xf32, #tpu.memory_space<vmem>>, vector<2x16xf32>
    %cst_77 = arith.constant 5.000000e-01 : f32
    %148 = vector.broadcast %cst_77 : f32 to vector<2x16xf32>
    %149 = arith.mulf %148, %146 : vector<2x16xf32>
    %150 = math.exp %149 : vector<2x16xf32>
    %151 = arith.mulf %147, %150 : vector<2x16xf32>
    %152 = arith.addf %151, %145 : vector<2x16xf32>
    %153 = tpu.concatenate %144, %152 in 1 : vector<2x32xf32>, vector<2x16xf32> -> vector<2x48xf32>
    %c0_78 = arith.constant 0 : index
    %c0_79 = arith.constant 0 : index
    %154 = vector.load %arg11[%c0_78, %c0_79] : memref<2x48xf32, #tpu.memory_space<vmem>>, vector<2x48xf32>
    tpu.vector_store %arg11[%c0_78, %c0_79], %153 {strides = array<i32>} : memref<2x48xf32, #tpu.memory_space<vmem>>, vector<2x48xf32>,
    return
  }
}

</mosaic_0001>

<llo_original>
// kernel: latent_encoder_forward.1
$region0: #{latent_encoder_forward.1}
  #allocation0 [shape = 'u32[]', space=smem, size = 0x4, offset = 0x4, fixed_abs, tag = 'smem constant byte address 0x4 - core index']
  #allocation1 [shape = 'u32[144,128]{1,0:T(1,128)}', space=vmem, size = 0x12000, scoped, tag = 'internal scratch']
  %s0 = inlined_call_operand.vmem [shape: f32[16,3], index: 0, kind: input, shape index: {}]
  %s1 = inlined_call_operand.vmem [shape: f32[2,16], index: 1, kind: input, shape index: {}]
  %s2 = inlined_call_operand.vmem [shape: f32[16,16], index: 2, kind: input, shape index: {}]
  %s3 = inlined_call_operand.vmem [shape: f32[2,16], index: 3, kind: input, shape index: {}]
  %s4 = inlined_call_operand.vmem [shape: f32[3,32], index: 4, kind: input, shape index: {}]
  %s5 = inlined_call_operand.vmem [shape: f32[2,4,32,24], index: 5, kind: input, shape index: {}]
  %s6 = inlined_call_operand.vmem [shape: f32[2,32,32], index: 6, kind: input, shape index: {}]
  %s7 = inlined_call_operand.vmem [shape: f32[2,4,8,32], index: 7, kind: input, shape index: {}]
  %s8 = inlined_call_operand.vmem [shape: f32[32,32], index: 8, kind: input, shape index: {}]
  %s9 = inlined_call_operand.vmem [shape: f32[32,32], index: 9, kind: input, shape index: {}]
  %s10 = inlined_call_operand.vmem [shape: f32[9,32], index: 10, kind: input, shape index: {}]
  %s11 = inlined_call_operand.vmem [shape: f32[2,48], index: 11, kind: output, shape index: {}]
  %s12 = sld [smem:[#allocation0]]
  $region54: #{latent_encoder_forward.1} parent=0
    _
  %s14 = ssub.s32 1, %s12
  %s15 = scalar_select 0, %s14, %s12
  // Predicated region
  $region2: #{latent_encoder_forward.1} parent=0 // pred_check
    _
  $region3: #{latent_encoder_forward.1} parent=0 // pred_check_branch
    %17 = sbr.rel (0) target = $region5
  $region4: #{latent_encoder_forward.1} parent=0 // pred_region
    _
  $region5: #{latent_encoder_forward.1} parent=0 // pred_fallthru
    _
  // Predicated region
  $region6: #{latent_encoder_forward.1} parent=0 // pred_check
    _
  $region7: #{latent_encoder_forward.1} parent=0 // pred_check_branch
    %19 = sbr.rel (0) target = $region9
  $region8: #{latent_encoder_forward.1} parent=0 // pred_region
    _
  $region9: #{latent_encoder_forward.1} parent=0 // pred_fallthru
    _
  // Predicated region
  $region10: #{latent_encoder_forward.1} parent=0 // pred_check
    _
  $region11: #{latent_encoder_forward.1} parent=0 // pred_check_branch
    %21 = sbr.rel (0) target = $region13
  $region12: #{latent_encoder_forward.1} parent=0 // pred_region
    _
  $region13: #{latent_encoder_forward.1} parent=0 // pred_fallthru
    _
  // Predicated region
  $region14: #{latent_encoder_forward.1} parent=0 // pred_check
    _
  $region15: #{latent_encoder_forward.1} parent=0 // pred_check_branch
    %23 = sbr.rel (0) target = $region17
  $region16: #{latent_encoder_forward.1} parent=0 // pred_region
    _
  $region17: #{latent_encoder_forward.1} parent=0 // pred_fallthru
    _
  // Predicated region
  $region18: #{latent_encoder_forward.1} parent=0 // pred_check
    _
  $region19: #{latent_encoder_forward.1} parent=0 // pred_check_branch
    %25 = sbr.rel (0) target = $region21
  $region20: #{latent_encoder_forward.1} parent=0 // pred_region
    _
  $region21: #{latent_encoder_forward.1} parent=0 // pred_fallthru
    _
  // Predicated region
  $region22: #{latent_encoder_forward.1} parent=0 // pred_check
    _
  $region23: #{latent_encoder_forward.1} parent=0 // pred_check_branch
    %27 = sbr.rel (0) target = $region25
  $region24: #{latent_encoder_forward.1} parent=0 // pred_region
    _
  $region25: #{latent_encoder_forward.1} parent=0 // pred_fallthru
    _
  // Predicated region
  $region26: #{latent_encoder_forward.1} parent=0 // pred_check
    _
  $region27: #{latent_encoder_forward.1} parent=0 // pred_check_branch
    %29 = sbr.rel (0) target = $region29
  $region28: #{latent_encoder_forward.1} parent=0 // pred_region
    _
  $region29: #{latent_encoder_forward.1} parent=0 // pred_fallthru
    _
  // Predicated region
  $region30: #{latent_encoder_forward.1} parent=0 // pred_check
    _
  $region31: #{latent_encoder_forward.1} parent=0 // pred_check_branch
    %31 = sbr.rel (0) target = $region33
  $region32: #{latent_encoder_forward.1} parent=0 // pred_region
    _
  $region33: #{latent_encoder_forward.1} parent=0 // pred_fallthru
    _
  // Predicated region
  $region34: #{latent_encoder_forward.1} parent=0 // pred_check
    _
  $region35: #{latent_encoder_forward.1} parent=0 // pred_check_branch
    %33 = sbr.rel (0) target = $region37
  $region36: #{latent_encoder_forward.1} parent=0 // pred_region
    _
  $region37: #{latent_encoder_forward.1} parent=0 // pred_fallthru
    _
  // Predicated region
  $region38: #{latent_encoder_forward.1} parent=0 // pred_check
    _
  $region39: #{latent_encoder_forward.1} parent=0 // pred_check_branch
    %35 = sbr.rel (0) target = $region41
  $region40: #{latent_encoder_forward.1} parent=0 // pred_region
    _
  $region41: #{latent_encoder_forward.1} parent=0 // pred_fallthru
    _
  // Predicated region
  $region42: #{latent_encoder_forward.1} parent=0 // pred_check
    _
  $region43: #{latent_encoder_forward.1} parent=0 // pred_check_branch
    %37 = sbr.rel (0) target = $region45
  $region44: #{latent_encoder_forward.1} parent=0 // pred_region
    _
  $region45: #{latent_encoder_forward.1} parent=0 // pred_fallthru
    _
  %v38 = vld [vmem:[%s10] sm:$0x1]
  %v39 = vld [vmem:[%s0] sm:$0xff]
  %v40 = vld [vmem:[%s0 + $0x8] sm:$0xff]
  %v41 = vld [vmem:[%s4] sm:$0x7]
  %v42 = vlaneseq
  %v43 = vshrl.u32 %v42, 7
  %v44 = vsub.s32 0, %v43
  %v45 = vrot.slane %v38, %v44
  %vm46 = vcmask 23552
  %v48 = vsel %vm46, %v39, 0
  %v51 = vsel %vm46, %v40, 0
  %vm53 = vcmask 1042432
  %v55 = vsel %vm53, %v41, 0
  %57 = vmatprep.subr.mxu0 0.0
  %58 = vmatpush1.msra.mxu0 %v55
  %59 = vmatprep.subr.mxu0 0.0
  %60 = vmatpush1.msra.mxu0 0.0
  %61 = vmatprep.subr.mxu0 0.0
  %62 = vmatpush1.msra.mxu0 0.0
  %63 = vmatprep.subr.mxu0 0.0
  %64 = vmatpush1.msra.mxu0 0.0
  %65 = vmatprep.subr.mxu0 0.0
  %66 = vmatpush1.msra.mxu0 0.0
  %67 = vmatprep.subr.mxu0 0.0
  %68 = vmatpush1.msra.mxu0 0.0
  %69 = vmatprep.subr.mxu0 0.0
  %70 = vmatpush1.msra.mxu0 0.0
  %71 = vmatprep.subr.mxu0 0.0
  %72 = vmatpush1.msra.mxu0 0.0
  %73 = vmatprep.subr.mxu0 0.0
  %74 = vmatpush1.msra.mxu0 0.0
  %75 = vmatprep.subr.mxu0 0.0
  %76 = vmatpush1.msra.mxu0 0.0
  %77 = vmatprep.subr.mxu0 0.0
  %78 = vmatpush1.msra.mxu0 0.0
  %79 = vmatprep.subr.mxu0 0.0
  %80 = vmatpush1.msra.mxu0 0.0
  %81 = vmatprep.subr.mxu0 0.0
  %82 = vmatpush1.msra.mxu0 0.0
  %83 = vmatprep.subr.mxu0 0.0
  %84 = vmatpush1.msra.mxu0 0.0
  %85 = vmatprep.subr.mxu0 0.0
  %86 = vmatpush1.msra.mxu0 0.0
  %87 = vmatprep.subr.mxu0 0.0
  %88 = vmatpush1.msra.mxu0 0.0
  %89 = vmatprep.subr.mxu0 0.0
  %90 = vmatpush1.msra.mxu0 0.0
  %91 = vmatprep.subr.mxu0 0.0
  %92 = vmatpush1.msra.mxu0 0.0
  %93 = vmatprep.subr.mxu0 0.0
  %94 = vmatpush1.msra.mxu0 0.0
  %95 = vmatprep.subr.mxu0 0.0
  %96 = vmatpush1.msra.mxu0 0.0
  %97 = vmatprep.subr.mxu0 0.0
  %98 = vmatpush1.msra.mxu0 0.0
  %99 = vmatprep.subr.mxu0 0.0
  %100 = vmatpush1.msra.mxu0 0.0
  %101 = vmatprep.subr.mxu0 0.0
  %102 = vmatpush1.msra.mxu0 0.0
  %103 = vmatprep.subr.mxu0 0.0
  %104 = vmatpush1.msra.mxu0 0.0
  %105 = vmatprep.subr.mxu0 0.0
  %106 = vmatpush1.msra.mxu0 0.0
  %107 = vmatprep.subr.mxu0 0.0
  %108 = vmatpush1.msra.mxu0 0.0
  %109 = vmatprep.subr.mxu0 0.0
  %110 = vmatpush1.msra.mxu0 0.0
  %111 = vmatprep.subr.mxu0 0.0
  %112 = vmatpush1.msra.mxu0 0.0
  %113 = vmatprep.subr.mxu0 0.0
  %114 = vmatpush1.msra.mxu0 0.0
  %115 = vmatprep.subr.mxu0 0.0
  %116 = vmatpush1.msra.mxu0 0.0
  %117 = vmatprep.subr.mxu0 0.0
  %118 = vmatpush1.msra.mxu0 0.0
  %119 = vmatprep.subr.mxu0 0.0
  %120 = vmatpush1.msra.mxu0 0.0
  %121 = vmatprep.mubr.f32.mxu0 0.0
  %122 = vmatmul.mubr.f32.gmra.mrb[0].mxu0 %v48
  %v123 = vpop.f32.mrb[0].mxu0
  %v124 = vadd.f32 %v45, %v123
  %v125 = vpop.f32.mrb[0].mxu0
  %126 = vmatprep.mubr.f32.mxu0 0.0
  %127 = vmatmul.mubr.f32.gmra.mrb[0].mxu0 %v51
  %v128 = vpop.f32.mrb[0].mxu0
  %v129 = vadd.f32 %v45, %v128
  %v130 = vpop.f32.mrb[0].mxu0
  %131 = vdwg.mxu0
  %v132 = vld [vmem:[%s2] sm:$0xff]
  %v133 = vld [vmem:[%s2 + $0x8] sm:$0xff]
  %v134 = vld [vmem:[%s10 + $0x1] sm:$0x1]
  %v135 = vld [vmem:[%s10 + $0x2] sm:$0x1]
  %v136 = vld [vmem:[%s10 + $0x3] sm:$0x1]
  %v137 = vld [vmem:[%s5] sm:$0xff]
  %v138 = vld [vmem:[%s5 + $0x8] sm:$0xff]
  %v139 = vld [vmem:[%s5 + $0x10] sm:$0xff]
  %v140 = vld [vmem:[%s5 + $0x18] sm:$0xff]
  %v141 = vld [vmem:[%s5 + $0x20] sm:$0xff]
  %v142 = vld [vmem:[%s5 + $0x28] sm:$0xff]
  %v143 = vld [vmem:[%s5 + $0x30] sm:$0xff]
  %v144 = vld [vmem:[%s5 + $0x38] sm:$0xff]
  %v145 = vld [vmem:[%s5 + $0x40] sm:$0xff]
  %v146 = vld [vmem:[%s5 + $0x48] sm:$0xff]
  %v147 = vld [vmem:[%s5 + $0x50] sm:$0xff]
  %v148 = vld [vmem:[%s5 + $0x58] sm:$0xff]
  %v149 = vld [vmem:[%s5 + $0x60] sm:$0xff]
  %v150 = vld [vmem:[%s5 + $0x68] sm:$0xff]
  %v151 = vld [vmem:[%s5 + $0x70] sm:$0xff]
  %v152 = vld [vmem:[%s5 + $0x78] sm:$0xff]
  %vm153 = vcmask 261120
  %v155 = vsel %vm153, %v124, 0
  %v158 = vsel %vm153, %v129, 0
  %160 = vmatprep.subr.mxu0 0.0
  %161 = vmatpush1.msra.mxu0 %v137
  %162 = vmatprep.subr.mxu0 0.0
  %163 = vmatpush1.msra.mxu0 %v138
  %164 = vmatprep.subr.mxu0 0.0
  %165 = vmatpush1.msra.mxu0 %v139
  %166 = vmatprep.subr.mxu0 0.0
  %167 = vmatpush1.msra.mxu0 %v140
  %168 = vmatprep.subr.mxu0 0.0
  %169 = vmatpush1.msra.mxu0 0.0
  %170 = vmatprep.subr.mxu0 0.0
  %171 = vmatpush1.msra.mxu0 0.0
  %172 = vmatprep.subr.mxu0 0.0
  %173 = vmatpush1.msra.mxu0 0.0
  %174 = vmatprep.subr.mxu0 0.0
  %175 = vmatpush1.msra.mxu0 0.0
  %176 = vmatprep.subr.mxu0 0.0
  %177 = vmatpush1.msra.mxu0 0.0
  %178 = vmatprep.subr.mxu0 0.0
  %179 = vmatpush1.msra.mxu0 0.0
  %180 = vmatprep.subr.mxu0 0.0
  %181 = vmatpush1.msra.mxu0 0.0
  %182 = vmatprep.subr.mxu0 0.0
  %183 = vmatpush1.msra.mxu0 0.0
  %184 = vmatprep.subr.mxu0 0.0
  %185 = vmatpush1.msra.mxu0 0.0
  %186 = vmatprep.subr.mxu0 0.0
  %187 = vmatpush1.msra.mxu0 0.0
  %188 = vmatprep.subr.mxu0 0.0
  %189 = vmatpush1.msra.mxu0 0.0
  %190 = vmatprep.subr.mxu0 0.0
  %191 = vmatpush1.msra.mxu0 0.0
  %192 = vmatprep.subr.mxu0 0.0
  %193 = vmatpush1.msra.mxu0 0.0
  %194 = vmatprep.subr.mxu0 0.0
  %195 = vmatpush1.msra.mxu0 0.0
  %196 = vmatprep.subr.mxu0 0.0
  %197 = vmatpush1.msra.mxu0 0.0
  %198 = vmatprep.subr.mxu0 0.0
  %199 = vmatpush1.msra.mxu0 0.0
  %200 = vmatprep.subr.mxu0 0.0
  %201 = vmatpush1.msra.mxu0 0.0
  %202 = vmatprep.subr.mxu0 0.0
  %203 = vmatpush1.msra.mxu0 0.0
  %204 = vmatprep.subr.mxu0 0.0
  %205 = vmatpush1.msra.mxu0 0.0
  %206 = vmatprep.subr.mxu0 0.0
  %207 = vmatpush1.msra.mxu0 0.0
  %208 = vmatprep.subr.mxu0 0.0
  %209 = vmatpush1.msra.mxu0 0.0
  %210 = vmatprep.subr.mxu0 0.0
  %211 = vmatpush1.msra.mxu0 0.0
  %212 = vmatprep.subr.mxu0 0.0
  %213 = vmatpush1.msra.mxu0 0.0
  %214 = vmatprep.subr.mxu0 0.0
  %215 = vmatpush1.msra.mxu0 0.0
  %216 = vmatprep.subr.mxu0 0.0
  %217 = vmatpush1.msra.mxu0 0.0
  %218 = vmatprep.subr.mxu0 0.0
  %219 = vmatpush1.msra.mxu0 0.0
  %220 = vmatprep.subr.mxu0 0.0
  %221 = vmatpush1.msra.mxu0 0.0
  %222 = vmatprep.subr.mxu0 0.0
  %223 = vmatpush1.msra.mxu0 0.0
  %224 = vmatprep.mubr.f32.mxu0 0.0
  %225 = vmatmul.mubr.f32.gmra.mrb[0].mxu0 %v155
  %v226 = vpop.f32.mrb[0].mxu0
  %v227 = vadd.f32 0.0, %v226
  %v228 = vpop.f32.mrb[0].mxu0
  %229 = vmatprep.mubr.f32.mxu0 0.0
  %230 = vmatmul.mubr.f32.gmra.mrb[0].mxu0 %v158
  %v231 = vpop.f32.mrb[0].mxu0
  %v232 = vadd.f32 0.0, %v231
  %v233 = vpop.f32.mrb[0].mxu0
  %234 = vdwg.mxu0
  %235 = vmatprep.subr.mxu0 0.0
  %236 = vmatpush1.msra.mxu0 %v141
  %237 = vmatprep.subr.mxu0 0.0
  %238 = vmatpush1.msra.mxu0 %v142
  %239 = vmatprep.subr.mxu0 0.0
  %240 = vmatpush1.msra.mxu0 %v143
  %241 = vmatprep.subr.mxu0 0.0
  %242 = vmatpush1.msra.mxu0 %v144
  %243 = vmatprep.subr.mxu0 0.0
  %244 = vmatpush1.msra.mxu0 0.0
  %245 = vmatprep.subr.mxu0 0.0
  %246 = vmatpush1.msra.mxu0 0.0
  %247 = vmatprep.subr.mxu0 0.0
  %248 = vmatpush1.msra.mxu0 0.0
  %249 = vmatprep.subr.mxu0 0.0
  %250 = vmatpush1.msra.mxu0 0.0
  %251 = vmatprep.subr.mxu0 0.0
  %252 = vmatpush1.msra.mxu0 0.0
  %253 = vmatprep.subr.mxu0 0.0
  %254 = vmatpush1.msra.mxu0 0.0
  %255 = vmatprep.subr.mxu0 0.0
  %256 = vmatpush1.msra.mxu0 0.0
  %257 = vmatprep.subr.mxu0 0.0
  %258 = vmatpush1.msra.mxu0 0.0
  %259 = vmatprep.subr.mxu0 0.0
  %260 = vmatpush1.msra.mxu0 0.0
  %261 = vmatprep.subr.mxu0 0.0
  %262 = vmatpush1.msra.mxu0 0.0
  %263 = vmatprep.subr.mxu0 0.0
  %264 = vmatpush1.msra.mxu0 0.0
  %265 = vmatprep.subr.mxu0 0.0
  %266 = vmatpush1.msra.mxu0 0.0
  %267 = vmatprep.subr.mxu0 0.0
  %268 = vmatpush1.msra.mxu0 0.0
  %269 = vmatprep.subr.mxu0 0.0
  %270 = vmatpush1.msra.mxu0 0.0
  %271 = vmatprep.subr.mxu0 0.0
  %272 = vmatpush1.msra.mxu0 0.0
  %273 = vmatprep.subr.mxu0 0.0
  %274 = vmatpush1.msra.mxu0 0.0
  %275 = vmatprep.subr.mxu0 0.0
  %276 = vmatpush1.msra.mxu0 0.0
  %277 = vmatprep.subr.mxu0 0.0
  %278 = vmatpush1.msra.mxu0 0.0
  %279 = vmatprep.subr.mxu0 0.0
  %280 = vmatpush1.msra.mxu0 0.0
  %281 = vmatprep.subr.mxu0 0.0
  %282 = vmatpush1.msra.mxu0 0.0
  %283 = vmatprep.subr.mxu0 0.0
  %284 = vmatpush1.msra.mxu0 0.0
  %285 = vmatprep.subr.mxu0 0.0
  %286 = vmatpush1.msra.mxu0 0.0
  %287 = vmatprep.subr.mxu0 0.0
  %288 = vmatpush1.msra.mxu0 0.0
  %289 = vmatprep.subr.mxu0 0.0
  %290 = vmatpush1.msra.mxu0 0.0
  %291 = vmatprep.subr.mxu0 0.0
  %292 = vmatpush1.msra.mxu0 0.0
  %293 = vmatprep.subr.mxu0 0.0
  %294 = vmatpush1.msra.mxu0 0.0
  %295 = vmatprep.subr.mxu0 0.0
  %296 = vmatpush1.msra.mxu0 0.0
  %297 = vmatprep.subr.mxu0 0.0
  %298 = vmatpush1.msra.mxu0 0.0
  %299 = vmatprep.mubr.f32.mxu0 0.0
  %300 = vmatmul.mubr.f32.gmra.mrb[0].mxu0 %v155
  %v301 = vpop.f32.mrb[0].mxu0
  %v302 = vadd.f32 0.0, %v301
  %v303 = vpop.f32.mrb[0].mxu0
  %304 = vmatprep.mubr.f32.mxu0 0.0
  %305 = vmatmul.mubr.f32.gmra.mrb[0].mxu0 %v158
  %v306 = vpop.f32.mrb[0].mxu0
  %v307 = vadd.f32 0.0, %v306
  %v308 = vpop.f32.mrb[0].mxu0
  %309 = vdwg.mxu0
  %310 = vmatprep.subr.mxu0 0.0
  %311 = vmatpush1.msra.mxu0 %v145
  %312 = vmatprep.subr.mxu0 0.0
  %313 = vmatpush1.msra.mxu0 %v146
  %314 = vmatprep.subr.mxu0 0.0
  %315 = vmatpush1.msra.mxu0 %v147
  %316 = vmatprep.subr.mxu0 0.0
  %317 = vmatpush1.msra.mxu0 %v148
  %318 = vmatprep.subr.mxu0 0.0
  %319 = vmatpush1.msra.mxu0 0.0
  %320 = vmatprep.subr.mxu0 0.0
  %321 = vmatpush1.msra.mxu0 0.0
  %322 = vmatprep.subr.mxu0 0.0
  %323 = vmatpush1.msra.mxu0 0.0
  %324 = vmatprep.subr.mxu0 0.0
  %325 = vmatpush1.msra.mxu0 0.0
  %326 = vmatprep.subr.mxu0 0.0
  %327 = vmatpush1.msra.mxu0 0.0
  %328 = vmatprep.subr.mxu0 0.0
  %329 = vmatpush1.msra.mxu0 0.0
  %330 = vmatprep.subr.mxu0 0.0
  %331 = vmatpush1.msra.mxu0 0.0
  %332 = vmatprep.subr.mxu0 0.0
  %333 = vmatpush1.msra.mxu0 0.0
  %334 = vmatprep.subr.mxu0 0.0
  %335 = vmatpush1.msra.mxu0 0.0
  %336 = vmatprep.subr.mxu0 0.0
  %337 = vmatpush1.msra.mxu0 0.0
  %338 = vmatprep.subr.mxu0 0.0
  %339 = vmatpush1.msra.mxu0 0.0
  %340 = vmatprep.subr.mxu0 0.0
  %341 = vmatpush1.msra.mxu0 0.0
  %342 = vmatprep.subr.mxu0 0.0
  %343 = vmatpush1.msra.mxu0 0.0
  %344 = vmatprep.subr.mxu0 0.0
  %345 = vmatpush1.msra.mxu0 0.0
  %346 = vmatprep.subr.mxu0 0.0
  %347 = vmatpush1.msra.mxu0 0.0
  %348 = vmatprep.subr.mxu0 0.0
  %349 = vmatpush1.msra.mxu0 0.0
  %350 = vmatprep.subr.mxu0 0.0
  %351 = vmatpush1.msra.mxu0 0.0
  %352 = vmatprep.subr.mxu0 0.0
  %353 = vmatpush1.msra.mxu0 0.0
  %354 = vmatprep.subr.mxu0 0.0
  %355 = vmatpush1.msra.mxu0 0.0
  %356 = vmatprep.subr.mxu0 0.0
  %357 = vmatpush1.msra.mxu0 0.0
  %358 = vmatprep.subr.mxu0 0.0
  %359 = vmatpush1.msra.mxu0 0.0
  %360 = vmatprep.subr.mxu0 0.0
  %361 = vmatpush1.msra.mxu0 0.0
  %362 = vmatprep.subr.mxu0 0.0
  %363 = vmatpush1.msra.mxu0 0.0
  %364 = vmatprep.subr.mxu0 0.0
  %365 = vmatpush1.msra.mxu0 0.0
  %366 = vmatprep.subr.mxu0 0.0
  %367 = vmatpush1.msra.mxu0 0.0
  %368 = vmatprep.subr.mxu0 0.0
  %369 = vmatpush1.msra.mxu0 0.0
  %370 = vmatprep.subr.mxu0 0.0
  %371 = vmatpush1.msra.mxu0 0.0
  %372 = vmatprep.subr.mxu0 0.0
  %373 = vmatpush1.msra.mxu0 0.0
  %374 = vmatprep.mubr.f32.mxu0 0.0
  %375 = vmatmul.mubr.f32.gmra.mrb[0].mxu0 %v155
  %v376 = vpop.f32.mrb[0].mxu0
  %v377 = vadd.f32 0.0, %v376
  %v378 = vpop.f32.mrb[0].mxu0
  %379 = vmatprep.mubr.f32.mxu0 0.0
  %380 = vmatmul.mubr.f32.gmra.mrb[0].mxu0 %v158
  %v381 = vpop.f32.mrb[0].mxu0
  %v382 = vadd.f32 0.0, %v381
  %v383 = vpop.f32.mrb[0].mxu0
  %384 = vdwg.mxu0
  %385 = vmatprep.subr.mxu0 0.0
  %386 = vmatpush1.msra.mxu0 %v149
  %387 = vmatprep.subr.mxu0 0.0
  %388 = vmatpush1.msra.mxu0 %v150
  %389 = vmatprep.subr.mxu0 0.0
  %390 = vmatpush1.msra.mxu0 %v151
  %391 = vmatprep.subr.mxu0 0.0
  %392 = vmatpush1.msra.mxu0 %v152
  %393 = vmatprep.subr.mxu0 0.0
  %394 = vmatpush1.msra.mxu0 0.0
  %395 = vmatprep.subr.mxu0 0.0
  %396 = vmatpush1.msra.mxu0 0.0
  %397 = vmatprep.subr.mxu0 0.0
  %398 = vmatpush1.msra.mxu0 0.0
  %399 = vmatprep.subr.mxu0 0.0
  %400 = vmatpush1.msra.mxu0 0.0
  %401 = vmatprep.subr.mxu0 0.0
  %402 = vmatpush1.msra.mxu0 0.0
  %403 = vmatprep.subr.mxu0 0.0
  %404 = vmatpush1.msra.mxu0 0.0
  %405 = vmatprep.subr.mxu0 0.0
  %406 = vmatpush1.msra.mxu0 0.0
  %407 = vmatprep.subr.mxu0 0.0
  %408 = vmatpush1.msra.mxu0 0.0
  %409 = vmatprep.subr.mxu0 0.0
  %410 = vmatpush1.msra.mxu0 0.0
  %411 = vmatprep.subr.mxu0 0.0
  %412 = vmatpush1.msra.mxu0 0.0
  %413 = vmatprep.subr.mxu0 0.0
  %414 = vmatpush1.msra.mxu0 0.0
  %415 = vmatprep.subr.mxu0 0.0
  %416 = vmatpush1.msra.mxu0 0.0
  %417 = vmatprep.subr.mxu0 0.0
  %418 = vmatpush1.msra.mxu0 0.0
  %419 = vmatprep.subr.mxu0 0.0
  %420 = vmatpush1.msra.mxu0 0.0
  %421 = vmatprep.subr.mxu0 0.0
  %422 = vmatpush1.msra.mxu0 0.0
  %423 = vmatprep.subr.mxu0 0.0
  %424 = vmatpush1.msra.mxu0 0.0
  %425 = vmatprep.subr.mxu0 0.0
  %426 = vmatpush1.msra.mxu0 0.0
  %427 = vmatprep.subr.mxu0 0.0
  %428 = vmatpush1.msra.mxu0 0.0
  %429 = vmatprep.subr.mxu0 0.0
  %430 = vmatpush1.msra.mxu0 0.0
  %431 = vmatprep.subr.mxu0 0.0
  %432 = vmatpush1.msra.mxu0 0.0
  %433 = vmatprep.subr.mxu0 0.0
  %434 = vmatpush1.msra.mxu0 0.0
  %435 = vmatprep.subr.mxu0 0.0
  %436 = vmatpush1.msra.mxu0 0.0
  %437 = vmatprep.subr.mxu0 0.0
  %438 = vmatpush1.msra.mxu0 0.0
  %439 = vmatprep.subr.mxu0 0.0
  %440 = vmatpush1.msra.mxu0 0.0
  %441 = vmatprep.subr.mxu0 0.0
  %442 = vmatpush1.msra.mxu0 0.0
  %443 = vmatprep.subr.mxu0 0.0
  %444 = vmatpush1.msra.mxu0 0.0
  %445 = vmatprep.subr.mxu0 0.0
  %446 = vmatpush1.msra.mxu0 0.0
  %447 = vmatprep.subr.mxu0 0.0
  %448 = vmatpush1.msra.mxu0 0.0
  %449 = vmatprep.mubr.f32.mxu0 0.0
  %450 = vmatmul.mubr.f32.gmra.mrb[0].mxu0 %v155
  %v451 = vpop.f32.mrb[0].mxu0
  %v452 = vadd.f32 0.0, %v451
  %v453 = vpop.f32.mrb[0].mxu0
  %454 = vmatprep.mubr.f32.mxu0 0.0
  %455 = vmatmul.mubr.f32.gmra.mrb[0].mxu0 %v158
  %v456 = vpop.f32.mrb[0].mxu0
  %v457 = vadd.f32 0.0, %v456
  %v458 = vpop.f32.mrb[0].mxu0
  %459 = vdwg.mxu0
  %462 = vrot.lane.b32.xlu0 %v227, 120
  %v463 = vpop.permute.xlu0 %462
  %464 = vrot.lane.b32.xlu0 %v232, 120
  %v465 = vpop.permute.xlu0 %464
  %vm466 = vcmask 64512
  %v467 = vsel %vm466, %v227, 0
  %v469 = vsel %vm466, %v232, 0
  %v471 = vsel %vm466, %v463, 0
  %v473 = vsel %vm466, %v465, 0
  %475 = vmatprep.subr.mxu0 0.0
  %476 = vmatpush1.xpose.msra.mxu0 %v471
  %477 = vmatprep.subr.mxu0 0.0
  %478 = vmatpush1.xpose.msra.mxu0 %v473
  %479 = vmatprep.subr.mxu0 0.0
  %480 = vmatpush1.xpose.msra.mxu0 0.0
  %481 = vmatprep.subr.mxu0 0.0
  %482 = vmatpush1.xpose.msra.mxu0 0.0
  %483 = vmatprep.subr.mxu0 0.0
  %484 = vmatpush1.xpose.msra.mxu0 0.0
  %485 = vmatprep.subr.mxu0 0.0
  %486 = vmatpush1.xpose.msra.mxu0 0.0
  %487 = vmatprep.subr.mxu0 0.0
  %488 = vmatpush1.xpose.msra.mxu0 0.0
  %489 = vmatprep.subr.mxu0 0.0
  %490 = vmatpush1.xpose.msra.mxu0 0.0
  %491 = vmatprep.subr.mxu0 0.0
  %492 = vmatpush1.xpose.msra.mxu0 0.0
  %493 = vmatprep.subr.mxu0 0.0
  %494 = vmatpush1.xpose.msra.mxu0 0.0
  %495 = vmatprep.subr.mxu0 0.0
  %496 = vmatpush1.xpose.msra.mxu0 0.0
  %497 = vmatprep.subr.mxu0 0.0
  %498 = vmatpush1.xpose.msra.mxu0 0.0
  %499 = vmatprep.subr.mxu0 0.0
  %500 = vmatpush1.xpose.msra.mxu0 0.0
  %501 = vmatprep.subr.mxu0 0.0
  %502 = vmatpush1.xpose.msra.mxu0 0.0
  %503 = vmatprep.subr.mxu0 0.0
  %504 = vmatpush1.xpose.msra.mxu0 0.0
  %505 = vmatprep.subr.mxu0 0.0
  %506 = vmatpush1.xpose.msra.mxu0 0.0
  %507 = vmatprep.subr.mxu0 0.0
  %508 = vmatpush1.xpose.msra.mxu0 0.0
  %509 = vmatprep.subr.mxu0 0.0
  %510 = vmatpush1.xpose.msra.mxu0 0.0
  %511 = vmatprep.subr.mxu0 0.0
  %512 = vmatpush1.xpose.msra.mxu0 0.0
  %513 = vmatprep.subr.mxu0 0.0
  %514 = vmatpush1.xpose.msra.mxu0 0.0
  %515 = vmatprep.subr.mxu0 0.0
  %516 = vmatpush1.xpose.msra.mxu0 0.0
  %517 = vmatprep.subr.mxu0 0.0
  %518 = vmatpush1.xpose.msra.mxu0 0.0
  %519 = vmatprep.subr.mxu0 0.0
  %520 = vmatpush1.xpose.msra.mxu0 0.0
  %521 = vmatprep.subr.mxu0 0.0
  %522 = vmatpush1.xpose.msra.mxu0 0.0
  %523 = vmatprep.subr.mxu0 0.0
  %524 = vmatpush1.xpose.msra.mxu0 0.0
  %525 = vmatprep.subr.mxu0 0.0
  %526 = vmatpush1.xpose.msra.mxu0 0.0
  %527 = vmatprep.subr.mxu0 0.0
  %528 = vmatpush1.xpose.msra.mxu0 0.0
  %529 = vmatprep.subr.mxu0 0.0
  %530 = vmatpush1.xpose.msra.mxu0 0.0
  %531 = vmatprep.subr.mxu0 0.0
  %532 = vmatpush1.xpose.msra.mxu0 0.0
  %533 = vmatprep.subr.mxu0 0.0
  %534 = vmatpush1.xpose.msra.mxu0 0.0
  %535 = vmatprep.subr.mxu0 0.0
  %536 = vmatpush1.xpose.msra.mxu0 0.0
  %537 = vmatprep.subr.mxu0 0.0
  %538 = vmatpush1.xpose.msra.mxu0 0.0
  %539 = vmatprep.mubr.f32.mxu0 0.0
  %540 = vmatmul.mubr.f32.gmra.mrb[0].mxu0 %v467
  %v541 = vpop.f32.mrb[0].mxu0
  %v542 = vadd.f32 0.0, %v541
  %v543 = vpop.f32.mrb[0].mxu0
  %544 = vmatprep.mubr.f32.mxu0 0.0
  %545 = vmatmul.mubr.f32.gmra.mrb[0].mxu0 %v469
  %v546 = vpop.f32.mrb[0].mxu0
  %v547 = vadd.f32 0.0, %v546
  %v548 = vpop.f32.mrb[0].mxu0
  %549 = vdwg.mxu0
  %552 = vrot.lane.b32.xlu0 %v302, 120
  %v553 = vpop.permute.xlu0 %552
  %554 = vrot.lane.b32.xlu0 %v307, 120
  %v555 = vpop.permute.xlu0 %554
  %v556 = vsel %vm466, %v302, 0
  %v558 = vsel %vm466, %v307, 0
  %v560 = vsel %vm466, %v553, 0
  %v562 = vsel %vm466, %v555, 0
  %564 = vmatprep.subr.mxu0 0.0
  %565 = vmatpush1.xpose.msra.mxu0 %v560
  %566 = vmatprep.subr.mxu0 0.0
  %567 = vmatpush1.xpose.msra.mxu0 %v562
  %568 = vmatprep.subr.mxu0 0.0
  %569 = vmatpush1.xpose.msra.mxu0 0.0
  %570 = vmatprep.subr.mxu0 0.0
  %571 = vmatpush1.xpose.msra.mxu0 0.0
  %572 = vmatprep.subr.mxu0 0.0
  %573 = vmatpush1.xpose.msra.mxu0 0.0
  %574 = vmatprep.subr.mxu0 0.0
  %575 = vmatpush1.xpose.msra.mxu0 0.0
  %576 = vmatprep.subr.mxu0 0.0
  %577 = vmatpush1.xpose.msra.mxu0 0.0
  %578 = vmatprep.subr.mxu0 0.0
  %579 = vmatpush1.xpose.msra.mxu0 0.0
  %580 = vmatprep.subr.mxu0 0.0
  %581 = vmatpush1.xpose.msra.mxu0 0.0
  %582 = vmatprep.subr.mxu0 0.0
  %583 = vmatpush1.xpose.msra.mxu0 0.0
  %584 = vmatprep.subr.mxu0 0.0
  %585 = vmatpush1.xpose.msra.mxu0 0.0
  %586 = vmatprep.subr.mxu0 0.0
  %587 = vmatpush1.xpose.msra.mxu0 0.0
  %588 = vmatprep.subr.mxu0 0.0
  %589 = vmatpush1.xpose.msra.mxu0 0.0
  %590 = vmatprep.subr.mxu0 0.0
  %591 = vmatpush1.xpose.msra.mxu0 0.0
  %592 = vmatprep.subr.mxu0 0.0
  %593 = vmatpush1.xpose.msra.mxu0 0.0
  %594 = vmatprep.subr.mxu0 0.0
  %595 = vmatpush1.xpose.msra.mxu0 0.0
  %596 = vmatprep.subr.mxu0 0.0
  %597 = vmatpush1.xpose.msra.mxu0 0.0
  %598 = vmatprep.subr.mxu0 0.0
  %599 = vmatpush1.xpose.msra.mxu0 0.0
  %600 = vmatprep.subr.mxu0 0.0
  %601 = vmatpush1.xpose.msra.mxu0 0.0
  %602 = vmatprep.subr.mxu0 0.0
  %603 = vmatpush1.xpose.msra.mxu0 0.0
  %604 = vmatprep.subr.mxu0 0.0
  %605 = vmatpush1.xpose.msra.mxu0 0.0
  %606 = vmatprep.subr.mxu0 0.0
  %607 = vmatpush1.xpose.msra.mxu0 0.0
  %608 = vmatprep.subr.mxu0 0.0
  %609 = vmatpush1.xpose.msra.mxu0 0.0
  %610 = vmatprep.subr.mxu0 0.0
  %611 = vmatpush1.xpose.msra.mxu0 0.0
  %612 = vmatprep.subr.mxu0 0.0
  %613 = vmatpush1.xpose.msra.mxu0 0.0
  %614 = vmatprep.subr.mxu0 0.0
  %615 = vmatpush1.xpose.msra.mxu0 0.0
  %616 = vmatprep.subr.mxu0 0.0
  %617 = vmatpush1.xpose.msra.mxu0 0.0
  %618 = vmatprep.subr.mxu0 0.0
  %619 = vmatpush1.xpose.msra.mxu0 0.0
  %620 = vmatprep.subr.mxu0 0.0
  %621 = vmatpush1.xpose.msra.mxu0 0.0
  %622 = vmatprep.subr.mxu0 0.0
  %623 = vmatpush1.xpose.msra.mxu0 0.0
  %624 = vmatprep.subr.mxu0 0.0
  %625 = vmatpush1.xpose.msra.mxu0 0.0
  %626 = vmatprep.subr.mxu0 0.0
  %627 = vmatpush1.xpose.msra.mxu0 0.0
  %628 = vmatprep.mubr.f32.mxu0 0.0
  %629 = vmatmul.mubr.f32.gmra.mrb[0].mxu0 %v556
  %v630 = vpop.f32.mrb[0].mxu0
  %v631 = vadd.f32 0.0, %v630
  %v632 = vpop.f32.mrb[0].mxu0
  %633 = vmatprep.mubr.f32.mxu0 0.0
  %634 = vmatmul.mubr.f32.gmra.mrb[0].mxu0 %v558
  %v635 = vpop.f32.mrb[0].mxu0
  %v636 = vadd.f32 0.0, %v635
  %v637 = vpop.f32.mrb[0].mxu0
  %638 = vdwg.mxu0
  %641 = vrot.lane.b32.xlu0 %v377, 120
  %v642 = vpop.permute.xlu0 %641
  %643 = vrot.lane.b32.xlu0 %v382, 120
  %v644 = vpop.permute.xlu0 %643
  %v645 = vsel %vm466, %v377, 0
  %v647 = vsel %vm466, %v382, 0
  %v649 = vsel %vm466, %v642, 0
  %v651 = vsel %vm466, %v644, 0
  %653 = vmatprep.subr.mxu0 0.0
  %654 = vmatpush1.xpose.msra.mxu0 %v649
  %655 = vmatprep.subr.mxu0 0.0
  %656 = vmatpush1.xpose.msra.mxu0 %v651
  %657 = vmatprep.subr.mxu0 0.0
  %658 = vmatpush1.xpose.msra.mxu0 0.0
  %659 = vmatprep.subr.mxu0 0.0
  %660 = vmatpush1.xpose.msra.mxu0 0.0
  %661 = vmatprep.subr.mxu0 0.0
  %662 = vmatpush1.xpose.msra.mxu0 0.0
  %663 = vmatprep.subr.mxu0 0.0
  %664 = vmatpush1.xpose.msra.mxu0 0.0
  %665 = vmatprep.subr.mxu0 0.0
  %666 = vmatpush1.xpose.msra.mxu0 0.0
  %667 = vmatprep.subr.mxu0 0.0
  %668 = vmatpush1.xpose.msra.mxu0 0.0
  %669 = vmatprep.subr.mxu0 0.0
  %670 = vmatpush1.xpose.msra.mxu0 0.0
  %671 = vmatprep.subr.mxu0 0.0
  %672 = vmatpush1.xpose.msra.mxu0 0.0
  %673 = vmatprep.subr.mxu0 0.0
  %674 = vmatpush1.xpose.msra.mxu0 0.0
  %675 = vmatprep.subr.mxu0 0.0
  %676 = vmatpush1.xpose.msra.mxu0 0.0
  %677 = vmatprep.subr.mxu0 0.0
  %678 = vmatpush1.xpose.msra.mxu0 0.0
  %679 = vmatprep.subr.mxu0 0.0
  %680 = vmatpush1.xpose.msra.mxu0 0.0
  %681 = vmatprep.subr.mxu0 0.0
  %682 = vmatpush1.xpose.msra.mxu0 0.0
  %683 = vmatprep.subr.mxu0 0.0
  %684 = vmatpush1.xpose.msra.mxu0 0.0
  %685 = vmatprep.subr.mxu0 0.0
  %686 = vmatpush1.xpose.msra.mxu0 0.0
  %687 = vmatprep.subr.mxu0 0.0
  %688 = vmatpush1.xpose.msra.mxu0 0.0
  %689 = vmatprep.subr.mxu0 0.0
  %690 = vmatpush1.xpose.msra.mxu0 0.0
  %691 = vmatprep.subr.mxu0 0.0
  %692 = vmatpush1.xpose.msra.mxu0 0.0
  %693 = vmatprep.subr.mxu0 0.0
  %694 = vmatpush1.xpose.msra.mxu0 0.0
  %695 = vmatprep.subr.mxu0 0.0
  %696 = vmatpush1.xpose.msra.mxu0 0.0
  %697 = vmatprep.subr.mxu0 0.0
  %698 = vmatpush1.xpose.msra.mxu0 0.0
  %699 = vmatprep.subr.mxu0 0.0
  %700 = vmatpush1.xpose.msra.mxu0 0.0
  %701 = vmatprep.subr.mxu0 0.0
  %702 = vmatpush1.xpose.msra.mxu0 0.0
  %703 = vmatprep.subr.mxu0 0.0
  %704 = vmatpush1.xpose.msra.mxu0 0.0
  %705 = vmatprep.subr.mxu0 0.0
  %706 = vmatpush1.xpose.msra.mxu0 0.0
  %707 = vmatprep.subr.mxu0 0.0
  %708 = vmatpush1.xpose.msra.mxu0 0.0
  %709 = vmatprep.subr.mxu0 0.0
  %710 = vmatpush1.xpose.msra.mxu0 0.0
  %711 = vmatprep.subr.mxu0 0.0
  %712 = vmatpush1.xpose.msra.mxu0 0.0
  %713 = vmatprep.subr.mxu0 0.0
  %714 = vmatpush1.xpose.msra.mxu0 0.0
  %715 = vmatprep.subr.mxu0 0.0
  %716 = vmatpush1.xpose.msra.mxu0 0.0
  %717 = vmatprep.mubr.f32.mxu0 0.0
  %718 = vmatmul.mubr.f32.gmra.mrb[0].mxu0 %v645
  %v719 = vpop.f32.mrb[0].mxu0
  %v720 = vadd.f32 0.0, %v719
  %v721 = vpop.f32.mrb[0].mxu0
  %722 = vmatprep.mubr.f32.mxu0 0.0
  %723 = vmatmul.mubr.f32.gmra.mrb[0].mxu0 %v647
  %v724 = vpop.f32.mrb[0].mxu0
  %v725 = vadd.f32 0.0, %v724
  %v726 = vpop.f32.mrb[0].mxu0
  %727 = vdwg.mxu0
  %730 = vrot.lane.b32.xlu0 %v452, 120
  %v731 = vpop.permute.xlu0 %730
  %732 = vrot.lane.b32.xlu0 %v457, 120
  %v733 = vpop.permute.xlu0 %732
  %v734 = vsel %vm466, %v452, 0
  %v736 = vsel %vm466, %v457, 0
  %v738 = vsel %vm466, %v731, 0
  %v740 = vsel %vm466, %v733, 0
  %742 = vmatprep.subr.mxu0 0.0
  %743 = vmatpush1.xpose.msra.mxu0 %v738
  %744 = vmatprep.subr.mxu0 0.0
  %745 = vmatpush1.xpose.msra.mxu0 %v740
  %746 = vmatprep.subr.mxu0 0.0
  %747 = vmatpush1.xpose.msra.mxu0 0.0
  %748 = vmatprep.subr.mxu0 0.0
  %749 = vmatpush1.xpose.msra.mxu0 0.0
  %750 = vmatprep.subr.mxu0 0.0
  %751 = vmatpush1.xpose.msra.mxu0 0.0
  %752 = vmatprep.subr.mxu0 0.0
  %753 = vmatpush1.xpose.msra.mxu0 0.0
  %754 = vmatprep.subr.mxu0 0.0
  %755 = vmatpush1.xpose.msra.mxu0 0.0
  %756 = vmatprep.subr.mxu0 0.0
  %757 = vmatpush1.xpose.msra.mxu0 0.0
  %758 = vmatprep.subr.mxu0 0.0
  %759 = vmatpush1.xpose.msra.mxu0 0.0
  %760 = vmatprep.subr.mxu0 0.0
  %761 = vmatpush1.xpose.msra.mxu0 0.0
  %762 = vmatprep.subr.mxu0 0.0
  %763 = vmatpush1.xpose.msra.mxu0 0.0
  %764 = vmatprep.subr.mxu0 0.0
  %765 = vmatpush1.xpose.msra.mxu0 0.0
  %766 = vmatprep.subr.mxu0 0.0
  %767 = vmatpush1.xpose.msra.mxu0 0.0
  %768 = vmatprep.subr.mxu0 0.0
  %769 = vmatpush1.xpose.msra.mxu0 0.0
  %770 = vmatprep.subr.mxu0 0.0
  %771 = vmatpush1.xpose.msra.mxu0 0.0
  %772 = vmatprep.subr.mxu0 0.0
  %773 = vmatpush1.xpose.msra.mxu0 0.0
  %774 = vmatprep.subr.mxu0 0.0
  %775 = vmatpush1.xpose.msra.mxu0 0.0
  %776 = vmatprep.subr.mxu0 0.0
  %777 = vmatpush1.xpose.msra.mxu0 0.0
  %778 = vmatprep.subr.mxu0 0.0
  %779 = vmatpush1.xpose.msra.mxu0 0.0
  %780 = vmatprep.subr.mxu0 0.0
  %781 = vmatpush1.xpose.msra.mxu0 0.0
  %782 = vmatprep.subr.mxu0 0.0
  %783 = vmatpush1.xpose.msra.mxu0 0.0
  %784 = vmatprep.subr.mxu0 0.0
  %785 = vmatpush1.xpose.msra.mxu0 0.0
  %786 = vmatprep.subr.mxu0 0.0
  %787 = vmatpush1.xpose.msra.mxu0 0.0
  %788 = vmatprep.subr.mxu0 0.0
  %789 = vmatpush1.xpose.msra.mxu0 0.0
  %790 = vmatprep.subr.mxu0 0.0
  %791 = vmatpush1.xpose.msra.mxu0 0.0
  %792 = vmatprep.subr.mxu0 0.0
  %793 = vmatpush1.xpose.msra.mxu0 0.0
  %794 = vmatprep.subr.mxu0 0.0
  %795 = vmatpush1.xpose.msra.mxu0 0.0
  %796 = vmatprep.subr.mxu0 0.0
  %797 = vmatpush1.xpose.msra.mxu0 0.0
  %798 = vmatprep.subr.mxu0 0.0
  %799 = vmatpush1.xpose.msra.mxu0 0.0
  %800 = vmatprep.subr.mxu0 0.0
  %801 = vmatpush1.xpose.msra.mxu0 0.0
  %802 = vmatprep.subr.mxu0 0.0
  %803 = vmatpush1.xpose.msra.mxu0 0.0
  %804 = vmatprep.subr.mxu0 0.0
  %805 = vmatpush1.xpose.msra.mxu0 0.0
  %806 = vmatprep.mubr.f32.mxu0 0.0
  %807 = vmatmul.mubr.f32.gmra.mrb[0].mxu0 %v734
  %v808 = vpop.f32.mrb[0].mxu0
  %v809 = vadd.f32 0.0, %v808
  %v810 = vpop.f32.mrb[0].mxu0
  %811 = vmatprep.mubr.f32.mxu0 0.0
  %812 = vmatmul.mubr.f32.gmra.mrb[0].mxu0 %v736
  %v813 = vpop.f32.mrb[0].mxu0
  %v814 = vadd.f32 0.0, %v813
  %v815 = vpop.f32.mrb[0].mxu0
  %816 = vdwg.mxu0
  %v817 = vmul.f32 %v542, 0.35355338
  %v818 = vmul.f32 %v547, 0.35355338
  %v819 = vmul.f32 %v631, 0.35355338
  %v820 = vmul.f32 %v636, 0.35355338
  %v821 = vmul.f32 %v720, 0.35355338
  %v822 = vmul.f32 %v725, 0.35355338
  %v823 = vmul.f32 %v809, 0.35355338
  %v824 = vmul.f32 %v814, 0.35355338
  %v825 = vadd.f32 %v817, %v132
  %v826 = vadd.f32 %v818, %v133
  %v827 = vadd.f32 %v819, %v132
  %v828 = vadd.f32 %v820, %v133
  %v829 = vadd.f32 %v821, %v132
  %v830 = vadd.f32 %v822, %v133
  %v831 = vadd.f32 %v823, %v132
  %v832 = vadd.f32 %v824, %v133
  %vm833 = vcmask 130048
  %v834 = vsel %vm833, %v825, -inf
  %835 = vmax.xlane.f32.xlu0 %v834
  %v836 = vpop.xlane.xlu0 %835
  %v837 = vsel %vm833, %v826, -inf
  %838 = vmax.xlane.f32.xlu0 %v837
  %v839 = vpop.xlane.xlu0 %838
  %v840 = vsel %vm833, %v827, -inf
  %841 = vmax.xlane.f32.xlu0 %v840
  %v842 = vpop.xlane.xlu0 %841
  %v843 = vsel %vm833, %v828, -inf
  %844 = vmax.xlane.f32.xlu0 %v843
  %v845 = vpop.xlane.xlu0 %844
  %v846 = vsel %vm833, %v829, -inf
  %847 = vmax.xlane.f32.xlu0 %v846
  %v848 = vpop.xlane.xlu0 %847
  %v849 = vsel %vm833, %v830, -inf
  %850 = vmax.xlane.f32.xlu0 %v849
  %v851 = vpop.xlane.xlu0 %850
  %v852 = vsel %vm833, %v831, -inf
  %853 = vmax.xlane.f32.xlu0 %v852
  %v854 = vpop.xlane.xlu0 %853
  %v855 = vsel %vm833, %v832, -inf
  %856 = vmax.xlane.f32.xlu0 %v855
  %v857 = vpop.xlane.xlu0 %856
  %v858 = vsub.f32 %v825, %v836
  %v859 = vsub.f32 %v826, %v839
  %v860 = vsub.f32 %v827, %v842
  %v861 = vsub.f32 %v828, %v845
  %v862 = vsub.f32 %v829, %v848
  %v863 = vsub.f32 %v830, %v851
  %v864 = vsub.f32 %v831, %v854
  %v865 = vsub.f32 %v832, %v857
  %v866 = vmul.f32 %v858, 1.442695
  %v867 = vpow.pop %v866
  %v868 = vmul.f32 %v859, 1.442695
  %v869 = vpow.pop %v868
  %v870 = vmul.f32 %v860, 1.442695
  %v871 = vpow.pop %v870
  %v872 = vmul.f32 %v861, 1.442695
  %v873 = vpow.pop %v872
  %v874 = vmul.f32 %v862, 1.442695
  %v875 = vpow.pop %v874
  %v876 = vmul.f32 %v863, 1.442695
  %v877 = vpow.pop %v876
  %v878 = vmul.f32 %v864, 1.442695
  %v879 = vpow.pop %v878
  %v880 = vmul.f32 %v865, 1.442695
  %v881 = vpow.pop %v880
  %v882 = vsel %vm833, %v867, 0.0
  %883 = vadd.xlane.f32.xlu0 %v882
  %v884 = vpop.xlane.xlu0 %883
  %v885 = vsel %vm833, %v869, 0.0
  %886 = vadd.xlane.f32.xlu0 %v885
  %v887 = vpop.xlane.xlu0 %886
  %v888 = vsel %vm833, %v871, 0.0
  %889 = vadd.xlane.f32.xlu0 %v888
  %v890 = vpop.xlane.xlu0 %889
  %v891 = vsel %vm833, %v873, 0.0
  %892 = vadd.xlane.f32.xlu0 %v891
  %v893 = vpop.xlane.xlu0 %892
  %v894 = vsel %vm833, %v875, 0.0
  %895 = vadd.xlane.f32.xlu0 %v894
  %v896 = vpop.xlane.xlu0 %895
  %v897 = vsel %vm833, %v877, 0.0
  %898 = vadd.xlane.f32.xlu0 %v897
  %v899 = vpop.xlane.xlu0 %898
  %v900 = vsel %vm833, %v879, 0.0
  %901 = vadd.xlane.f32.xlu0 %v900
  %v902 = vpop.xlane.xlu0 %901
  %v903 = vsel %vm833, %v881, 0.0
  %904 = vadd.xlane.f32.xlu0 %v903
  %v905 = vpop.xlane.xlu0 %904
  %v906 = vrcp.pop %v884
  %v907 = vrcp.pop %v887
  %v908 = vrcp.pop %v890
  %v909 = vrcp.pop %v893
  %v910 = vrcp.pop %v896
  %v911 = vrcp.pop %v899
  %v912 = vrcp.pop %v902
  %v913 = vrcp.pop %v905
  %v914 = vmul.f32 %v867, %v906
  %v915 = vmul.f32 %v869, %v907
  %v916 = vmul.f32 %v871, %v908
  %v917 = vmul.f32 %v873, %v909
  %v918 = vmul.f32 %v875, %v910
  %v919 = vmul.f32 %v877, %v911
  %v920 = vmul.f32 %v879, %v912
  %v921 = vmul.f32 %v881, %v913
  %922 = vrot.lane.b32.xlu0 %v227, 112
  %v923 = vpop.permute.xlu0 %922
  %924 = vrot.lane.b32.xlu0 %v232, 112
  %v925 = vpop.permute.xlu0 %924
  %v929 = vsel %vm833, %v914, 0
  %v932 = vsel %vm833, %v915, 0
  %934 = vmatprep.subr.mxu0 0.0
  %935 = vmatpush1.msra.mxu0 %v923
  %936 = vmatprep.subr.mxu0 0.0
  %937 = vmatpush1.msra.mxu0 %v925
  %938 = vmatprep.subr.mxu0 0.0
  %939 = vmatpush1.msra.mxu0 0.0
  %940 = vmatprep.subr.mxu0 0.0
  %941 = vmatpush1.msra.mxu0 0.0
  %942 = vmatprep.subr.mxu0 0.0
  %943 = vmatpush1.msra.mxu0 0.0
  %944 = vmatprep.subr.mxu0 0.0
  %945 = vmatpush1.msra.mxu0 0.0
  %946 = vmatprep.subr.mxu0 0.0
  %947 = vmatpush1.msra.mxu0 0.0
  %948 = vmatprep.subr.mxu0 0.0
  %949 = vmatpush1.msra.mxu0 0.0
  %950 = vmatprep.subr.mxu0 0.0
  %951 = vmatpush1.msra.mxu0 0.0
  %952 = vmatprep.subr.mxu0 0.0
  %953 = vmatpush1.msra.mxu0 0.0
  %954 = vmatprep.subr.mxu0 0.0
  %955 = vmatpush1.msra.mxu0 0.0
  %956 = vmatprep.subr.mxu0 0.0
  %957 = vmatpush1.msra.mxu0 0.0
  %958 = vmatprep.subr.mxu0 0.0
  %959 = vmatpush1.msra.mxu0 0.0
  %960 = vmatprep.subr.mxu0 0.0
  %961 = vmatpush1.msra.mxu0 0.0
  %962 = vmatprep.subr.mxu0 0.0
  %963 = vmatpush1.msra.mxu0 0.0
  %964 = vmatprep.subr.mxu0 0.0
  %965 = vmatpush1.msra.mxu0 0.0
  %966 = vmatprep.subr.mxu0 0.0
  %967 = vmatpush1.msra.mxu0 0.0
  %968 = vmatprep.subr.mxu0 0.0
  %969 = vmatpush1.msra.mxu0 0.0
  %970 = vmatprep.subr.mxu0 0.0
  %971 = vmatpush1.msra.mxu0 0.0
  %972 = vmatprep.subr.mxu0 0.0
  %973 = vmatpush1.msra.mxu0 0.0
  %974 = vmatprep.subr.mxu0 0.0
  %975 = vmatpush1.msra.mxu0 0.0
  %976 = vmatprep.subr.mxu0 0.0
  %977 = vmatpush1.msra.mxu0 0.0
  %978 = vmatprep.subr.mxu0 0.0
  %979 = vmatpush1.msra.mxu0 0.0
  %980 = vmatprep.subr.mxu0 0.0
  %981 = vmatpush1.msra.mxu0 0.0
  %982 = vmatprep.subr.mxu0 0.0
  %983 = vmatpush1.msra.mxu0 0.0
  %984 = vmatprep.subr.mxu0 0.0
  %985 = vmatpush1.msra.mxu0 0.0
  %986 = vmatprep.subr.mxu0 0.0
  %987 = vmatpush1.msra.mxu0 0.0
  %988 = vmatprep.subr.mxu0 0.0
  %989 = vmatpush1.msra.mxu0 0.0
  %990 = vmatprep.subr.mxu0 0.0
  %991 = vmatpush1.msra.mxu0 0.0
  %992 = vmatprep.subr.mxu0 0.0
  %993 = vmatpush1.msra.mxu0 0.0
  %994 = vmatprep.subr.mxu0 0.0
  %995 = vmatpush1.msra.mxu0 0.0
  %996 = vmatprep.subr.mxu0 0.0
  %997 = vmatpush1.msra.mxu0 0.0
  %998 = vmatprep.mubr.f32.mxu0 0.0
  %999 = vmatmul.mubr.f32.gmra.mrb[0].mxu0 %v929
  %v1000 = vpop.f32.mrb[0].mxu0
  %v1001 = vadd.f32 0.0, %v1000
  %v1002 = vpop.f32.mrb[0].mxu0
  %1003 = vmatprep.mubr.f32.mxu0 0.0
  %1004 = vmatmul.mubr.f32.gmra.mrb[0].mxu0 %v932
  %v1005 = vpop.f32.mrb[0].mxu0
  %v1006 = vadd.f32 0.0, %v1005
  %v1007 = vpop.f32.mrb[0].mxu0
  %1008 = vdwg.mxu0
  %1009 = vrot.lane.b32.xlu0 %v302, 112
  %v1010 = vpop.permute.xlu0 %1009
  %1011 = vrot.lane.b32.xlu0 %v307, 112
  %v1012 = vpop.permute.xlu0 %1011
  %v1016 = vsel %vm833, %v916, 0
  %v1019 = vsel %vm833, %v917, 0
  %1021 = vmatprep.subr.mxu0 0.0
  %1022 = vmatpush1.msra.mxu0 %v1010
  %1023 = vmatprep.subr.mxu0 0.0
  %1024 = vmatpush1.msra.mxu0 %v1012
  %1025 = vmatprep.subr.mxu0 0.0
  %1026 = vmatpush1.msra.mxu0 0.0
  %1027 = vmatprep.subr.mxu0 0.0
  %1028 = vmatpush1.msra.mxu0 0.0
  %1029 = vmatprep.subr.mxu0 0.0
  %1030 = vmatpush1.msra.mxu0 0.0
  %1031 = vmatprep.subr.mxu0 0.0
  %1032 = vmatpush1.msra.mxu0 0.0
  %1033 = vmatprep.subr.mxu0 0.0
  %1034 = vmatpush1.msra.mxu0 0.0
  %1035 = vmatprep.subr.mxu0 0.0
  %1036 = vmatpush1.msra.mxu0 0.0
  %1037 = vmatprep.subr.mxu0 0.0
  %1038 = vmatpush1.msra.mxu0 0.0
  %1039 = vmatprep.subr.mxu0 0.0
  %1040 = vmatpush1.msra.mxu0 0.0
  %1041 = vmatprep.subr.mxu0 0.0
  %1042 = vmatpush1.msra.mxu0 0.0
  %1043 = vmatprep.subr.mxu0 0.0
  %1044 = vmatpush1.msra.mxu0 0.0
  %1045 = vmatprep.subr.mxu0 0.0
  %1046 = vmatpush1.msra.mxu0 0.0
  %1047 = vmatprep.subr.mxu0 0.0
  %1048 = vmatpush1.msra.mxu0 0.0
  %1049 = vmatprep.subr.mxu0 0.0
  %1050 = vmatpush1.msra.mxu0 0.0
  %1051 = vmatprep.subr.mxu0 0.0
  %1052 = vmatpush1.msra.mxu0 0.0
  %1053 = vmatprep.subr.mxu0 0.0
  %1054 = vmatpush1.msra.mxu0 0.0
  %1055 = vmatprep.subr.mxu0 0.0
  %1056 = vmatpush1.msra.mxu0 0.0
  %1057 = vmatprep.subr.mxu0 0.0
  %1058 = vmatpush1.msra.mxu0 0.0
  %1059 = vmatprep.subr.mxu0 0.0
  %1060 = vmatpush1.msra.mxu0 0.0
  %1061 = vmatprep.subr.mxu0 0.0
  %1062 = vmatpush1.msra.mxu0 0.0
  %1063 = vmatprep.subr.mxu0 0.0
  %1064 = vmatpush1.msra.mxu0 0.0
  %1065 = vmatprep.subr.mxu0 0.0
  %1066 = vmatpush1.msra.mxu0 0.0
  %1067 = vmatprep.subr.mxu0 0.0
  %1068 = vmatpush1.msra.mxu0 0.0
  %1069 = vmatprep.subr.mxu0 0.0
  %1070 = vmatpush1.msra.mxu0 0.0
  %1071 = vmatprep.subr.mxu0 0.0
  %1072 = vmatpush1.msra.mxu0 0.0
  %1073 = vmatprep.subr.mxu0 0.0
  %1074 = vmatpush1.msra.mxu0 0.0
  %1075 = vmatprep.subr.mxu0 0.0
  %1076 = vmatpush1.msra.mxu0 0.0
  %1077 = vmatprep.subr.mxu0 0.0
  %1078 = vmatpush1.msra.mxu0 0.0
  %1079 = vmatprep.subr.mxu0 0.0
  %1080 = vmatpush1.msra.mxu0 0.0
  %1081 = vmatprep.subr.mxu0 0.0
  %1082 = vmatpush1.msra.mxu0 0.0
  %1083 = vmatprep.subr.mxu0 0.0
  %1084 = vmatpush1.msra.mxu0 0.0
  %1085 = vmatprep.mubr.f32.mxu0 0.0
  %1086 = vmatmul.mubr.f32.gmra.mrb[0].mxu0 %v1016
  %v1087 = vpop.f32.mrb[0].mxu0
  %v1088 = vadd.f32 0.0, %v1087
  %v1089 = vpop.f32.mrb[0].mxu0
  %1090 = vmatprep.mubr.f32.mxu0 0.0
  %1091 = vmatmul.mubr.f32.gmra.mrb[0].mxu0 %v1019
  %v1092 = vpop.f32.mrb[0].mxu0
  %v1093 = vadd.f32 0.0, %v1092
  %v1094 = vpop.f32.mrb[0].mxu0
  %1095 = vdwg.mxu0
  %1096 = vrot.lane.b32.xlu0 %v377, 112
  %v1097 = vpop.permute.xlu0 %1096
  %1098 = vrot.lane.b32.xlu0 %v382, 112
  %v1099 = vpop.permute.xlu0 %1098
  %v1103 = vsel %vm833, %v918, 0
  %v1106 = vsel %vm833, %v919, 0
  %1108 = vmatprep.subr.mxu0 0.0
  %1109 = vmatpush1.msra.mxu0 %v1097
  %1110 = vmatprep.subr.mxu0 0.0
  %1111 = vmatpush1.msra.mxu0 %v1099
  %1112 = vmatprep.subr.mxu0 0.0
  %1113 = vmatpush1.msra.mxu0 0.0
  %1114 = vmatprep.subr.mxu0 0.0
  %1115 = vmatpush1.msra.mxu0 0.0
  %1116 = vmatprep.subr.mxu0 0.0
  %1117 = vmatpush1.msra.mxu0 0.0
  %1118 = vmatprep.subr.mxu0 0.0
  %1119 = vmatpush1.msra.mxu0 0.0
  %1120 = vmatprep.subr.mxu0 0.0
  %1121 = vmatpush1.msra.mxu0 0.0
  %1122 = vmatprep.subr.mxu0 0.0
  %1123 = vmatpush1.msra.mxu0 0.0
  %1124 = vmatprep.subr.mxu0 0.0
  %1125 = vmatpush1.msra.mxu0 0.0
  %1126 = vmatprep.subr.mxu0 0.0
  %1127 = vmatpush1.msra.mxu0 0.0
  %1128 = vmatprep.subr.mxu0 0.0
  %1129 = vmatpush1.msra.mxu0 0.0
  %1130 = vmatprep.subr.mxu0 0.0
  %1131 = vmatpush1.msra.mxu0 0.0
  %1132 = vmatprep.subr.mxu0 0.0
  %1133 = vmatpush1.msra.mxu0 0.0
  %1134 = vmatprep.subr.mxu0 0.0
  %1135 = vmatpush1.msra.mxu0 0.0
  %1136 = vmatprep.subr.mxu0 0.0
  %1137 = vmatpush1.msra.mxu0 0.0
  %1138 = vmatprep.subr.mxu0 0.0
  %1139 = vmatpush1.msra.mxu0 0.0
  %1140 = vmatprep.subr.mxu0 0.0
  %1141 = vmatpush1.msra.mxu0 0.0
  %1142 = vmatprep.subr.mxu0 0.0
  %1143 = vmatpush1.msra.mxu0 0.0
  %1144 = vmatprep.subr.mxu0 0.0
  %1145 = vmatpush1.msra.mxu0 0.0
  %1146 = vmatprep.subr.mxu0 0.0
  %1147 = vmatpush1.msra.mxu0 0.0
  %1148 = vmatprep.subr.mxu0 0.0
  %1149 = vmatpush1.msra.mxu0 0.0
  %1150 = vmatprep.subr.mxu0 0.0
  %1151 = vmatpush1.msra.mxu0 0.0
  %1152 = vmatprep.subr.mxu0 0.0
  %1153 = vmatpush1.msra.mxu0 0.0
  %1154 = vmatprep.subr.mxu0 0.0
  %1155 = vmatpush1.msra.mxu0 0.0
  %1156 = vmatprep.subr.mxu0 0.0
  %1157 = vmatpush1.msra.mxu0 0.0
  %1158 = vmatprep.subr.mxu0 0.0
  %1159 = vmatpush1.msra.mxu0 0.0
  %1160 = vmatprep.subr.mxu0 0.0
  %1161 = vmatpush1.msra.mxu0 0.0
  %1162 = vmatprep.subr.mxu0 0.0
  %1163 = vmatpush1.msra.mxu0 0.0
  %1164 = vmatprep.subr.mxu0 0.0
  %1165 = vmatpush1.msra.mxu0 0.0
  %1166 = vmatprep.subr.mxu0 0.0
  %1167 = vmatpush1.msra.mxu0 0.0
  %1168 = vmatprep.subr.mxu0 0.0
  %1169 = vmatpush1.msra.mxu0 0.0
  %1170 = vmatprep.subr.mxu0 0.0
  %1171 = vmatpush1.msra.mxu0 0.0
  %1172 = vmatprep.mubr.f32.mxu0 0.0
  %1173 = vmatmul.mubr.f32.gmra.mrb[0].mxu0 %v1103
  %v1174 = vpop.f32.mrb[0].mxu0
  %v1175 = vadd.f32 0.0, %v1174
  %v1176 = vpop.f32.mrb[0].mxu0
  %1177 = vmatprep.mubr.f32.mxu0 0.0
  %1178 = vmatmul.mubr.f32.gmra.mrb[0].mxu0 %v1106
  %v1179 = vpop.f32.mrb[0].mxu0
  %v1180 = vadd.f32 0.0, %v1179
  %v1181 = vpop.f32.mrb[0].mxu0
  %1182 = vdwg.mxu0
  %1183 = vrot.lane.b32.xlu0 %v452, 112
  %v1184 = vpop.permute.xlu0 %1183
  %1185 = vrot.lane.b32.xlu0 %v457, 112
  %v1186 = vpop.permute.xlu0 %1185
  %v1190 = vsel %vm833, %v920, 0
  %v1193 = vsel %vm833, %v921, 0
  %1195 = vmatprep.subr.mxu0 0.0
  %1196 = vmatpush1.msra.mxu0 %v1184
  %1197 = vmatprep.subr.mxu0 0.0
  %1198 = vmatpush1.msra.mxu0 %v1186
  %1199 = vmatprep.subr.mxu0 0.0
  %1200 = vmatpush1.msra.mxu0 0.0
  %1201 = vmatprep.subr.mxu0 0.0
  %1202 = vmatpush1.msra.mxu0 0.0
  %1203 = vmatprep.subr.mxu0 0.0
  %1204 = vmatpush1.msra.mxu0 0.0
  %1205 = vmatprep.subr.mxu0 0.0
  %1206 = vmatpush1.msra.mxu0 0.0
  %1207 = vmatprep.subr.mxu0 0.0
  %1208 = vmatpush1.msra.mxu0 0.0
  %1209 = vmatprep.subr.mxu0 0.0
  %1210 = vmatpush1.msra.mxu0 0.0
  %1211 = vmatprep.subr.mxu0 0.0
  %1212 = vmatpush1.msra.mxu0 0.0
  %1213 = vmatprep.subr.mxu0 0.0
  %1214 = vmatpush1.msra.mxu0 0.0
  %1215 = vmatprep.subr.mxu0 0.0
  %1216 = vmatpush1.msra.mxu0 0.0
  %1217 = vmatprep.subr.mxu0 0.0
  %1218 = vmatpush1.msra.mxu0 0.0
  %1219 = vmatprep.subr.mxu0 0.0
  %1220 = vmatpush1.msra.mxu0 0.0
  %1221 = vmatprep.subr.mxu0 0.0
  %1222 = vmatpush1.msra.mxu0 0.0
  %1223 = vmatprep.subr.mxu0 0.0
  %1224 = vmatpush1.msra.mxu0 0.0
  %1225 = vmatprep.subr.mxu0 0.0
  %1226 = vmatpush1.msra.mxu0 0.0
  %1227 = vmatprep.subr.mxu0 0.0
  %1228 = vmatpush1.msra.mxu0 0.0
  %1229 = vmatprep.subr.mxu0 0.0
  %1230 = vmatpush1.msra.mxu0 0.0
  %1231 = vmatprep.subr.mxu0 0.0
  %1232 = vmatpush1.msra.mxu0 0.0
  %1233 = vmatprep.subr.mxu0 0.0
  %1234 = vmatpush1.msra.mxu0 0.0
  %1235 = vmatprep.subr.mxu0 0.0
  %1236 = vmatpush1.msra.mxu0 0.0
  %1237 = vmatprep.subr.mxu0 0.0
  %1238 = vmatpush1.msra.mxu0 0.0
  %1239 = vmatprep.subr.mxu0 0.0
  %1240 = vmatpush1.msra.mxu0 0.0
  %1241 = vmatprep.subr.mxu0 0.0
  %1242 = vmatpush1.msra.mxu0 0.0
  %1243 = vmatprep.subr.mxu0 0.0
  %1244 = vmatpush1.msra.mxu0 0.0
  %1245 = vmatprep.subr.mxu0 0.0
  %1246 = vmatpush1.msra.mxu0 0.0
  %1247 = vmatprep.subr.mxu0 0.0
  %1248 = vmatpush1.msra.mxu0 0.0
  %1249 = vmatprep.subr.mxu0 0.0
  %1250 = vmatpush1.msra.mxu0 0.0
  %1251 = vmatprep.subr.mxu0 0.0
  %1252 = vmatpush1.msra.mxu0 0.0
  %1253 = vmatprep.subr.mxu0 0.0
  %1254 = vmatpush1.msra.mxu0 0.0
  %1255 = vmatprep.subr.mxu0 0.0
  %1256 = vmatpush1.msra.mxu0 0.0
  %1257 = vmatprep.subr.mxu0 0.0
  %1258 = vmatpush1.msra.mxu0 0.0
  %1259 = vmatprep.mubr.f32.mxu0 0.0
  %1260 = vmatmul.mubr.f32.gmra.mrb[0].mxu0 %v1190
  %v1261 = vpop.f32.mrb[0].mxu0
  %v1262 = vadd.f32 0.0, %v1261
  %v1263 = vpop.f32.mrb[0].mxu0
  %1264 = vmatprep.mubr.f32.mxu0 0.0
  %1265 = vmatmul.mubr.f32.gmra.mrb[0].mxu0 %v1193
  %v1266 = vpop.f32.mrb[0].mxu0
  %v1267 = vadd.f32 0.0, %v1266
  %v1268 = vpop.f32.mrb[0].mxu0
  %1269 = vdwg.mxu0
  %v1270 = vld [vmem:[%s7] sm:$0xff]
  %v1271 = vld [vmem:[%s7 + $0x8] sm:$0xff]
  %v1272 = vld [vmem:[%s7 + $0x10] sm:$0xff]
  %v1273 = vld [vmem:[%s7 + $0x18] sm:$0xff]
  %v1275 = vsel %vm466, %v1001, 0
  %v1278 = vsel %vm466, %v1006, 0
  %1280 = vmatprep.subr.mxu0 0.0
  %1281 = vmatpush1.msra.mxu0 %v1270
  %1282 = vmatprep.subr.mxu0 0.0
  %1283 = vmatpush1.msra.mxu0 0.0
  %1284 = vmatprep.subr.mxu0 0.0
  %1285 = vmatpush1.msra.mxu0 0.0
  %1286 = vmatprep.subr.mxu0 0.0
  %1287 = vmatpush1.msra.mxu0 0.0
  %1288 = vmatprep.subr.mxu0 0.0
  %1289 = vmatpush1.msra.mxu0 0.0
  %1290 = vmatprep.subr.mxu0 0.0
  %1291 = vmatpush1.msra.mxu0 0.0
  %1292 = vmatprep.subr.mxu0 0.0
  %1293 = vmatpush1.msra.mxu0 0.0
  %1294 = vmatprep.subr.mxu0 0.0
  %1295 = vmatpush1.msra.mxu0 0.0
  %1296 = vmatprep.subr.mxu0 0.0
  %1297 = vmatpush1.msra.mxu0 0.0
  %1298 = vmatprep.subr.mxu0 0.0
  %1299 = vmatpush1.msra.mxu0 0.0
  %1300 = vmatprep.subr.mxu0 0.0
  %1301 = vmatpush1.msra.mxu0 0.0
  %1302 = vmatprep.subr.mxu0 0.0
  %1303 = vmatpush1.msra.mxu0 0.0
  %1304 = vmatprep.subr.mxu0 0.0
  %1305 = vmatpush1.msra.mxu0 0.0
  %1306 = vmatprep.subr.mxu0 0.0
  %1307 = vmatpush1.msra.mxu0 0.0
  %1308 = vmatprep.subr.mxu0 0.0
  %1309 = vmatpush1.msra.mxu0 0.0
  %1310 = vmatprep.subr.mxu0 0.0
  %1311 = vmatpush1.msra.mxu0 0.0
  %1312 = vmatprep.subr.mxu0 0.0
  %1313 = vmatpush1.msra.mxu0 0.0
  %1314 = vmatprep.subr.mxu0 0.0
  %1315 = vmatpush1.msra.mxu0 0.0
  %1316 = vmatprep.subr.mxu0 0.0
  %1317 = vmatpush1.msra.mxu0 0.0
  %1318 = vmatprep.subr.mxu0 0.0
  %1319 = vmatpush1.msra.mxu0 0.0
  %1320 = vmatprep.subr.mxu0 0.0
  %1321 = vmatpush1.msra.mxu0 0.0
  %1322 = vmatprep.subr.mxu0 0.0
  %1323 = vmatpush1.msra.mxu0 0.0
  %1324 = vmatprep.subr.mxu0 0.0
  %1325 = vmatpush1.msra.mxu0 0.0
  %1326 = vmatprep.subr.mxu0 0.0
  %1327 = vmatpush1.msra.mxu0 0.0
  %1328 = vmatprep.subr.mxu0 0.0
  %1329 = vmatpush1.msra.mxu0 0.0
  %1330 = vmatprep.subr.mxu0 0.0
  %1331 = vmatpush1.msra.mxu0 0.0
  %1332 = vmatprep.subr.mxu0 0.0
  %1333 = vmatpush1.msra.mxu0 0.0
  %1334 = vmatprep.subr.mxu0 0.0
  %1335 = vmatpush1.msra.mxu0 0.0
  %1336 = vmatprep.subr.mxu0 0.0
  %1337 = vmatpush1.msra.mxu0 0.0
  %1338 = vmatprep.subr.mxu0 0.0
  %1339 = vmatpush1.msra.mxu0 0.0
  %1340 = vmatprep.subr.mxu0 0.0
  %1341 = vmatpush1.msra.mxu0 0.0
  %1342 = vmatprep.subr.mxu0 0.0
  %1343 = vmatpush1.msra.mxu0 0.0
  %1344 = vmatprep.mubr.f32.mxu0 0.0
  %1345 = vmatmul.mubr.f32.gmra.mrb[0].mxu0 %v1275
  %v1346 = vpop.f32.mrb[0].mxu0
  %v1347 = vadd.f32 0.0, %v1346
  %v1348 = vpop.f32.mrb[0].mxu0
  %1349 = vmatprep.mubr.f32.mxu0 0.0
  %1350 = vmatmul.mubr.f32.gmra.mrb[0].mxu0 %v1278
  %v1351 = vpop.f32.mrb[0].mxu0
  %v1352 = vadd.f32 0.0, %v1351
  %v1353 = vpop.f32.mrb[0].mxu0
  %1354 = vdwg.mxu0
  %v1356 = vsel %vm466, %v1088, 0
  %v1359 = vsel %vm466, %v1093, 0
  %1361 = vmatprep.subr.mxu0 0.0
  %1362 = vmatpush1.msra.mxu0 %v1271
  %1363 = vmatprep.subr.mxu0 0.0
  %1364 = vmatpush1.msra.mxu0 0.0
  %1365 = vmatprep.subr.mxu0 0.0
  %1366 = vmatpush1.msra.mxu0 0.0
  %1367 = vmatprep.subr.mxu0 0.0
  %1368 = vmatpush1.msra.mxu0 0.0
  %1369 = vmatprep.subr.mxu0 0.0
  %1370 = vmatpush1.msra.mxu0 0.0
  %1371 = vmatprep.subr.mxu0 0.0
  %1372 = vmatpush1.msra.mxu0 0.0
  %1373 = vmatprep.subr.mxu0 0.0
  %1374 = vmatpush1.msra.mxu0 0.0
  %1375 = vmatprep.subr.mxu0 0.0
  %1376 = vmatpush1.msra.mxu0 0.0
  %1377 = vmatprep.subr.mxu0 0.0
  %1378 = vmatpush1.msra.mxu0 0.0
  %1379 = vmatprep.subr.mxu0 0.0
  %1380 = vmatpush1.msra.mxu0 0.0
  %1381 = vmatprep.subr.mxu0 0.0
  %1382 = vmatpush1.msra.mxu0 0.0
  %1383 = vmatprep.subr.mxu0 0.0
  %1384 = vmatpush1.msra.mxu0 0.0
  %1385 = vmatprep.subr.mxu0 0.0
  %1386 = vmatpush1.msra.mxu0 0.0
  %1387 = vmatprep.subr.mxu0 0.0
  %1388 = vmatpush1.msra.mxu0 0.0
  %1389 = vmatprep.subr.mxu0 0.0
  %1390 = vmatpush1.msra.mxu0 0.0
  %1391 = vmatprep.subr.mxu0 0.0
  %1392 = vmatpush1.msra.mxu0 0.0
  %1393 = vmatprep.subr.mxu0 0.0
  %1394 = vmatpush1.msra.mxu0 0.0
  %1395 = vmatprep.subr.mxu0 0.0
  %1396 = vmatpush1.msra.mxu0 0.0
  %1397 = vmatprep.subr.mxu0 0.0
  %1398 = vmatpush1.msra.mxu0 0.0
  %1399 = vmatprep.subr.mxu0 0.0
  %1400 = vmatpush1.msra.mxu0 0.0
  %1401 = vmatprep.subr.mxu0 0.0
  %1402 = vmatpush1.msra.mxu0 0.0
  %1403 = vmatprep.subr.mxu0 0.0
  %1404 = vmatpush1.msra.mxu0 0.0
  %1405 = vmatprep.subr.mxu0 0.0
  %1406 = vmatpush1.msra.mxu0 0.0
  %1407 = vmatprep.subr.mxu0 0.0
  %1408 = vmatpush1.msra.mxu0 0.0
  %1409 = vmatprep.subr.mxu0 0.0
  %1410 = vmatpush1.msra.mxu0 0.0
  %1411 = vmatprep.subr.mxu0 0.0
  %1412 = vmatpush1.msra.mxu0 0.0
  %1413 = vmatprep.subr.mxu0 0.0
  %1414 = vmatpush1.msra.mxu0 0.0
  %1415 = vmatprep.subr.mxu0 0.0
  %1416 = vmatpush1.msra.mxu0 0.0
  %1417 = vmatprep.subr.mxu0 0.0
  %1418 = vmatpush1.msra.mxu0 0.0
  %1419 = vmatprep.subr.mxu0 0.0
  %1420 = vmatpush1.msra.mxu0 0.0
  %1421 = vmatprep.subr.mxu0 0.0
  %1422 = vmatpush1.msra.mxu0 0.0
  %1423 = vmatprep.subr.mxu0 0.0
  %1424 = vmatpush1.msra.mxu0 0.0
  %1425 = vmatprep.mubr.f32.mxu0 0.0
  %1426 = vmatmul.mubr.f32.gmra.mrb[0].mxu0 %v1356
  %v1427 = vpop.f32.mrb[0].mxu0
  %v1428 = vadd.f32 0.0, %v1427
  %v1429 = vpop.f32.mrb[0].mxu0
  %1430 = vmatprep.mubr.f32.mxu0 0.0
  %1431 = vmatmul.mubr.f32.gmra.mrb[0].mxu0 %v1359
  %v1432 = vpop.f32.mrb[0].mxu0
  %v1433 = vadd.f32 0.0, %v1432
  %v1434 = vpop.f32.mrb[0].mxu0
  %1435 = vdwg.mxu0
  %v1437 = vsel %vm466, %v1175, 0
  %v1440 = vsel %vm466, %v1180, 0
  %1442 = vmatprep.subr.mxu0 0.0
  %1443 = vmatpush1.msra.mxu0 %v1272
  %1444 = vmatprep.subr.mxu0 0.0
  %1445 = vmatpush1.msra.mxu0 0.0
  %1446 = vmatprep.subr.mxu0 0.0
  %1447 = vmatpush1.msra.mxu0 0.0
  %1448 = vmatprep.subr.mxu0 0.0
  %1449 = vmatpush1.msra.mxu0 0.0
  %1450 = vmatprep.subr.mxu0 0.0
  %1451 = vmatpush1.msra.mxu0 0.0
  %1452 = vmatprep.subr.mxu0 0.0
  %1453 = vmatpush1.msra.mxu0 0.0
  %1454 = vmatprep.subr.mxu0 0.0
  %1455 = vmatpush1.msra.mxu0 0.0
  %1456 = vmatprep.subr.mxu0 0.0
  %1457 = vmatpush1.msra.mxu0 0.0
  %1458 = vmatprep.subr.mxu0 0.0
  %1459 = vmatpush1.msra.mxu0 0.0
  %1460 = vmatprep.subr.mxu0 0.0
  %1461 = vmatpush1.msra.mxu0 0.0
  %1462 = vmatprep.subr.mxu0 0.0
  %1463 = vmatpush1.msra.mxu0 0.0
  %1464 = vmatprep.subr.mxu0 0.0
  %1465 = vmatpush1.msra.mxu0 0.0
  %1466 = vmatprep.subr.mxu0 0.0
  %1467 = vmatpush1.msra.mxu0 0.0
  %1468 = vmatprep.subr.mxu0 0.0
  %1469 = vmatpush1.msra.mxu0 0.0
  %1470 = vmatprep.subr.mxu0 0.0
  %1471 = vmatpush1.msra.mxu0 0.0
  %1472 = vmatprep.subr.mxu0 0.0
  %1473 = vmatpush1.msra.mxu0 0.0
  %1474 = vmatprep.subr.mxu0 0.0
  %1475 = vmatpush1.msra.mxu0 0.0
  %1476 = vmatprep.subr.mxu0 0.0
  %1477 = vmatpush1.msra.mxu0 0.0
  %1478 = vmatprep.subr.mxu0 0.0
  %1479 = vmatpush1.msra.mxu0 0.0
  %1480 = vmatprep.subr.mxu0 0.0
  %1481 = vmatpush1.msra.mxu0 0.0
  %1482 = vmatprep.subr.mxu0 0.0
  %1483 = vmatpush1.msra.mxu0 0.0
  %1484 = vmatprep.subr.mxu0 0.0
  %1485 = vmatpush1.msra.mxu0 0.0
  %1486 = vmatprep.subr.mxu0 0.0
  %1487 = vmatpush1.msra.mxu0 0.0
  %1488 = vmatprep.subr.mxu0 0.0
  %1489 = vmatpush1.msra.mxu0 0.0
  %1490 = vmatprep.subr.mxu0 0.0
  %1491 = vmatpush1.msra.mxu0 0.0
  %1492 = vmatprep.subr.mxu0 0.0
  %1493 = vmatpush1.msra.mxu0 0.0
  %1494 = vmatprep.subr.mxu0 0.0
  %1495 = vmatpush1.msra.mxu0 0.0
  %1496 = vmatprep.subr.mxu0 0.0
  %1497 = vmatpush1.msra.mxu0 0.0
  %1498 = vmatprep.subr.mxu0 0.0
  %1499 = vmatpush1.msra.mxu0 0.0
  %1500 = vmatprep.subr.mxu0 0.0
  %1501 = vmatpush1.msra.mxu0 0.0
  %1502 = vmatprep.subr.mxu0 0.0
  %1503 = vmatpush1.msra.mxu0 0.0
  %1504 = vmatprep.subr.mxu0 0.0
  %1505 = vmatpush1.msra.mxu0 0.0
  %1506 = vmatprep.mubr.f32.mxu0 0.0
  %1507 = vmatmul.mubr.f32.gmra.mrb[0].mxu0 %v1437
  %v1508 = vpop.f32.mrb[0].mxu0
  %v1509 = vadd.f32 0.0, %v1508
  %v1510 = vpop.f32.mrb[0].mxu0
  %1511 = vmatprep.mubr.f32.mxu0 0.0
  %1512 = vmatmul.mubr.f32.gmra.mrb[0].mxu0 %v1440
  %v1513 = vpop.f32.mrb[0].mxu0
  %v1514 = vadd.f32 0.0, %v1513
  %v1515 = vpop.f32.mrb[0].mxu0
  %1516 = vdwg.mxu0
  %v1518 = vsel %vm466, %v1262, 0
  %v1521 = vsel %vm466, %v1267, 0
  %1523 = vmatprep.subr.mxu0 0.0
  %1524 = vmatpush1.msra.mxu0 %v1273
  %1525 = vmatprep.subr.mxu0 0.0
  %1526 = vmatpush1.msra.mxu0 0.0
  %1527 = vmatprep.subr.mxu0 0.0
  %1528 = vmatpush1.msra.mxu0 0.0
  %1529 = vmatprep.subr.mxu0 0.0
  %1530 = vmatpush1.msra.mxu0 0.0
  %1531 = vmatprep.subr.mxu0 0.0
  %1532 = vmatpush1.msra.mxu0 0.0
  %1533 = vmatprep.subr.mxu0 0.0
  %1534 = vmatpush1.msra.mxu0 0.0
  %1535 = vmatprep.subr.mxu0 0.0
  %1536 = vmatpush1.msra.mxu0 0.0
  %1537 = vmatprep.subr.mxu0 0.0
  %1538 = vmatpush1.msra.mxu0 0.0
  %1539 = vmatprep.subr.mxu0 0.0
  %1540 = vmatpush1.msra.mxu0 0.0
  %1541 = vmatprep.subr.mxu0 0.0
  %1542 = vmatpush1.msra.mxu0 0.0
  %1543 = vmatprep.subr.mxu0 0.0
  %1544 = vmatpush1.msra.mxu0 0.0
  %1545 = vmatprep.subr.mxu0 0.0
  %1546 = vmatpush1.msra.mxu0 0.0
  %1547 = vmatprep.subr.mxu0 0.0
  %1548 = vmatpush1.msra.mxu0 0.0
  %1549 = vmatprep.subr.mxu0 0.0
  %1550 = vmatpush1.msra.mxu0 0.0
  %1551 = vmatprep.subr.mxu0 0.0
  %1552 = vmatpush1.msra.mxu0 0.0
  %1553 = vmatprep.subr.mxu0 0.0
  %1554 = vmatpush1.msra.mxu0 0.0
  %1555 = vmatprep.subr.mxu0 0.0
  %1556 = vmatpush1.msra.mxu0 0.0
  %1557 = vmatprep.subr.mxu0 0.0
  %1558 = vmatpush1.msra.mxu0 0.0
  %1559 = vmatprep.subr.mxu0 0.0
  %1560 = vmatpush1.msra.mxu0 0.0
  %1561 = vmatprep.subr.mxu0 0.0
  %1562 = vmatpush1.msra.mxu0 0.0
  %1563 = vmatprep.subr.mxu0 0.0
  %1564 = vmatpush1.msra.mxu0 0.0
  %1565 = vmatprep.subr.mxu0 0.0
  %1566 = vmatpush1.msra.mxu0 0.0
  %1567 = vmatprep.subr.mxu0 0.0
  %1568 = vmatpush1.msra.mxu0 0.0
  %1569 = vmatprep.subr.mxu0 0.0
  %1570 = vmatpush1.msra.mxu0 0.0
  %1571 = vmatprep.subr.mxu0 0.0
  %1572 = vmatpush1.msra.mxu0 0.0
  %1573 = vmatprep.subr.mxu0 0.0
  %1574 = vmatpush1.msra.mxu0 0.0
  %1575 = vmatprep.subr.mxu0 0.0
  %1576 = vmatpush1.msra.mxu0 0.0
  %1577 = vmatprep.subr.mxu0 0.0
  %1578 = vmatpush1.msra.mxu0 0.0
  %1579 = vmatprep.subr.mxu0 0.0
  %1580 = vmatpush1.msra.mxu0 0.0
  %1581 = vmatprep.subr.mxu0 0.0
  %1582 = vmatpush1.msra.mxu0 0.0
  %1583 = vmatprep.subr.mxu0 0.0
  %1584 = vmatpush1.msra.mxu0 0.0
  %1585 = vmatprep.subr.mxu0 0.0
  %1586 = vmatpush1.msra.mxu0 0.0
  %1587 = vmatprep.mubr.f32.mxu0 0.0
  %1588 = vmatmul.mubr.f32.gmra.mrb[0].mxu0 %v1518
  %v1589 = vpop.f32.mrb[0].mxu0
  %v1590 = vadd.f32 0.0, %v1589
  %v1591 = vpop.f32.mrb[0].mxu0
  %1592 = vmatprep.mubr.f32.mxu0 0.0
  %1593 = vmatmul.mubr.f32.gmra.mrb[0].mxu0 %v1521
  %v1594 = vpop.f32.mrb[0].mxu0
  %v1595 = vadd.f32 0.0, %v1594
  %v1596 = vpop.f32.mrb[0].mxu0
  %1597 = vdwg.mxu0
  %v1598 = vsel %vm153, %v1347, 0.0
  %v1599 = vsel %vm153, %v1428, 0.0
  %v1600 = vadd.f32 %v1598, %v1599
  %v1601 = vsel %vm153, %v1509, 0.0
  %v1602 = vadd.f32 %v1600, %v1601
  %v1603 = vsel %vm153, %v1590, 0.0
  %v1604 = vadd.f32 %v1602, %v1603
  %v1605 = vsel %vm153, %v1352, 0.0
  %v1606 = vsel %vm153, %v1433, 0.0
  %v1607 = vadd.f32 %v1605, %v1606
  %v1608 = vsel %vm153, %v1514, 0.0
  %v1609 = vadd.f32 %v1607, %v1608
  %v1610 = vsel %vm153, %v1595, 0.0
  %v1611 = vadd.f32 %v1609, %v1610
  %v1612 = vld [vmem:[%s6] sm:$0xff]
  %v1613 = vld [vmem:[%s6 + $0x8] sm:$0xff]
  %v1614 = vld [vmem:[%s6 + $0x10] sm:$0xff]
  %v1615 = vld [vmem:[%s6 + $0x18] sm:$0xff]
  %1616 = vmatprep.subr.mxu0 0.0
  %1617 = vmatpush1.msra.mxu0 %v1612
  %1618 = vmatprep.subr.mxu0 0.0
  %1619 = vmatpush1.msra.mxu0 %v1613
  %1620 = vmatprep.subr.mxu0 0.0
  %1621 = vmatpush1.msra.mxu0 %v1614
  %1622 = vmatprep.subr.mxu0 0.0
  %1623 = vmatpush1.msra.mxu0 %v1615
  %1624 = vmatprep.subr.mxu0 0.0
  %1625 = vmatpush1.msra.mxu0 0.0
  %1626 = vmatprep.subr.mxu0 0.0
  %1627 = vmatpush1.msra.mxu0 0.0
  %1628 = vmatprep.subr.mxu0 0.0
  %1629 = vmatpush1.msra.mxu0 0.0
  %1630 = vmatprep.subr.mxu0 0.0
  %1631 = vmatpush1.msra.mxu0 0.0
  %1632 = vmatprep.subr.mxu0 0.0
  %1633 = vmatpush1.msra.mxu0 0.0
  %1634 = vmatprep.subr.mxu0 0.0
  %1635 = vmatpush1.msra.mxu0 0.0
  %1636 = vmatprep.subr.mxu0 0.0
  %1637 = vmatpush1.msra.mxu0 0.0
  %1638 = vmatprep.subr.mxu0 0.0
  %1639 = vmatpush1.msra.mxu0 0.0
  %1640 = vmatprep.subr.mxu0 0.0
  %1641 = vmatpush1.msra.mxu0 0.0
  %1642 = vmatprep.subr.mxu0 0.0
  %1643 = vmatpush1.msra.mxu0 0.0
  %1644 = vmatprep.subr.mxu0 0.0
  %1645 = vmatpush1.msra.mxu0 0.0
  %1646 = vmatprep.subr.mxu0 0.0
  %1647 = vmatpush1.msra.mxu0 0.0
  %1648 = vmatprep.subr.mxu0 0.0
  %1649 = vmatpush1.msra.mxu0 0.0
  %1650 = vmatprep.subr.mxu0 0.0
  %1651 = vmatpush1.msra.mxu0 0.0
  %1652 = vmatprep.subr.mxu0 0.0
  %1653 = vmatpush1.msra.mxu0 0.0
  %1654 = vmatprep.subr.mxu0 0.0
  %1655 = vmatpush1.msra.mxu0 0.0
  %1656 = vmatprep.subr.mxu0 0.0
  %1657 = vmatpush1.msra.mxu0 0.0
  %1658 = vmatprep.subr.mxu0 0.0
  %1659 = vmatpush1.msra.mxu0 0.0
  %1660 = vmatprep.subr.mxu0 0.0
  %1661 = vmatpush1.msra.mxu0 0.0
  %1662 = vmatprep.subr.mxu0 0.0
  %1663 = vmatpush1.msra.mxu0 0.0
  %1664 = vmatprep.subr.mxu0 0.0
  %1665 = vmatpush1.msra.mxu0 0.0
  %1666 = vmatprep.subr.mxu0 0.0
  %1667 = vmatpush1.msra.mxu0 0.0
  %1668 = vmatprep.subr.mxu0 0.0
  %1669 = vmatpush1.msra.mxu0 0.0
  %1670 = vmatprep.subr.mxu0 0.0
  %1671 = vmatpush1.msra.mxu0 0.0
  %1672 = vmatprep.subr.mxu0 0.0
  %1673 = vmatpush1.msra.mxu0 0.0
  %1674 = vmatprep.subr.mxu0 0.0
  %1675 = vmatpush1.msra.mxu0 0.0
  %1676 = vmatprep.subr.mxu0 0.0
  %1677 = vmatpush1.msra.mxu0 0.0
  %1678 = vmatprep.subr.mxu0 0.0
  %1679 = vmatpush1.msra.mxu0 0.0
  %1680 = vmatprep.mubr.f32.mxu0 0.0
  %1681 = vmatmul.mubr.f32.gmra.mrb[0].mxu0 %v155
  %v1682 = vpop.f32.mrb[0].mxu0
  %v1683 = vadd.f32 %v1604, %v1682
  %v1684 = vpop.f32.mrb[0].mxu0
  %1685 = vmatprep.mubr.f32.mxu0 0.0
  %1686 = vmatmul.mubr.f32.gmra.mrb[0].mxu0 %v158
  %v1687 = vpop.f32.mrb[0].mxu0
  %v1688 = vadd.f32 %v1611, %v1687
  %v1689 = vpop.f32.mrb[0].mxu0
  %1690 = vdwg.mxu0
  %v1691 = vlaneseq
  %v1692 = vshrl.u32 %v1691, 7
  %v1693 = vsub.s32 0, %v1692
  %v1694 = vrot.slane %v134, %v1693
  %v1695 = vadd.f32 %v1683, %v1694
  %v1696 = vadd.f32 %v1688, %v1694
  %v1697 = vadd.f32 %v1695, %v124
  %v1698 = vadd.f32 %v1696, %v129
  %v1699 = vsel %vm153, %v1697, 0.0
  %1700 = vadd.xlane.f32.xlu0 %v1699
  %v1701 = vpop.xlane.xlu0 %1700
  %v1702 = vsel %vm153, %v1698, 0.0
  %1703 = vadd.xlane.f32.xlu0 %v1702
  %v1704 = vpop.xlane.xlu0 %1703
  %v1705 = vrcp.pop 32.0
  %v1706 = vmul.f32 %v1701, %v1705
  %v1707 = vmul.f32 %v1704, %v1705
  %v1708 = vsub.f32 %v1697, %v1706
  %v1709 = vsub.f32 %v1698, %v1707
  %v1710 = vmul.f32 %v1708, %v1708
  %v1711 = vmul.f32 %v1709, %v1709
  %v1712 = vsel %vm153, %v1710, 0.0
  %1713 = vadd.xlane.f32.xlu0 %v1712
  %v1714 = vpop.xlane.xlu0 %1713
  %v1715 = vsel %vm153, %v1711, 0.0
  %1716 = vadd.xlane.f32.xlu0 %v1715
  %v1717 = vpop.xlane.xlu0 %1716
  %v1718 = vmul.f32 %v1714, %v1705
  %v1719 = vmul.f32 %v1717, %v1705
  %v1720 = vadd.f32 %v1718, 1e-05
  %v1721 = vadd.f32 %v1719, 1e-05
  %v1722 = vrsqrt.pop %v1720
  %v1723 = vrsqrt.pop %v1721
  %v1724 = vmul.f32 %v1708, %v1722
  %v1725 = vmul.f32 %v1709, %v1723
  %v1726 = vlaneseq
  %v1727 = vshrl.u32 %v1726, 7
  %v1728 = vsub.s32 0, %v1727
  %v1729 = vrot.slane %v135, %v1728
  %v1730 = vmul.f32 %v1724, %v1729
  %v1731 = vmul.f32 %v1725, %v1729
  %v1732 = vlaneseq
  %v1733 = vshrl.u32 %v1732, 7
  %v1734 = vsub.s32 0, %v1733
  %v1735 = vrot.slane %v136, %v1734
  %v1736 = vadd.f32 %v1730, %v1735
  %v1737 = vadd.f32 %v1731, %v1735
  %v1738 = vld [vmem:[%s10 + $0x4] sm:$0x1]
  %v1739 = vld [vmem:[%s10 + $0x5] sm:$0x1]
  %v1740 = vld [vmem:[%s10 + $0x6] sm:$0x1]
  %s1741 = scalar_lea.vmem %s5, 128
  %v1742 = vld [vmem:[%s1741] sm:$0xff]
  %v1743 = vld [vmem:[%s1741 + $0x8] sm:$0xff]
  %v1744 = vld [vmem:[%s1741 + $0x10] sm:$0xff]
  %v1745 = vld [vmem:[%s1741 + $0x18] sm:$0xff]
  %v1746 = vld [vmem:[%s1741 + $0x20] sm:$0xff]
  %v1747 = vld [vmem:[%s1741 + $0x28] sm:$0xff]
  %v1748 = vld [vmem:[%s1741 + $0x30] sm:$0xff]
  %v1749 = vld [vmem:[%s1741 + $0x38] sm:$0xff]
  %v1750 = vld [vmem:[%s1741 + $0x40] sm:$0xff]
  %v1751 = vld [vmem:[%s1741 + $0x48] sm:$0xff]
  %v1752 = vld [vmem:[%s1741 + $0x50] sm:$0xff]
  %v1753 = vld [vmem:[%s1741 + $0x58] sm:$0xff]
  %v1754 = vld [vmem:[%s1741 + $0x60] sm:$0xff]
  %v1755 = vld [vmem:[%s1741 + $0x68] sm:$0xff]
  %v1756 = vld [vmem:[%s1741 + $0x70] sm:$0xff]
  %v1757 = vld [vmem:[%s1741 + $0x78] sm:$0xff]
  %v1759 = vsel %vm153, %v1736, 0
  %v1762 = vsel %vm153, %v1737, 0
  %1764 = vmatprep.subr.mxu0 0.0
  %1765 = vmatpush1.msra.mxu0 %v1742
  %1766 = vmatprep.subr.mxu0 0.0
  %1767 = vmatpush1.msra.mxu0 %v1743
  %1768 = vmatprep.subr.mxu0 0.0
  %1769 = vmatpush1.msra.mxu0 %v1744
  %1770 = vmatprep.subr.mxu0 0.0
  %1771 = vmatpush1.msra.mxu0 %v1745
  %1772 = vmatprep.subr.mxu0 0.0
  %1773 = vmatpush1.msra.mxu0 0.0
  %1774 = vmatprep.subr.mxu0 0.0
  %1775 = vmatpush1.msra.mxu0 0.0
  %1776 = vmatprep.subr.mxu0 0.0
  %1777 = vmatpush1.msra.mxu0 0.0
  %1778 = vmatprep.subr.mxu0 0.0
  %1779 = vmatpush1.msra.mxu0 0.0
  %1780 = vmatprep.subr.mxu0 0.0
  %1781 = vmatpush1.msra.mxu0 0.0
  %1782 = vmatprep.subr.mxu0 0.0
  %1783 = vmatpush1.msra.mxu0 0.0
  %1784 = vmatprep.subr.mxu0 0.0
  %1785 = vmatpush1.msra.mxu0 0.0
  %1786 = vmatprep.subr.mxu0 0.0
  %1787 = vmatpush1.msra.mxu0 0.0
  %1788 = vmatprep.subr.mxu0 0.0
  %1789 = vmatpush1.msra.mxu0 0.0
  %1790 = vmatprep.subr.mxu0 0.0
  %1791 = vmatpush1.msra.mxu0 0.0
  %1792 = vmatprep.subr.mxu0 0.0
  %1793 = vmatpush1.msra.mxu0 0.0
  %1794 = vmatprep.subr.mxu0 0.0
  %1795 = vmatpush1.msra.mxu0 0.0
  %1796 = vmatprep.subr.mxu0 0.0
  %1797 = vmatpush1.msra.mxu0 0.0
  %1798 = vmatprep.subr.mxu0 0.0
  %1799 = vmatpush1.msra.mxu0 0.0
  %1800 = vmatprep.subr.mxu0 0.0
  %1801 = vmatpush1.msra.mxu0 0.0
  %1802 = vmatprep.subr.mxu0 0.0
  %1803 = vmatpush1.msra.mxu0 0.0
  %1804 = vmatprep.subr.mxu0 0.0
  %1805 = vmatpush1.msra.mxu0 0.0
  %1806 = vmatprep.subr.mxu0 0.0
  %1807 = vmatpush1.msra.mxu0 0.0
  %1808 = vmatprep.subr.mxu0 0.0
  %1809 = vmatpush1.msra.mxu0 0.0
  %1810 = vmatprep.subr.mxu0 0.0
  %1811 = vmatpush1.msra.mxu0 0.0
  %1812 = vmatprep.subr.mxu0 0.0
  %1813 = vmatpush1.msra.mxu0 0.0
  %1814 = vmatprep.subr.mxu0 0.0
  %1815 = vmatpush1.msra.mxu0 0.0
  %1816 = vmatprep.subr.mxu0 0.0
  %1817 = vmatpush1.msra.mxu0 0.0
  %1818 = vmatprep.subr.mxu0 0.0
  %1819 = vmatpush1.msra.mxu0 0.0
  %1820 = vmatprep.subr.mxu0 0.0
  %1821 = vmatpush1.msra.mxu0 0.0
  %1822 = vmatprep.subr.mxu0 0.0
  %1823 = vmatpush1.msra.mxu0 0.0
  %1824 = vmatprep.subr.mxu0 0.0
  %1825 = vmatpush1.msra.mxu0 0.0
  %1826 = vmatprep.subr.mxu0 0.0
  %1827 = vmatpush1.msra.mxu0 0.0
  %1828 = vmatprep.mubr.f32.mxu0 0.0
  %1829 = vmatmul.mubr.f32.gmra.mrb[0].mxu0 %v1759
  %v1830 = vpop.f32.mrb[0].mxu0
  %v1831 = vadd.f32 0.0, %v1830
  %v1832 = vpop.f32.mrb[0].mxu0
  %1833 = vmatprep.mubr.f32.mxu0 0.0
  %1834 = vmatmul.mubr.f32.gmra.mrb[0].mxu0 %v1762
  %v1835 = vpop.f32.mrb[0].mxu0
  %v1836 = vadd.f32 0.0, %v1835
  %v1837 = vpop.f32.mrb[0].mxu0
  %1838 = vdwg.mxu0
  %1839 = vmatprep.subr.mxu0 0.0
  %1840 = vmatpush1.msra.mxu0 %v1746
  %1841 = vmatprep.subr.mxu0 0.0
  %1842 = vmatpush1.msra.mxu0 %v1747
  %1843 = vmatprep.subr.mxu0 0.0
  %1844 = vmatpush1.msra.mxu0 %v1748
  %1845 = vmatprep.subr.mxu0 0.0
  %1846 = vmatpush1.msra.mxu0 %v1749
  %1847 = vmatprep.subr.mxu0 0.0
  %1848 = vmatpush1.msra.mxu0 0.0
  %1849 = vmatprep.subr.mxu0 0.0
  %1850 = vmatpush1.msra.mxu0 0.0
  %1851 = vmatprep.subr.mxu0 0.0
  %1852 = vmatpush1.msra.mxu0 0.0
  %1853 = vmatprep.subr.mxu0 0.0
  %1854 = vmatpush1.msra.mxu0 0.0
  %1855 = vmatprep.subr.mxu0 0.0
  %1856 = vmatpush1.msra.mxu0 0.0
  %1857 = vmatprep.subr.mxu0 0.0
  %1858 = vmatpush1.msra.mxu0 0.0
  %1859 = vmatprep.subr.mxu0 0.0
  %1860 = vmatpush1.msra.mxu0 0.0
  %1861 = vmatprep.subr.mxu0 0.0
  %1862 = vmatpush1.msra.mxu0 0.0
  %1863 = vmatprep.subr.mxu0 0.0
  %1864 = vmatpush1.msra.mxu0 0.0
  %1865 = vmatprep.subr.mxu0 0.0
  %1866 = vmatpush1.msra.mxu0 0.0
  %1867 = vmatprep.subr.mxu0 0.0
  %1868 = vmatpush1.msra.mxu0 0.0
  %1869 = vmatprep.subr.mxu0 0.0
  %1870 = vmatpush1.msra.mxu0 0.0
  %1871 = vmatprep.subr.mxu0 0.0
  %1872 = vmatpush1.msra.mxu0 0.0
  %1873 = vmatprep.subr.mxu0 0.0
  %1874 = vmatpush1.msra.mxu0 0.0
  %1875 = vmatprep.subr.mxu0 0.0
  %1876 = vmatpush1.msra.mxu0 0.0
  %1877 = vmatprep.subr.mxu0 0.0
  %1878 = vmatpush1.msra.mxu0 0.0
  %1879 = vmatprep.subr.mxu0 0.0
  %1880 = vmatpush1.msra.mxu0 0.0
  %1881 = vmatprep.subr.mxu0 0.0
  %1882 = vmatpush1.msra.mxu0 0.0
  %1883 = vmatprep.subr.mxu0 0.0
  %1884 = vmatpush1.msra.mxu0 0.0
  %1885 = vmatprep.subr.mxu0 0.0
  %1886 = vmatpush1.msra.mxu0 0.0
  %1887 = vmatprep.subr.mxu0 0.0
  %1888 = vmatpush1.msra.mxu0 0.0
  %1889 = vmatprep.subr.mxu0 0.0
  %1890 = vmatpush1.msra.mxu0 0.0
  %1891 = vmatprep.subr.mxu0 0.0
  %1892 = vmatpush1.msra.mxu0 0.0
  %1893 = vmatprep.subr.mxu0 0.0
  %1894 = vmatpush1.msra.mxu0 0.0
  %1895 = vmatprep.subr.mxu0 0.0
  %1896 = vmatpush1.msra.mxu0 0.0
  %1897 = vmatprep.subr.mxu0 0.0
  %1898 = vmatpush1.msra.mxu0 0.0
  %1899 = vmatprep.subr.mxu0 0.0
  %1900 = vmatpush1.msra.mxu0 0.0
  %1901 = vmatprep.subr.mxu0 0.0
  %1902 = vmatpush1.msra.mxu0 0.0
  %1903 = vmatprep.mubr.f32.mxu0 0.0
  %1904 = vmatmul.mubr.f32.gmra.mrb[0].mxu0 %v1759
  %v1905 = vpop.f32.mrb[0].mxu0
  %v1906 = vadd.f32 0.0, %v1905
  %v1907 = vpop.f32.mrb[0].mxu0
  %1908 = vmatprep.mubr.f32.mxu0 0.0
  %1909 = vmatmul.mubr.f32.gmra.mrb[0].mxu0 %v1762
  %v1910 = vpop.f32.mrb[0].mxu0
  %v1911 = vadd.f32 0.0, %v1910
  %v1912 = vpop.f32.mrb[0].mxu0
  %1913 = vdwg.mxu0
  %1914 = vmatprep.subr.mxu0 0.0
  %1915 = vmatpush1.msra.mxu0 %v1750
  %1916 = vmatprep.subr.mxu0 0.0
  %1917 = vmatpush1.msra.mxu0 %v1751
  %1918 = vmatprep.subr.mxu0 0.0
  %1919 = vmatpush1.msra.mxu0 %v1752
  %1920 = vmatprep.subr.mxu0 0.0
  %1921 = vmatpush1.msra.mxu0 %v1753
  %1922 = vmatprep.subr.mxu0 0.0
  %1923 = vmatpush1.msra.mxu0 0.0
  %1924 = vmatprep.subr.mxu0 0.0
  %1925 = vmatpush1.msra.mxu0 0.0
  %1926 = vmatprep.subr.mxu0 0.0
  %1927 = vmatpush1.msra.mxu0 0.0
  %1928 = vmatprep.subr.mxu0 0.0
  %1929 = vmatpush1.msra.mxu0 0.0
  %1930 = vmatprep.subr.mxu0 0.0
  %1931 = vmatpush1.msra.mxu0 0.0
  %1932 = vmatprep.subr.mxu0 0.0
  %1933 = vmatpush1.msra.mxu0 0.0
  %1934 = vmatprep.subr.mxu0 0.0
  %1935 = vmatpush1.msra.mxu0 0.0
  %1936 = vmatprep.subr.mxu0 0.0
  %1937 = vmatpush1.msra.mxu0 0.0
  %1938 = vmatprep.subr.mxu0 0.0
  %1939 = vmatpush1.msra.mxu0 0.0
  %1940 = vmatprep.subr.mxu0 0.0
  %1941 = vmatpush1.msra.mxu0 0.0
  %1942 = vmatprep.subr.mxu0 0.0
  %1943 = vmatpush1.msra.mxu0 0.0
  %1944 = vmatprep.subr.mxu0 0.0
  %1945 = vmatpush1.msra.mxu0 0.0
  %1946 = vmatprep.subr.mxu0 0.0
  %1947 = vmatpush1.msra.mxu0 0.0
  %1948 = vmatprep.subr.mxu0 0.0
  %1949 = vmatpush1.msra.mxu0 0.0
  %1950 = vmatprep.subr.mxu0 0.0
  %1951 = vmatpush1.msra.mxu0 0.0
  %1952 = vmatprep.subr.mxu0 0.0
  %1953 = vmatpush1.msra.mxu0 0.0
  %1954 = vmatprep.subr.mxu0 0.0
  %1955 = vmatpush1.msra.mxu0 0.0
  %1956 = vmatprep.subr.mxu0 0.0
  %1957 = vmatpush1.msra.mxu0 0.0
  %1958 = vmatprep.subr.mxu0 0.0
  %1959 = vmatpush1.msra.mxu0 0.0
  %1960 = vmatprep.subr.mxu0 0.0
  %1961 = vmatpush1.msra.mxu0 0.0
  %1962 = vmatprep.subr.mxu0 0.0
  %1963 = vmatpush1.msra.mxu0 0.0
  %1964 = vmatprep.subr.mxu0 0.0
  %1965 = vmatpush1.msra.mxu0 0.0
  %1966 = vmatprep.subr.mxu0 0.0
  %1967 = vmatpush1.msra.mxu0 0.0
  %1968 = vmatprep.subr.mxu0 0.0
  %1969 = vmatpush1.msra.mxu0 0.0
  %1970 = vmatprep.subr.mxu0 0.0
  %1971 = vmatpush1.msra.mxu0 0.0
  %1972 = vmatprep.subr.mxu0 0.0
  %1973 = vmatpush1.msra.mxu0 0.0
  %1974 = vmatprep.subr.mxu0 0.0
  %1975 = vmatpush1.msra.mxu0 0.0
  %1976 = vmatprep.subr.mxu0 0.0
  %1977 = vmatpush1.msra.mxu0 0.0
  %1978 = vmatprep.mubr.f32.mxu0 0.0
  %1979 = vmatmul.mubr.f32.gmra.mrb[0].mxu0 %v1759
  %v1980 = vpop.f32.mrb[0].mxu0
  %v1981 = vadd.f32 0.0, %v1980
  %v1982 = vpop.f32.mrb[0].mxu0
  %1983 = vmatprep.mubr.f32.mxu0 0.0
  %1984 = vmatmul.mubr.f32.gmra.mrb[0].mxu0 %v1762
  %v1985 = vpop.f32.mrb[0].mxu0
  %v1986 = vadd.f32 0.0, %v1985
  %v1987 = vpop.f32.mrb[0].mxu0
  %1988 = vdwg.mxu0
  %1989 = vmatprep.subr.mxu0 0.0
  %1990 = vmatpush1.msra.mxu0 %v1754
  %1991 = vmatprep.subr.mxu0 0.0
  %1992 = vmatpush1.msra.mxu0 %v1755
  %1993 = vmatprep.subr.mxu0 0.0
  %1994 = vmatpush1.msra.mxu0 %v1756
  %1995 = vmatprep.subr.mxu0 0.0
  %1996 = vmatpush1.msra.mxu0 %v1757
  %1997 = vmatprep.subr.mxu0 0.0
  %1998 = vmatpush1.msra.mxu0 0.0
  %1999 = vmatprep.subr.mxu0 0.0
  %2000 = vmatpush1.msra.mxu0 0.0
  %2001 = vmatprep.subr.mxu0 0.0
  %2002 = vmatpush1.msra.mxu0 0.0
  %2003 = vmatprep.subr.mxu0 0.0
  %2004 = vmatpush1.msra.mxu0 0.0
  %2005 = vmatprep.subr.mxu0 0.0
  %2006 = vmatpush1.msra.mxu0 0.0
  %2007 = vmatprep.subr.mxu0 0.0
  %2008 = vmatpush1.msra.mxu0 0.0
  %2009 = vmatprep.subr.mxu0 0.0
  %2010 = vmatpush1.msra.mxu0 0.0
  %2011 = vmatprep.subr.mxu0 0.0
  %2012 = vmatpush1.msra.mxu0 0.0
  %2013 = vmatprep.subr.mxu0 0.0
  %2014 = vmatpush1.msra.mxu0 0.0
  %2015 = vmatprep.subr.mxu0 0.0
  %2016 = vmatpush1.msra.mxu0 0.0
  %2017 = vmatprep.subr.mxu0 0.0
  %2018 = vmatpush1.msra.mxu0 0.0
  %2019 = vmatprep.subr.mxu0 0.0
  %2020 = vmatpush1.msra.mxu0 0.0
  %2021 = vmatprep.subr.mxu0 0.0
  %2022 = vmatpush1.msra.mxu0 0.0
  %2023 = vmatprep.subr.mxu0 0.0
  %2024 = vmatpush1.msra.mxu0 0.0
  %2025 = vmatprep.subr.mxu0 0.0
  %2026 = vmatpush1.msra.mxu0 0.0
  %2027 = vmatprep.subr.mxu0 0.0
  %2028 = vmatpush1.msra.mxu0 0.0
  %2029 = vmatprep.subr.mxu0 0.0
  %2030 = vmatpush1.msra.mxu0 0.0
  %2031 = vmatprep.subr.mxu0 0.0
  %2032 = vmatpush1.msra.mxu0 0.0
  %2033 = vmatprep.subr.mxu0 0.0
  %2034 = vmatpush1.msra.mxu0 0.0
  %2035 = vmatprep.subr.mxu0 0.0
  %2036 = vmatpush1.msra.mxu0 0.0
  %2037 = vmatprep.subr.mxu0 0.0
  %2038 = vmatpush1.msra.mxu0 0.0
  %2039 = vmatprep.subr.mxu0 0.0
  %2040 = vmatpush1.msra.mxu0 0.0
  %2041 = vmatprep.subr.mxu0 0.0
  %2042 = vmatpush1.msra.mxu0 0.0
  %2043 = vmatprep.subr.mxu0 0.0
  %2044 = vmatpush1.msra.mxu0 0.0
  %2045 = vmatprep.subr.mxu0 0.0
  %2046 = vmatpush1.msra.mxu0 0.0
  %2047 = vmatprep.subr.mxu0 0.0
  %2048 = vmatpush1.msra.mxu0 0.0
  %2049 = vmatprep.subr.mxu0 0.0
  %2050 = vmatpush1.msra.mxu0 0.0
  %2051 = vmatprep.subr.mxu0 0.0
  %2052 = vmatpush1.msra.mxu0 0.0
  %2053 = vmatprep.mubr.f32.mxu0 0.0
  %2054 = vmatmul.mubr.f32.gmra.mrb[0].mxu0 %v1759
  %v2055 = vpop.f32.mrb[0].mxu0
  %v2056 = vadd.f32 0.0, %v2055
  %v2057 = vpop.f32.mrb[0].mxu0
  %2058 = vmatprep.mubr.f32.mxu0 0.0
  %2059 = vmatmul.mubr.f32.gmra.mrb[0].mxu0 %v1762
  %v2060 = vpop.f32.mrb[0].mxu0
  %v2061 = vadd.f32 0.0, %v2060
  %v2062 = vpop.f32.mrb[0].mxu0
  %2063 = vdwg.mxu0
  %2066 = vrot.lane.b32.xlu0 %v1831, 120
  %v2067 = vpop.permute.xlu0 %2066
  %2068 = vrot.lane.b32.xlu0 %v1836, 120
  %v2069 = vpop.permute.xlu0 %2068
  %v2070 = vsel %vm466, %v1831, 0
  %v2072 = vsel %vm466, %v1836, 0
  %v2074 = vsel %vm466, %v2067, 0
  %v2076 = vsel %vm466, %v2069, 0
  %2078 = vmatprep.subr.mxu0 0.0
  %2079 = vmatpush1.xpose.msra.mxu0 %v2074
  %2080 = vmatprep.subr.mxu0 0.0
  %2081 = vmatpush1.xpose.msra.mxu0 %v2076
  %2082 = vmatprep.subr.mxu0 0.0
  %2083 = vmatpush1.xpose.msra.mxu0 0.0
  %2084 = vmatprep.subr.mxu0 0.0
  %2085 = vmatpush1.xpose.msra.mxu0 0.0
  %2086 = vmatprep.subr.mxu0 0.0
  %2087 = vmatpush1.xpose.msra.mxu0 0.0
  %2088 = vmatprep.subr.mxu0 0.0
  %2089 = vmatpush1.xpose.msra.mxu0 0.0
  %2090 = vmatprep.subr.mxu0 0.0
  %2091 = vmatpush1.xpose.msra.mxu0 0.0
  %2092 = vmatprep.subr.mxu0 0.0
  %2093 = vmatpush1.xpose.msra.mxu0 0.0
  %2094 = vmatprep.subr.mxu0 0.0
  %2095 = vmatpush1.xpose.msra.mxu0 0.0
  %2096 = vmatprep.subr.mxu0 0.0
  %2097 = vmatpush1.xpose.msra.mxu0 0.0
  %2098 = vmatprep.subr.mxu0 0.0
  %2099 = vmatpush1.xpose.msra.mxu0 0.0
  %2100 = vmatprep.subr.mxu0 0.0
  %2101 = vmatpush1.xpose.msra.mxu0 0.0
  %2102 = vmatprep.subr.mxu0 0.0
  %2103 = vmatpush1.xpose.msra.mxu0 0.0
  %2104 = vmatprep.subr.mxu0 0.0
  %2105 = vmatpush1.xpose.msra.mxu0 0.0
  %2106 = vmatprep.subr.mxu0 0.0
  %2107 = vmatpush1.xpose.msra.mxu0 0.0
  %2108 = vmatprep.subr.mxu0 0.0
  %2109 = vmatpush1.xpose.msra.mxu0 0.0
  %2110 = vmatprep.subr.mxu0 0.0
  %2111 = vmatpush1.xpose.msra.mxu0 0.0
  %2112 = vmatprep.subr.mxu0 0.0
  %2113 = vmatpush1.xpose.msra.mxu0 0.0
  %2114 = vmatprep.subr.mxu0 0.0
  %2115 = vmatpush1.xpose.msra.mxu0 0.0
  %2116 = vmatprep.subr.mxu0 0.0
  %2117 = vmatpush1.xpose.msra.mxu0 0.0
  %2118 = vmatprep.subr.mxu0 0.0
  %2119 = vmatpush1.xpose.msra.mxu0 0.0
  %2120 = vmatprep.subr.mxu0 0.0
  %2121 = vmatpush1.xpose.msra.mxu0 0.0
  %2122 = vmatprep.subr.mxu0 0.0
  %2123 = vmatpush1.xpose.msra.mxu0 0.0
  %2124 = vmatprep.subr.mxu0 0.0
  %2125 = vmatpush1.xpose.msra.mxu0 0.0
  %2126 = vmatprep.subr.mxu0 0.0
  %2127 = vmatpush1.xpose.msra.mxu0 0.0
  %2128 = vmatprep.subr.mxu0 0.0
  %2129 = vmatpush1.xpose.msra.mxu0 0.0
  %2130 = vmatprep.subr.mxu0 0.0
  %2131 = vmatpush1.xpose.msra.mxu0 0.0
  %2132 = vmatprep.subr.mxu0 0.0
  %2133 = vmatpush1.xpose.msra.mxu0 0.0
  %2134 = vmatprep.subr.mxu0 0.0
  %2135 = vmatpush1.xpose.msra.mxu0 0.0
  %2136 = vmatprep.subr.mxu0 0.0
  %2137 = vmatpush1.xpose.msra.mxu0 0.0
  %2138 = vmatprep.subr.mxu0 0.0
  %2139 = vmatpush1.xpose.msra.mxu0 0.0
  %2140 = vmatprep.subr.mxu0 0.0
  %2141 = vmatpush1.xpose.msra.mxu0 0.0
  %2142 = vmatprep.mubr.f32.mxu0 0.0
  %2143 = vmatmul.mubr.f32.gmra.mrb[0].mxu0 %v2070
  %v2144 = vpop.f32.mrb[0].mxu0
  %v2145 = vadd.f32 0.0, %v2144
  %v2146 = vpop.f32.mrb[0].mxu0
  %2147 = vmatprep.mubr.f32.mxu0 0.0
  %2148 = vmatmul.mubr.f32.gmra.mrb[0].mxu0 %v2072
  %v2149 = vpop.f32.mrb[0].mxu0
  %v2150 = vadd.f32 0.0, %v2149
  %v2151 = vpop.f32.mrb[0].mxu0
  %2152 = vdwg.mxu0
  %2155 = vrot.lane.b32.xlu0 %v1906, 120
  %v2156 = vpop.permute.xlu0 %2155
  %2157 = vrot.lane.b32.xlu0 %v1911, 120
  %v2158 = vpop.permute.xlu0 %2157
  %v2159 = vsel %vm466, %v1906, 0
  %v2161 = vsel %vm466, %v1911, 0
  %v2163 = vsel %vm466, %v2156, 0
  %v2165 = vsel %vm466, %v2158, 0
  %2167 = vmatprep.subr.mxu0 0.0
  %2168 = vmatpush1.xpose.msra.mxu0 %v2163
  %2169 = vmatprep.subr.mxu0 0.0
  %2170 = vmatpush1.xpose.msra.mxu0 %v2165
  %2171 = vmatprep.subr.mxu0 0.0
  %2172 = vmatpush1.xpose.msra.mxu0 0.0
  %2173 = vmatprep.subr.mxu0 0.0
  %2174 = vmatpush1.xpose.msra.mxu0 0.0
  %2175 = vmatprep.subr.mxu0 0.0
  %2176 = vmatpush1.xpose.msra.mxu0 0.0
  %2177 = vmatprep.subr.mxu0 0.0
  %2178 = vmatpush1.xpose.msra.mxu0 0.0
  %2179 = vmatprep.subr.mxu0 0.0
  %2180 = vmatpush1.xpose.msra.mxu0 0.0
  %2181 = vmatprep.subr.mxu0 0.0
  %2182 = vmatpush1.xpose.msra.mxu0 0.0
  %2183 = vmatprep.subr.mxu0 0.0
  %2184 = vmatpush1.xpose.msra.mxu0 0.0
  %2185 = vmatprep.subr.mxu0 0.0
  %2186 = vmatpush1.xpose.msra.mxu0 0.0
  %2187 = vmatprep.subr.mxu0 0.0
  %2188 = vmatpush1.xpose.msra.mxu0 0.0
  %2189 = vmatprep.subr.mxu0 0.0
  %2190 = vmatpush1.xpose.msra.mxu0 0.0
  %2191 = vmatprep.subr.mxu0 0.0
  %2192 = vmatpush1.xpose.msra.mxu0 0.0
  %2193 = vmatprep.subr.mxu0 0.0
  %2194 = vmatpush1.xpose.msra.mxu0 0.0
  %2195 = vmatprep.subr.mxu0 0.0
  %2196 = vmatpush1.xpose.msra.mxu0 0.0
  %2197 = vmatprep.subr.mxu0 0.0
  %2198 = vmatpush1.xpose.msra.mxu0 0.0
  %2199 = vmatprep.subr.mxu0 0.0
  %2200 = vmatpush1.xpose.msra.mxu0 0.0
  %2201 = vmatprep.subr.mxu0 0.0
  %2202 = vmatpush1.xpose.msra.mxu0 0.0
  %2203 = vmatprep.subr.mxu0 0.0
  %2204 = vmatpush1.xpose.msra.mxu0 0.0
  %2205 = vmatprep.subr.mxu0 0.0
  %2206 = vmatpush1.xpose.msra.mxu0 0.0
  %2207 = vmatprep.subr.mxu0 0.0
  %2208 = vmatpush1.xpose.msra.mxu0 0.0
  %2209 = vmatprep.subr.mxu0 0.0
  %2210 = vmatpush1.xpose.msra.mxu0 0.0
  %2211 = vmatprep.subr.mxu0 0.0
  %2212 = vmatpush1.xpose.msra.mxu0 0.0
  %2213 = vmatprep.subr.mxu0 0.0
  %2214 = vmatpush1.xpose.msra.mxu0 0.0
  %2215 = vmatprep.subr.mxu0 0.0
  %2216 = vmatpush1.xpose.msra.mxu0 0.0
  %2217 = vmatprep.subr.mxu0 0.0
  %2218 = vmatpush1.xpose.msra.mxu0 0.0
  %2219 = vmatprep.subr.mxu0 0.0
  %2220 = vmatpush1.xpose.msra.mxu0 0.0
  %2221 = vmatprep.subr.mxu0 0.0
  %2222 = vmatpush1.xpose.msra.mxu0 0.0
  %2223 = vmatprep.subr.mxu0 0.0
  %2224 = vmatpush1.xpose.msra.mxu0 0.0
  %2225 = vmatprep.subr.mxu0 0.0
  %2226 = vmatpush1.xpose.msra.mxu0 0.0
  %2227 = vmatprep.subr.mxu0 0.0
  %2228 = vmatpush1.xpose.msra.mxu0 0.0
  %2229 = vmatprep.subr.mxu0 0.0
  %2230 = vmatpush1.xpose.msra.mxu0 0.0
  %2231 = vmatprep.mubr.f32.mxu0 0.0
  %2232 = vmatmul.mubr.f32.gmra.mrb[0].mxu0 %v2159
  %v2233 = vpop.f32.mrb[0].mxu0
  %v2234 = vadd.f32 0.0, %v2233
  %v2235 = vpop.f32.mrb[0].mxu0
  %2236 = vmatprep.mubr.f32.mxu0 0.0
  %2237 = vmatmul.mubr.f32.gmra.mrb[0].mxu0 %v2161
  %v2238 = vpop.f32.mrb[0].mxu0
  %v2239 = vadd.f32 0.0, %v2238
  %v2240 = vpop.f32.mrb[0].mxu0
  %2241 = vdwg.mxu0
  %2244 = vrot.lane.b32.xlu0 %v1981, 120
  %v2245 = vpop.permute.xlu0 %2244
  %2246 = vrot.lane.b32.xlu0 %v1986, 120
  %v2247 = vpop.permute.xlu0 %2246
  %v2248 = vsel %vm466, %v1981, 0
  %v2250 = vsel %vm466, %v1986, 0
  %v2252 = vsel %vm466, %v2245, 0
  %v2254 = vsel %vm466, %v2247, 0
  %2256 = vmatprep.subr.mxu0 0.0
  %2257 = vmatpush1.xpose.msra.mxu0 %v2252
  %2258 = vmatprep.subr.mxu0 0.0
  %2259 = vmatpush1.xpose.msra.mxu0 %v2254
  %2260 = vmatprep.subr.mxu0 0.0
  %2261 = vmatpush1.xpose.msra.mxu0 0.0
  %2262 = vmatprep.subr.mxu0 0.0
  %2263 = vmatpush1.xpose.msra.mxu0 0.0
  %2264 = vmatprep.subr.mxu0 0.0
  %2265 = vmatpush1.xpose.msra.mxu0 0.0
  %2266 = vmatprep.subr.mxu0 0.0
  %2267 = vmatpush1.xpose.msra.mxu0 0.0
  %2268 = vmatprep.subr.mxu0 0.0
  %2269 = vmatpush1.xpose.msra.mxu0 0.0
  %2270 = vmatprep.subr.mxu0 0.0
  %2271 = vmatpush1.xpose.msra.mxu0 0.0
  %2272 = vmatprep.subr.mxu0 0.0
  %2273 = vmatpush1.xpose.msra.mxu0 0.0
  %2274 = vmatprep.subr.mxu0 0.0
  %2275 = vmatpush1.xpose.msra.mxu0 0.0
  %2276 = vmatprep.subr.mxu0 0.0
  %2277 = vmatpush1.xpose.msra.mxu0 0.0
  %2278 = vmatprep.subr.mxu0 0.0
  %2279 = vmatpush1.xpose.msra.mxu0 0.0
  %2280 = vmatprep.subr.mxu0 0.0
  %2281 = vmatpush1.xpose.msra.mxu0 0.0
  %2282 = vmatprep.subr.mxu0 0.0
  %2283 = vmatpush1.xpose.msra.mxu0 0.0
  %2284 = vmatprep.subr.mxu0 0.0
  %2285 = vmatpush1.xpose.msra.mxu0 0.0
  %2286 = vmatprep.subr.mxu0 0.0
  %2287 = vmatpush1.xpose.msra.mxu0 0.0
  %2288 = vmatprep.subr.mxu0 0.0
  %2289 = vmatpush1.xpose.msra.mxu0 0.0
  %2290 = vmatprep.subr.mxu0 0.0
  %2291 = vmatpush1.xpose.msra.mxu0 0.0
  %2292 = vmatprep.subr.mxu0 0.0
  %2293 = vmatpush1.xpose.msra.mxu0 0.0
  %2294 = vmatprep.subr.mxu0 0.0
  %2295 = vmatpush1.xpose.msra.mxu0 0.0
  %2296 = vmatprep.subr.mxu0 0.0
  %2297 = vmatpush1.xpose.msra.mxu0 0.0
  %2298 = vmatprep.subr.mxu0 0.0
  %2299 = vmatpush1.xpose.msra.mxu0 0.0
  %2300 = vmatprep.subr.mxu0 0.0
  %2301 = vmatpush1.xpose.msra.mxu0 0.0
  %2302 = vmatprep.subr.mxu0 0.0
  %2303 = vmatpush1.xpose.msra.mxu0 0.0
  %2304 = vmatprep.subr.mxu0 0.0
  %2305 = vmatpush1.xpose.msra.mxu0 0.0
  %2306 = vmatprep.subr.mxu0 0.0
  %2307 = vmatpush1.xpose.msra.mxu0 0.0
  %2308 = vmatprep.subr.mxu0 0.0
  %2309 = vmatpush1.xpose.msra.mxu0 0.0
  %2310 = vmatprep.subr.mxu0 0.0
  %2311 = vmatpush1.xpose.msra.mxu0 0.0
  %2312 = vmatprep.subr.mxu0 0.0
  %2313 = vmatpush1.xpose.msra.mxu0 0.0
  %2314 = vmatprep.subr.mxu0 0.0
  %2315 = vmatpush1.xpose.msra.mxu0 0.0
  %2316 = vmatprep.subr.mxu0 0.0
  %2317 = vmatpush1.xpose.msra.mxu0 0.0
  %2318 = vmatprep.subr.mxu0 0.0
  %2319 = vmatpush1.xpose.msra.mxu0 0.0
  %2320 = vmatprep.mubr.f32.mxu0 0.0
  %2321 = vmatmul.mubr.f32.gmra.mrb[0].mxu0 %v2248
  %v2322 = vpop.f32.mrb[0].mxu0
  %v2323 = vadd.f32 0.0, %v2322
  %v2324 = vpop.f32.mrb[0].mxu0
  %2325 = vmatprep.mubr.f32.mxu0 0.0
  %2326 = vmatmul.mubr.f32.gmra.mrb[0].mxu0 %v2250
  %v2327 = vpop.f32.mrb[0].mxu0
  %v2328 = vadd.f32 0.0, %v2327
  %v2329 = vpop.f32.mrb[0].mxu0
  %2330 = vdwg.mxu0
  %2333 = vrot.lane.b32.xlu0 %v2056, 120
  %v2334 = vpop.permute.xlu0 %2333
  %2335 = vrot.lane.b32.xlu0 %v2061, 120
  %v2336 = vpop.permute.xlu0 %2335
  %v2337 = vsel %vm466, %v2056, 0
  %v2339 = vsel %vm466, %v2061, 0
  %v2341 = vsel %vm466, %v2334, 0
  %v2343 = vsel %vm466, %v2336, 0
  %2345 = vmatprep.subr.mxu0 0.0
  %2346 = vmatpush1.xpose.msra.mxu0 %v2341
  %2347 = vmatprep.subr.mxu0 0.0
  %2348 = vmatpush1.xpose.msra.mxu0 %v2343
  %2349 = vmatprep.subr.mxu0 0.0
  %2350 = vmatpush1.xpose.msra.mxu0 0.0
  %2351 = vmatprep.subr.mxu0 0.0
  %2352 = vmatpush1.xpose.msra.mxu0 0.0
  %2353 = vmatprep.subr.mxu0 0.0
  %2354 = vmatpush1.xpose.msra.mxu0 0.0
  %2355 = vmatprep.subr.mxu0 0.0
  %2356 = vmatpush1.xpose.msra.mxu0 0.0
  %2357 = vmatprep.subr.mxu0 0.0
  %2358 = vmatpush1.xpose.msra.mxu0 0.0
  %2359 = vmatprep.subr.mxu0 0.0
  %2360 = vmatpush1.xpose.msra.mxu0 0.0
  %2361 = vmatprep.subr.mxu0 0.0
  %2362 = vmatpush1.xpose.msra.mxu0 0.0
  %2363 = vmatprep.subr.mxu0 0.0
  %2364 = vmatpush1.xpose.msra.mxu0 0.0
  %2365 = vmatprep.subr.mxu0 0.0
  %2366 = vmatpush1.xpose.msra.mxu0 0.0
  %2367 = vmatprep.subr.mxu0 0.0
  %2368 = vmatpush1.xpose.msra.mxu0 0.0
  %2369 = vmatprep.subr.mxu0 0.0
  %2370 = vmatpush1.xpose.msra.mxu0 0.0
  %2371 = vmatprep.subr.mxu0 0.0
  %2372 = vmatpush1.xpose.msra.mxu0 0.0
  %2373 = vmatprep.subr.mxu0 0.0
  %2374 = vmatpush1.xpose.msra.mxu0 0.0
  %2375 = vmatprep.subr.mxu0 0.0
  %2376 = vmatpush1.xpose.msra.mxu0 0.0
  %2377 = vmatprep.subr.mxu0 0.0
  %2378 = vmatpush1.xpose.msra.mxu0 0.0
  %2379 = vmatprep.subr.mxu0 0.0
  %2380 = vmatpush1.xpose.msra.mxu0 0.0
  %2381 = vmatprep.subr.mxu0 0.0
  %2382 = vmatpush1.xpose.msra.mxu0 0.0
  %2383 = vmatprep.subr.mxu0 0.0
  %2384 = vmatpush1.xpose.msra.mxu0 0.0
  %2385 = vmatprep.subr.mxu0 0.0
  %2386 = vmatpush1.xpose.msra.mxu0 0.0
  %2387 = vmatprep.subr.mxu0 0.0
  %2388 = vmatpush1.xpose.msra.mxu0 0.0
  %2389 = vmatprep.subr.mxu0 0.0
  %2390 = vmatpush1.xpose.msra.mxu0 0.0
  %2391 = vmatprep.subr.mxu0 0.0
  %2392 = vmatpush1.xpose.msra.mxu0 0.0
  %2393 = vmatprep.subr.mxu0 0.0
  %2394 = vmatpush1.xpose.msra.mxu0 0.0
  %2395 = vmatprep.subr.mxu0 0.0
  %2396 = vmatpush1.xpose.msra.mxu0 0.0
  %2397 = vmatprep.subr.mxu0 0.0
  %2398 = vmatpush1.xpose.msra.mxu0 0.0
  %2399 = vmatprep.subr.mxu0 0.0
  %2400 = vmatpush1.xpose.msra.mxu0 0.0
  %2401 = vmatprep.subr.mxu0 0.0
  %2402 = vmatpush1.xpose.msra.mxu0 0.0
  %2403 = vmatprep.subr.mxu0 0.0
  %2404 = vmatpush1.xpose.msra.mxu0 0.0
  %2405 = vmatprep.subr.mxu0 0.0
  %2406 = vmatpush1.xpose.msra.mxu0 0.0
  %2407 = vmatprep.subr.mxu0 0.0
  %2408 = vmatpush1.xpose.msra.mxu0 0.0
  %2409 = vmatprep.mubr.f32.mxu0 0.0
  %2410 = vmatmul.mubr.f32.gmra.mrb[0].mxu0 %v2337
  %v2411 = vpop.f32.mrb[0].mxu0
  %v2412 = vadd.f32 0.0, %v2411
  %v2413 = vpop.f32.mrb[0].mxu0
  %2414 = vmatprep.mubr.f32.mxu0 0.0
  %2415 = vmatmul.mubr.f32.gmra.mrb[0].mxu0 %v2339
  %v2416 = vpop.f32.mrb[0].mxu0
  %v2417 = vadd.f32 0.0, %v2416
  %v2418 = vpop.f32.mrb[0].mxu0
  %2419 = vdwg.mxu0
  %v2420 = vmul.f32 %v2145, 0.35355338
  %v2421 = vmul.f32 %v2150, 0.35355338
  %v2422 = vmul.f32 %v2234, 0.35355338
  %v2423 = vmul.f32 %v2239, 0.35355338
  %v2424 = vmul.f32 %v2323, 0.35355338
  %v2425 = vmul.f32 %v2328, 0.35355338
  %v2426 = vmul.f32 %v2412, 0.35355338
  %v2427 = vmul.f32 %v2417, 0.35355338
  %v2428 = vadd.f32 %v2420, %v132
  %v2429 = vadd.f32 %v2421, %v133
  %v2430 = vadd.f32 %v2422, %v132
  %v2431 = vadd.f32 %v2423, %v133
  %v2432 = vadd.f32 %v2424, %v132
  %v2433 = vadd.f32 %v2425, %v133
  %v2434 = vadd.f32 %v2426, %v132
  %v2435 = vadd.f32 %v2427, %v133
  %v2436 = vsel %vm833, %v2428, -inf
  %2437 = vmax.xlane.f32.xlu0 %v2436
  %v2438 = vpop.xlane.xlu0 %2437
  %v2439 = vsel %vm833, %v2429, -inf
  %2440 = vmax.xlane.f32.xlu0 %v2439
  %v2441 = vpop.xlane.xlu0 %2440
  %v2442 = vsel %vm833, %v2430, -inf
  %2443 = vmax.xlane.f32.xlu0 %v2442
  %v2444 = vpop.xlane.xlu0 %2443
  %v2445 = vsel %vm833, %v2431, -inf
  %2446 = vmax.xlane.f32.xlu0 %v2445
  %v2447 = vpop.xlane.xlu0 %2446
  %v2448 = vsel %vm833, %v2432, -inf
  %2449 = vmax.xlane.f32.xlu0 %v2448
  %v2450 = vpop.xlane.xlu0 %2449
  %v2451 = vsel %vm833, %v2433, -inf
  %2452 = vmax.xlane.f32.xlu0 %v2451
  %v2453 = vpop.xlane.xlu0 %2452
  %v2454 = vsel %vm833, %v2434, -inf
  %2455 = vmax.xlane.f32.xlu0 %v2454
  %v2456 = vpop.xlane.xlu0 %2455
  %v2457 = vsel %vm833, %v2435, -inf
  %2458 = vmax.xlane.f32.xlu0 %v2457
  %v2459 = vpop.xlane.xlu0 %2458
  %v2460 = vsub.f32 %v2428, %v2438
  %v2461 = vsub.f32 %v2429, %v2441
  %v2462 = vsub.f32 %v2430, %v2444
  %v2463 = vsub.f32 %v2431, %v2447
  %v2464 = vsub.f32 %v2432, %v2450
  %v2465 = vsub.f32 %v2433, %v2453
  %v2466 = vsub.f32 %v2434, %v2456
  %v2467 = vsub.f32 %v2435, %v2459
  %v2468 = vmul.f32 %v2460, 1.442695
  %v2469 = vpow.pop %v2468
  %v2470 = vmul.f32 %v2461, 1.442695
  %v2471 = vpow.pop %v2470
  %v2472 = vmul.f32 %v2462, 1.442695
  %v2473 = vpow.pop %v2472
  %v2474 = vmul.f32 %v2463, 1.442695
  %v2475 = vpow.pop %v2474
  %v2476 = vmul.f32 %v2464, 1.442695
  %v2477 = vpow.pop %v2476
  %v2478 = vmul.f32 %v2465, 1.442695
  %v2479 = vpow.pop %v2478
  %v2480 = vmul.f32 %v2466, 1.442695
  %v2481 = vpow.pop %v2480
  %v2482 = vmul.f32 %v2467, 1.442695
  %v2483 = vpow.pop %v2482
  %v2484 = vsel %vm833, %v2469, 0.0
  %2485 = vadd.xlane.f32.xlu0 %v2484
  %v2486 = vpop.xlane.xlu0 %2485
  %v2487 = vsel %vm833, %v2471, 0.0
  %2488 = vadd.xlane.f32.xlu0 %v2487
  %v2489 = vpop.xlane.xlu0 %2488
  %v2490 = vsel %vm833, %v2473, 0.0
  %2491 = vadd.xlane.f32.xlu0 %v2490
  %v2492 = vpop.xlane.xlu0 %2491
  %v2493 = vsel %vm833, %v2475, 0.0
  %2494 = vadd.xlane.f32.xlu0 %v2493
  %v2495 = vpop.xlane.xlu0 %2494
  %v2496 = vsel %vm833, %v2477, 0.0
  %2497 = vadd.xlane.f32.xlu0 %v2496
  %v2498 = vpop.xlane.xlu0 %2497
  %v2499 = vsel %vm833, %v2479, 0.0
  %2500 = vadd.xlane.f32.xlu0 %v2499
  %v2501 = vpop.xlane.xlu0 %2500
  %v2502 = vsel %vm833, %v2481, 0.0
  %2503 = vadd.xlane.f32.xlu0 %v2502
  %v2504 = vpop.xlane.xlu0 %2503
  %v2505 = vsel %vm833, %v2483, 0.0
  %2506 = vadd.xlane.f32.xlu0 %v2505
  %v2507 = vpop.xlane.xlu0 %2506
  %v2508 = vrcp.pop %v2486
  %v2509 = vrcp.pop %v2489
  %v2510 = vrcp.pop %v2492
  %v2511 = vrcp.pop %v2495
  %v2512 = vrcp.pop %v2498
  %v2513 = vrcp.pop %v2501
  %v2514 = vrcp.pop %v2504
  %v2515 = vrcp.pop %v2507
  %v2516 = vmul.f32 %v2469, %v2508
  %v2517 = vmul.f32 %v2471, %v2509
  %v2518 = vmul.f32 %v2473, %v2510
  %v2519 = vmul.f32 %v2475, %v2511
  %v2520 = vmul.f32 %v2477, %v2512
  %v2521 = vmul.f32 %v2479, %v2513
  %v2522 = vmul.f32 %v2481, %v2514
  %v2523 = vmul.f32 %v2483, %v2515
  %2524 = vrot.lane.b32.xlu0 %v1831, 112
  %v2525 = vpop.permute.xlu0 %2524
  %2526 = vrot.lane.b32.xlu0 %v1836, 112
  %v2527 = vpop.permute.xlu0 %2526
  %v2531 = vsel %vm833, %v2516, 0
  %v2534 = vsel %vm833, %v2517, 0
  %2536 = vmatprep.subr.mxu0 0.0
  %2537 = vmatpush1.msra.mxu0 %v2525
  %2538 = vmatprep.subr.mxu0 0.0
  %2539 = vmatpush1.msra.mxu0 %v2527
  %2540 = vmatprep.subr.mxu0 0.0
  %2541 = vmatpush1.msra.mxu0 0.0
  %2542 = vmatprep.subr.mxu0 0.0
  %2543 = vmatpush1.msra.mxu0 0.0
  %2544 = vmatprep.subr.mxu0 0.0
  %2545 = vmatpush1.msra.mxu0 0.0
  %2546 = vmatprep.subr.mxu0 0.0
  %2547 = vmatpush1.msra.mxu0 0.0
  %2548 = vmatprep.subr.mxu0 0.0
  %2549 = vmatpush1.msra.mxu0 0.0
  %2550 = vmatprep.subr.mxu0 0.0
  %2551 = vmatpush1.msra.mxu0 0.0
  %2552 = vmatprep.subr.mxu0 0.0
  %2553 = vmatpush1.msra.mxu0 0.0
  %2554 = vmatprep.subr.mxu0 0.0
  %2555 = vmatpush1.msra.mxu0 0.0
  %2556 = vmatprep.subr.mxu0 0.0
  %2557 = vmatpush1.msra.mxu0 0.0
  %2558 = vmatprep.subr.mxu0 0.0
  %2559 = vmatpush1.msra.mxu0 0.0
  %2560 = vmatprep.subr.mxu0 0.0
  %2561 = vmatpush1.msra.mxu0 0.0
  %2562 = vmatprep.subr.mxu0 0.0
  %2563 = vmatpush1.msra.mxu0 0.0
  %2564 = vmatprep.subr.mxu0 0.0
  %2565 = vmatpush1.msra.mxu0 0.0
  %2566 = vmatprep.subr.mxu0 0.0
  %2567 = vmatpush1.msra.mxu0 0.0
  %2568 = vmatprep.subr.mxu0 0.0
  %2569 = vmatpush1.msra.mxu0 0.0
  %2570 = vmatprep.subr.mxu0 0.0
  %2571 = vmatpush1.msra.mxu0 0.0
  %2572 = vmatprep.subr.mxu0 0.0
  %2573 = vmatpush1.msra.mxu0 0.0
  %2574 = vmatprep.subr.mxu0 0.0
  %2575 = vmatpush1.msra.mxu0 0.0
  %2576 = vmatprep.subr.mxu0 0.0
  %2577 = vmatpush1.msra.mxu0 0.0
  %2578 = vmatprep.subr.mxu0 0.0
  %2579 = vmatpush1.msra.mxu0 0.0
  %2580 = vmatprep.subr.mxu0 0.0
  %2581 = vmatpush1.msra.mxu0 0.0
  %2582 = vmatprep.subr.mxu0 0.0
  %2583 = vmatpush1.msra.mxu0 0.0
  %2584 = vmatprep.subr.mxu0 0.0
  %2585 = vmatpush1.msra.mxu0 0.0
  %2586 = vmatprep.subr.mxu0 0.0
  %2587 = vmatpush1.msra.mxu0 0.0
  %2588 = vmatprep.subr.mxu0 0.0
  %2589 = vmatpush1.msra.mxu0 0.0
  %2590 = vmatprep.subr.mxu0 0.0
  %2591 = vmatpush1.msra.mxu0 0.0
  %2592 = vmatprep.subr.mxu0 0.0
  %2593 = vmatpush1.msra.mxu0 0.0
  %2594 = vmatprep.subr.mxu0 0.0
  %2595 = vmatpush1.msra.mxu0 0.0
  %2596 = vmatprep.subr.mxu0 0.0
  %2597 = vmatpush1.msra.mxu0 0.0
  %2598 = vmatprep.subr.mxu0 0.0
  %2599 = vmatpush1.msra.mxu0 0.0
  %2600 = vmatprep.mubr.f32.mxu0 0.0
  %2601 = vmatmul.mubr.f32.gmra.mrb[0].mxu0 %v2531
  %v2602 = vpop.f32.mrb[0].mxu0
  %v2603 = vadd.f32 0.0, %v2602
  %v2604 = vpop.f32.mrb[0].mxu0
  %2605 = vmatprep.mubr.f32.mxu0 0.0
  %2606 = vmatmul.mubr.f32.gmra.mrb[0].mxu0 %v2534
  %v2607 = vpop.f32.mrb[0].mxu0
  %v2608 = vadd.f32 0.0, %v2607
  %v2609 = vpop.f32.mrb[0].mxu0
  %2610 = vdwg.mxu0
  %2611 = vrot.lane.b32.xlu0 %v1906, 112
  %v2612 = vpop.permute.xlu0 %2611
  %2613 = vrot.lane.b32.xlu0 %v1911, 112
  %v2614 = vpop.permute.xlu0 %2613
  %v2618 = vsel %vm833, %v2518, 0
  %v2621 = vsel %vm833, %v2519, 0
  %2623 = vmatprep.subr.mxu0 0.0
  %2624 = vmatpush1.msra.mxu0 %v2612
  %2625 = vmatprep.subr.mxu0 0.0
  %2626 = vmatpush1.msra.mxu0 %v2614
  %2627 = vmatprep.subr.mxu0 0.0
  %2628 = vmatpush1.msra.mxu0 0.0
  %2629 = vmatprep.subr.mxu0 0.0
  %2630 = vmatpush1.msra.mxu0 0.0
  %2631 = vmatprep.subr.mxu0 0.0
  %2632 = vmatpush1.msra.mxu0 0.0
  %2633 = vmatprep.subr.mxu0 0.0
  %2634 = vmatpush1.msra.mxu0 0.0
  %2635 = vmatprep.subr.mxu0 0.0
  %2636 = vmatpush1.msra.mxu0 0.0
  %2637 = vmatprep.subr.mxu0 0.0
  %2638 = vmatpush1.msra.mxu0 0.0
  %2639 = vmatprep.subr.mxu0 0.0
  %2640 = vmatpush1.msra.mxu0 0.0
  %2641 = vmatprep.subr.mxu0 0.0
  %2642 = vmatpush1.msra.mxu0 0.0
  %2643 = vmatprep.subr.mxu0 0.0
  %2644 = vmatpush1.msra.mxu0 0.0
  %2645 = vmatprep.subr.mxu0 0.0
  %2646 = vmatpush1.msra.mxu0 0.0
  %2647 = vmatprep.subr.mxu0 0.0
  %2648 = vmatpush1.msra.mxu0 0.0
  %2649 = vmatprep.subr.mxu0 0.0
  %2650 = vmatpush1.msra.mxu0 0.0
  %2651 = vmatprep.subr.mxu0 0.0
  %2652 = vmatpush1.msra.mxu0 0.0
  %2653 = vmatprep.subr.mxu0 0.0
  %2654 = vmatpush1.msra.mxu0 0.0
  %2655 = vmatprep.subr.mxu0 0.0
  %2656 = vmatpush1.msra.mxu0 0.0
  %2657 = vmatprep.subr.mxu0 0.0
  %2658 = vmatpush1.msra.mxu0 0.0
  %2659 = vmatprep.subr.mxu0 0.0
  %2660 = vmatpush1.msra.mxu0 0.0
  %2661 = vmatprep.subr.mxu0 0.0
  %2662 = vmatpush1.msra.mxu0 0.0
  %2663 = vmatprep.subr.mxu0 0.0
  %2664 = vmatpush1.msra.mxu0 0.0
  %2665 = vmatprep.subr.mxu0 0.0
  %2666 = vmatpush1.msra.mxu0 0.0
  %2667 = vmatprep.subr.mxu0 0.0
  %2668 = vmatpush1.msra.mxu0 0.0
  %2669 = vmatprep.subr.mxu0 0.0
  %2670 = vmatpush1.msra.mxu0 0.0
  %2671 = vmatprep.subr.mxu0 0.0
  %2672 = vmatpush1.msra.mxu0 0.0
  %2673 = vmatprep.subr.mxu0 0.0
  %2674 = vmatpush1.msra.mxu0 0.0
  %2675 = vmatprep.subr.mxu0 0.0
  %2676 = vmatpush1.msra.mxu0 0.0
  %2677 = vmatprep.subr.mxu0 0.0
  %2678 = vmatpush1.msra.mxu0 0.0
  %2679 = vmatprep.subr.mxu0 0.0
  %2680 = vmatpush1.msra.mxu0 0.0
  %2681 = vmatprep.subr.mxu0 0.0
  %2682 = vmatpush1.msra.mxu0 0.0
  %2683 = vmatprep.subr.mxu0 0.0
  %2684 = vmatpush1.msra.mxu0 0.0
  %2685 = vmatprep.subr.mxu0 0.0
  %2686 = vmatpush1.msra.mxu0 0.0
  %2687 = vmatprep.mubr.f32.mxu0 0.0
  %2688 = vmatmul.mubr.f32.gmra.mrb[0].mxu0 %v2618
  %v2689 = vpop.f32.mrb[0].mxu0
  %v2690 = vadd.f32 0.0, %v2689
  %v2691 = vpop.f32.mrb[0].mxu0
  %2692 = vmatprep.mubr.f32.mxu0 0.0
  %2693 = vmatmul.mubr.f32.gmra.mrb[0].mxu0 %v2621
  %v2694 = vpop.f32.mrb[0].mxu0
  %v2695 = vadd.f32 0.0, %v2694
  %v2696 = vpop.f32.mrb[0].mxu0
  %2697 = vdwg.mxu0
  %2698 = vrot.lane.b32.xlu0 %v1981, 112
  %v2699 = vpop.permute.xlu0 %2698
  %2700 = vrot.lane.b32.xlu0 %v1986, 112
  %v2701 = vpop.permute.xlu0 %2700
  %v2705 = vsel %vm833, %v2520, 0
  %v2708 = vsel %vm833, %v2521, 0
  %2710 = vmatprep.subr.mxu0 0.0
  %2711 = vmatpush1.msra.mxu0 %v2699
  %2712 = vmatprep.subr.mxu0 0.0
  %2713 = vmatpush1.msra.mxu0 %v2701
  %2714 = vmatprep.subr.mxu0 0.0
  %2715 = vmatpush1.msra.mxu0 0.0
  %2716 = vmatprep.subr.mxu0 0.0
  %2717 = vmatpush1.msra.mxu0 0.0
  %2718 = vmatprep.subr.mxu0 0.0
  %2719 = vmatpush1.msra.mxu0 0.0
  %2720 = vmatprep.subr.mxu0 0.0
  %2721 = vmatpush1.msra.mxu0 0.0
  %2722 = vmatprep.subr.mxu0 0.0
  %2723 = vmatpush1.msra.mxu0 0.0
  %2724 = vmatprep.subr.mxu0 0.0
  %2725 = vmatpush1.msra.mxu0 0.0
  %2726 = vmatprep.subr.mxu0 0.0
  %2727 = vmatpush1.msra.mxu0 0.0
  %2728 = vmatprep.subr.mxu0 0.0
  %2729 = vmatpush1.msra.mxu0 0.0
  %2730 = vmatprep.subr.mxu0 0.0
  %2731 = vmatpush1.msra.mxu0 0.0
  %2732 = vmatprep.subr.mxu0 0.0
  %2733 = vmatpush1.msra.mxu0 0.0
  %2734 = vmatprep.subr.mxu0 0.0
  %2735 = vmatpush1.msra.mxu0 0.0
  %2736 = vmatprep.subr.mxu0 0.0
  %2737 = vmatpush1.msra.mxu0 0.0
  %2738 = vmatprep.subr.mxu0 0.0
  %2739 = vmatpush1.msra.mxu0 0.0
  %2740 = vmatprep.subr.mxu0 0.0
  %2741 = vmatpush1.msra.mxu0 0.0
  %2742 = vmatprep.subr.mxu0 0.0
  %2743 = vmatpush1.msra.mxu0 0.0
  %2744 = vmatprep.subr.mxu0 0.0
  %2745 = vmatpush1.msra.mxu0 0.0
  %2746 = vmatprep.subr.mxu0 0.0
  %2747 = vmatpush1.msra.mxu0 0.0
  %2748 = vmatprep.subr.mxu0 0.0
  %2749 = vmatpush1.msra.mxu0 0.0
  %2750 = vmatprep.subr.mxu0 0.0
  %2751 = vmatpush1.msra.mxu0 0.0
  %2752 = vmatprep.subr.mxu0 0.0
  %2753 = vmatpush1.msra.mxu0 0.0
  %2754 = vmatprep.subr.mxu0 0.0
  %2755 = vmatpush1.msra.mxu0 0.0
  %2756 = vmatprep.subr.mxu0 0.0
  %2757 = vmatpush1.msra.mxu0 0.0
  %2758 = vmatprep.subr.mxu0 0.0
  %2759 = vmatpush1.msra.mxu0 0.0
  %2760 = vmatprep.subr.mxu0 0.0
  %2761 = vmatpush1.msra.mxu0 0.0
  %2762 = vmatprep.subr.mxu0 0.0
  %2763 = vmatpush1.msra.mxu0 0.0
  %2764 = vmatprep.subr.mxu0 0.0
  %2765 = vmatpush1.msra.mxu0 0.0
  %2766 = vmatprep.subr.mxu0 0.0
  %2767 = vmatpush1.msra.mxu0 0.0
  %2768 = vmatprep.subr.mxu0 0.0
  %2769 = vmatpush1.msra.mxu0 0.0
  %2770 = vmatprep.subr.mxu0 0.0
  %2771 = vmatpush1.msra.mxu0 0.0
  %2772 = vmatprep.subr.mxu0 0.0
  %2773 = vmatpush1.msra.mxu0 0.0
  %2774 = vmatprep.mubr.f32.mxu0 0.0
  %2775 = vmatmul.mubr.f32.gmra.mrb[0].mxu0 %v2705
  %v2776 = vpop.f32.mrb[0].mxu0
  %v2777 = vadd.f32 0.0, %v2776
  %v2778 = vpop.f32.mrb[0].mxu0
  %2779 = vmatprep.mubr.f32.mxu0 0.0
  %2780 = vmatmul.mubr.f32.gmra.mrb[0].mxu0 %v2708
  %v2781 = vpop.f32.mrb[0].mxu0
  %v2782 = vadd.f32 0.0, %v2781
  %v2783 = vpop.f32.mrb[0].mxu0
  %2784 = vdwg.mxu0
  %2785 = vrot.lane.b32.xlu0 %v2056, 112
  %v2786 = vpop.permute.xlu0 %2785
  %2787 = vrot.lane.b32.xlu0 %v2061, 112
  %v2788 = vpop.permute.xlu0 %2787
  %v2792 = vsel %vm833, %v2522, 0
  %v2795 = vsel %vm833, %v2523, 0
  %2797 = vmatprep.subr.mxu0 0.0
  %2798 = vmatpush1.msra.mxu0 %v2786
  %2799 = vmatprep.subr.mxu0 0.0
  %2800 = vmatpush1.msra.mxu0 %v2788
  %2801 = vmatprep.subr.mxu0 0.0
  %2802 = vmatpush1.msra.mxu0 0.0
  %2803 = vmatprep.subr.mxu0 0.0
  %2804 = vmatpush1.msra.mxu0 0.0
  %2805 = vmatprep.subr.mxu0 0.0
  %2806 = vmatpush1.msra.mxu0 0.0
  %2807 = vmatprep.subr.mxu0 0.0
  %2808 = vmatpush1.msra.mxu0 0.0
  %2809 = vmatprep.subr.mxu0 0.0
  %2810 = vmatpush1.msra.mxu0 0.0
  %2811 = vmatprep.subr.mxu0 0.0
  %2812 = vmatpush1.msra.mxu0 0.0
  %2813 = vmatprep.subr.mxu0 0.0
  %2814 = vmatpush1.msra.mxu0 0.0
  %2815 = vmatprep.subr.mxu0 0.0
  %2816 = vmatpush1.msra.mxu0 0.0
  %2817 = vmatprep.subr.mxu0 0.0
  %2818 = vmatpush1.msra.mxu0 0.0
  %2819 = vmatprep.subr.mxu0 0.0
  %2820 = vmatpush1.msra.mxu0 0.0
  %2821 = vmatprep.subr.mxu0 0.0
  %2822 = vmatpush1.msra.mxu0 0.0
  %2823 = vmatprep.subr.mxu0 0.0
  %2824 = vmatpush1.msra.mxu0 0.0
  %2825 = vmatprep.subr.mxu0 0.0
  %2826 = vmatpush1.msra.mxu0 0.0
  %2827 = vmatprep.subr.mxu0 0.0
  %2828 = vmatpush1.msra.mxu0 0.0
  %2829 = vmatprep.subr.mxu0 0.0
  %2830 = vmatpush1.msra.mxu0 0.0
  %2831 = vmatprep.subr.mxu0 0.0
  %2832 = vmatpush1.msra.mxu0 0.0
  %2833 = vmatprep.subr.mxu0 0.0
  %2834 = vmatpush1.msra.mxu0 0.0
  %2835 = vmatprep.subr.mxu0 0.0
  %2836 = vmatpush1.msra.mxu0 0.0
  %2837 = vmatprep.subr.mxu0 0.0
  %2838 = vmatpush1.msra.mxu0 0.0
  %2839 = vmatprep.subr.mxu0 0.0
  %2840 = vmatpush1.msra.mxu0 0.0
  %2841 = vmatprep.subr.mxu0 0.0
  %2842 = vmatpush1.msra.mxu0 0.0
  %2843 = vmatprep.subr.mxu0 0.0
  %2844 = vmatpush1.msra.mxu0 0.0
  %2845 = vmatprep.subr.mxu0 0.0
  %2846 = vmatpush1.msra.mxu0 0.0
  %2847 = vmatprep.subr.mxu0 0.0
  %2848 = vmatpush1.msra.mxu0 0.0
  %2849 = vmatprep.subr.mxu0 0.0
  %2850 = vmatpush1.msra.mxu0 0.0
  %2851 = vmatprep.subr.mxu0 0.0
  %2852 = vmatpush1.msra.mxu0 0.0
  %2853 = vmatprep.subr.mxu0 0.0
  %2854 = vmatpush1.msra.mxu0 0.0
  %2855 = vmatprep.subr.mxu0 0.0
  %2856 = vmatpush1.msra.mxu0 0.0
  %2857 = vmatprep.subr.mxu0 0.0
  %2858 = vmatpush1.msra.mxu0 0.0
  %2859 = vmatprep.subr.mxu0 0.0
  %2860 = vmatpush1.msra.mxu0 0.0
  %2861 = vmatprep.mubr.f32.mxu0 0.0
  %2862 = vmatmul.mubr.f32.gmra.mrb[0].mxu0 %v2792
  %v2863 = vpop.f32.mrb[0].mxu0
  %v2864 = vadd.f32 0.0, %v2863
  %v2865 = vpop.f32.mrb[0].mxu0
  %2866 = vmatprep.mubr.f32.mxu0 0.0
  %2867 = vmatmul.mubr.f32.gmra.mrb[0].mxu0 %v2795
  %v2868 = vpop.f32.mrb[0].mxu0
  %v2869 = vadd.f32 0.0, %v2868
  %v2870 = vpop.f32.mrb[0].mxu0
  %2871 = vdwg.mxu0
  %s2872 = scalar_lea.vmem %s7, 32
  %v2873 = vld [vmem:[%s2872] sm:$0xff]
  %v2874 = vld [vmem:[%s2872 + $0x8] sm:$0xff]
  %v2875 = vld [vmem:[%s2872 + $0x10] sm:$0xff]
  %v2876 = vld [vmem:[%s2872 + $0x18] sm:$0xff]
  %v2878 = vsel %vm466, %v2603, 0
  %v2881 = vsel %vm466, %v2608, 0
  %2883 = vmatprep.subr.mxu0 0.0
  %2884 = vmatpush1.msra.mxu0 %v2873
  %2885 = vmatprep.subr.mxu0 0.0
  %2886 = vmatpush1.msra.mxu0 0.0
  %2887 = vmatprep.subr.mxu0 0.0
  %2888 = vmatpush1.msra.mxu0 0.0
  %2889 = vmatprep.subr.mxu0 0.0
  %2890 = vmatpush1.msra.mxu0 0.0
  %2891 = vmatprep.subr.mxu0 0.0
  %2892 = vmatpush1.msra.mxu0 0.0
  %2893 = vmatprep.subr.mxu0 0.0
  %2894 = vmatpush1.msra.mxu0 0.0
  %2895 = vmatprep.subr.mxu0 0.0
  %2896 = vmatpush1.msra.mxu0 0.0
  %2897 = vmatprep.subr.mxu0 0.0
  %2898 = vmatpush1.msra.mxu0 0.0
  %2899 = vmatprep.subr.mxu0 0.0
  %2900 = vmatpush1.msra.mxu0 0.0
  %2901 = vmatprep.subr.mxu0 0.0
  %2902 = vmatpush1.msra.mxu0 0.0
  %2903 = vmatprep.subr.mxu0 0.0
  %2904 = vmatpush1.msra.mxu0 0.0
  %2905 = vmatprep.subr.mxu0 0.0
  %2906 = vmatpush1.msra.mxu0 0.0
  %2907 = vmatprep.subr.mxu0 0.0
  %2908 = vmatpush1.msra.mxu0 0.0
  %2909 = vmatprep.subr.mxu0 0.0
  %2910 = vmatpush1.msra.mxu0 0.0
  %2911 = vmatprep.subr.mxu0 0.0
  %2912 = vmatpush1.msra.mxu0 0.0
  %2913 = vmatprep.subr.mxu0 0.0
  %2914 = vmatpush1.msra.mxu0 0.0
  %2915 = vmatprep.subr.mxu0 0.0
  %2916 = vmatpush1.msra.mxu0 0.0
  %2917 = vmatprep.subr.mxu0 0.0
  %2918 = vmatpush1.msra.mxu0 0.0
  %2919 = vmatprep.subr.mxu0 0.0
  %2920 = vmatpush1.msra.mxu0 0.0
  %2921 = vmatprep.subr.mxu0 0.0
  %2922 = vmatpush1.msra.mxu0 0.0
  %2923 = vmatprep.subr.mxu0 0.0
  %2924 = vmatpush1.msra.mxu0 0.0
  %2925 = vmatprep.subr.mxu0 0.0
  %2926 = vmatpush1.msra.mxu0 0.0
  %2927 = vmatprep.subr.mxu0 0.0
  %2928 = vmatpush1.msra.mxu0 0.0
  %2929 = vmatprep.subr.mxu0 0.0
  %2930 = vmatpush1.msra.mxu0 0.0
  %2931 = vmatprep.subr.mxu0 0.0
  %2932 = vmatpush1.msra.mxu0 0.0
  %2933 = vmatprep.subr.mxu0 0.0
  %2934 = vmatpush1.msra.mxu0 0.0
  %2935 = vmatprep.subr.mxu0 0.0
  %2936 = vmatpush1.msra.mxu0 0.0
  %2937 = vmatprep.subr.mxu0 0.0
  %2938 = vmatpush1.msra.mxu0 0.0
  %2939 = vmatprep.subr.mxu0 0.0
  %2940 = vmatpush1.msra.mxu0 0.0
  %2941 = vmatprep.subr.mxu0 0.0
  %2942 = vmatpush1.msra.mxu0 0.0
  %2943 = vmatprep.subr.mxu0 0.0
  %2944 = vmatpush1.msra.mxu0 0.0
  %2945 = vmatprep.subr.mxu0 0.0
  %2946 = vmatpush1.msra.mxu0 0.0
  %2947 = vmatprep.mubr.f32.mxu0 0.0
  %2948 = vmatmul.mubr.f32.gmra.mrb[0].mxu0 %v2878
  %v2949 = vpop.f32.mrb[0].mxu0
  %v2950 = vadd.f32 0.0, %v2949
  %v2951 = vpop.f32.mrb[0].mxu0
  %2952 = vmatprep.mubr.f32.mxu0 0.0
  %2953 = vmatmul.mubr.f32.gmra.mrb[0].mxu0 %v2881
  %v2954 = vpop.f32.mrb[0].mxu0
  %v2955 = vadd.f32 0.0, %v2954
  %v2956 = vpop.f32.mrb[0].mxu0
  %2957 = vdwg.mxu0
  %v2959 = vsel %vm466, %v2690, 0
  %v2962 = vsel %vm466, %v2695, 0
  %2964 = vmatprep.subr.mxu0 0.0
  %2965 = vmatpush1.msra.mxu0 %v2874
  %2966 = vmatprep.subr.mxu0 0.0
  %2967 = vmatpush1.msra.mxu0 0.0
  %2968 = vmatprep.subr.mxu0 0.0
  %2969 = vmatpush1.msra.mxu0 0.0
  %2970 = vmatprep.subr.mxu0 0.0
  %2971 = vmatpush1.msra.mxu0 0.0
  %2972 = vmatprep.subr.mxu0 0.0
  %2973 = vmatpush1.msra.mxu0 0.0
  %2974 = vmatprep.subr.mxu0 0.0
  %2975 = vmatpush1.msra.mxu0 0.0
  %2976 = vmatprep.subr.mxu0 0.0
  %2977 = vmatpush1.msra.mxu0 0.0
  %2978 = vmatprep.subr.mxu0 0.0
  %2979 = vmatpush1.msra.mxu0 0.0
  %2980 = vmatprep.subr.mxu0 0.0
  %2981 = vmatpush1.msra.mxu0 0.0
  %2982 = vmatprep.subr.mxu0 0.0
  %2983 = vmatpush1.msra.mxu0 0.0
  %2984 = vmatprep.subr.mxu0 0.0
  %2985 = vmatpush1.msra.mxu0 0.0
  %2986 = vmatprep.subr.mxu0 0.0
  %2987 = vmatpush1.msra.mxu0 0.0
  %2988 = vmatprep.subr.mxu0 0.0
  %2989 = vmatpush1.msra.mxu0 0.0
  %2990 = vmatprep.subr.mxu0 0.0
  %2991 = vmatpush1.msra.mxu0 0.0
  %2992 = vmatprep.subr.mxu0 0.0
  %2993 = vmatpush1.msra.mxu0 0.0
  %2994 = vmatprep.subr.mxu0 0.0
  %2995 = vmatpush1.msra.mxu0 0.0
  %2996 = vmatprep.subr.mxu0 0.0
  %2997 = vmatpush1.msra.mxu0 0.0
  %2998 = vmatprep.subr.mxu0 0.0
  %2999 = vmatpush1.msra.mxu0 0.0
  %3000 = vmatprep.subr.mxu0 0.0
  %3001 = vmatpush1.msra.mxu0 0.0
  %3002 = vmatprep.subr.mxu0 0.0
  %3003 = vmatpush1.msra.mxu0 0.0
  %3004 = vmatprep.subr.mxu0 0.0
  %3005 = vmatpush1.msra.mxu0 0.0
  %3006 = vmatprep.subr.mxu0 0.0
  %3007 = vmatpush1.msra.mxu0 0.0
  %3008 = vmatprep.subr.mxu0 0.0
  %3009 = vmatpush1.msra.mxu0 0.0
  %3010 = vmatprep.subr.mxu0 0.0
  %3011 = vmatpush1.msra.mxu0 0.0
  %3012 = vmatprep.subr.mxu0 0.0
  %3013 = vmatpush1.msra.mxu0 0.0
  %3014 = vmatprep.subr.mxu0 0.0
  %3015 = vmatpush1.msra.mxu0 0.0
  %3016 = vmatprep.subr.mxu0 0.0
  %3017 = vmatpush1.msra.mxu0 0.0
  %3018 = vmatprep.subr.mxu0 0.0
  %3019 = vmatpush1.msra.mxu0 0.0
  %3020 = vmatprep.subr.mxu0 0.0
  %3021 = vmatpush1.msra.mxu0 0.0
  %3022 = vmatprep.subr.mxu0 0.0
  %3023 = vmatpush1.msra.mxu0 0.0
  %3024 = vmatprep.subr.mxu0 0.0
  %3025 = vmatpush1.msra.mxu0 0.0
  %3026 = vmatprep.subr.mxu0 0.0
  %3027 = vmatpush1.msra.mxu0 0.0
  %3028 = vmatprep.mubr.f32.mxu0 0.0
  %3029 = vmatmul.mubr.f32.gmra.mrb[0].mxu0 %v2959
  %v3030 = vpop.f32.mrb[0].mxu0
  %v3031 = vadd.f32 0.0, %v3030
  %v3032 = vpop.f32.mrb[0].mxu0
  %3033 = vmatprep.mubr.f32.mxu0 0.0
  %3034 = vmatmul.mubr.f32.gmra.mrb[0].mxu0 %v2962
  %v3035 = vpop.f32.mrb[0].mxu0
  %v3036 = vadd.f32 0.0, %v3035
  %v3037 = vpop.f32.mrb[0].mxu0
  %3038 = vdwg.mxu0
  %v3040 = vsel %vm466, %v2777, 0
  %v3043 = vsel %vm466, %v2782, 0
  %3045 = vmatprep.subr.mxu0 0.0
  %3046 = vmatpush1.msra.mxu0 %v2875
  %3047 = vmatprep.subr.mxu0 0.0
  %3048 = vmatpush1.msra.mxu0 0.0
  %3049 = vmatprep.subr.mxu0 0.0
  %3050 = vmatpush1.msra.mxu0 0.0
  %3051 = vmatprep.subr.mxu0 0.0
  %3052 = vmatpush1.msra.mxu0 0.0
  %3053 = vmatprep.subr.mxu0 0.0
  %3054 = vmatpush1.msra.mxu0 0.0
  %3055 = vmatprep.subr.mxu0 0.0
  %3056 = vmatpush1.msra.mxu0 0.0
  %3057 = vmatprep.subr.mxu0 0.0
  %3058 = vmatpush1.msra.mxu0 0.0
  %3059 = vmatprep.subr.mxu0 0.0
  %3060 = vmatpush1.msra.mxu0 0.0
  %3061 = vmatprep.subr.mxu0 0.0
  %3062 = vmatpush1.msra.mxu0 0.0
  %3063 = vmatprep.subr.mxu0 0.0
  %3064 = vmatpush1.msra.mxu0 0.0
  %3065 = vmatprep.subr.mxu0 0.0
  %3066 = vmatpush1.msra.mxu0 0.0
  %3067 = vmatprep.subr.mxu0 0.0
  %3068 = vmatpush1.msra.mxu0 0.0
  %3069 = vmatprep.subr.mxu0 0.0
  %3070 = vmatpush1.msra.mxu0 0.0
  %3071 = vmatprep.subr.mxu0 0.0
  %3072 = vmatpush1.msra.mxu0 0.0
  %3073 = vmatprep.subr.mxu0 0.0
  %3074 = vmatpush1.msra.mxu0 0.0
  %3075 = vmatprep.subr.mxu0 0.0
  %3076 = vmatpush1.msra.mxu0 0.0
  %3077 = vmatprep.subr.mxu0 0.0
  %3078 = vmatpush1.msra.mxu0 0.0
  %3079 = vmatprep.subr.mxu0 0.0
  %3080 = vmatpush1.msra.mxu0 0.0
  %3081 = vmatprep.subr.mxu0 0.0
  %3082 = vmatpush1.msra.mxu0 0.0
  %3083 = vmatprep.subr.mxu0 0.0
  %3084 = vmatpush1.msra.mxu0 0.0
  %3085 = vmatprep.subr.mxu0 0.0
  %3086 = vmatpush1.msra.mxu0 0.0
  %3087 = vmatprep.subr.mxu0 0.0
  %3088 = vmatpush1.msra.mxu0 0.0
  %3089 = vmatprep.subr.mxu0 0.0
  %3090 = vmatpush1.msra.mxu0 0.0
  %3091 = vmatprep.subr.mxu0 0.0
  %3092 = vmatpush1.msra.mxu0 0.0
  %3093 = vmatprep.subr.mxu0 0.0
  %3094 = vmatpush1.msra.mxu0 0.0
  %3095 = vmatprep.subr.mxu0 0.0
  %3096 = vmatpush1.msra.mxu0 0.0
  %3097 = vmatprep.subr.mxu0 0.0
  %3098 = vmatpush1.msra.mxu0 0.0
  %3099 = vmatprep.subr.mxu0 0.0
  %3100 = vmatpush1.msra.mxu0 0.0
  %3101 = vmatprep.subr.mxu0 0.0
  %3102 = vmatpush1.msra.mxu0 0.0
  %3103 = vmatprep.subr.mxu0 0.0
  %3104 = vmatpush1.msra.mxu0 0.0
  %3105 = vmatprep.subr.mxu0 0.0
  %3106 = vmatpush1.msra.mxu0 0.0
  %3107 = vmatprep.subr.mxu0 0.0
  %3108 = vmatpush1.msra.mxu0 0.0
  %3109 = vmatprep.mubr.f32.mxu0 0.0
  %3110 = vmatmul.mubr.f32.gmra.mrb[0].mxu0 %v3040
  %v3111 = vpop.f32.mrb[0].mxu0
  %v3112 = vadd.f32 0.0, %v3111
  %v3113 = vpop.f32.mrb[0].mxu0
  %3114 = vmatprep.mubr.f32.mxu0 0.0
  %3115 = vmatmul.mubr.f32.gmra.mrb[0].mxu0 %v3043
  %v3116 = vpop.f32.mrb[0].mxu0
  %v3117 = vadd.f32 0.0, %v3116
  %v3118 = vpop.f32.mrb[0].mxu0
  %3119 = vdwg.mxu0
  %v3121 = vsel %vm466, %v2864, 0
  %v3124 = vsel %vm466, %v2869, 0
  %3126 = vmatprep.subr.mxu0 0.0
  %3127 = vmatpush1.msra.mxu0 %v2876
  %3128 = vmatprep.subr.mxu0 0.0
  %3129 = vmatpush1.msra.mxu0 0.0
  %3130 = vmatprep.subr.mxu0 0.0
  %3131 = vmatpush1.msra.mxu0 0.0
  %3132 = vmatprep.subr.mxu0 0.0
  %3133 = vmatpush1.msra.mxu0 0.0
  %3134 = vmatprep.subr.mxu0 0.0
  %3135 = vmatpush1.msra.mxu0 0.0
  %3136 = vmatprep.subr.mxu0 0.0
  %3137 = vmatpush1.msra.mxu0 0.0
  %3138 = vmatprep.subr.mxu0 0.0
  %3139 = vmatpush1.msra.mxu0 0.0
  %3140 = vmatprep.subr.mxu0 0.0
  %3141 = vmatpush1.msra.mxu0 0.0
  %3142 = vmatprep.subr.mxu0 0.0
  %3143 = vmatpush1.msra.mxu0 0.0
  %3144 = vmatprep.subr.mxu0 0.0
  %3145 = vmatpush1.msra.mxu0 0.0
  %3146 = vmatprep.subr.mxu0 0.0
  %3147 = vmatpush1.msra.mxu0 0.0
  %3148 = vmatprep.subr.mxu0 0.0
  %3149 = vmatpush1.msra.mxu0 0.0
  %3150 = vmatprep.subr.mxu0 0.0
  %3151 = vmatpush1.msra.mxu0 0.0
  %3152 = vmatprep.subr.mxu0 0.0
  %3153 = vmatpush1.msra.mxu0 0.0
  %3154 = vmatprep.subr.mxu0 0.0
  %3155 = vmatpush1.msra.mxu0 0.0
  %3156 = vmatprep.subr.mxu0 0.0
  %3157 = vmatpush1.msra.mxu0 0.0
  %3158 = vmatprep.subr.mxu0 0.0
  %3159 = vmatpush1.msra.mxu0 0.0
  %3160 = vmatprep.subr.mxu0 0.0
  %3161 = vmatpush1.msra.mxu0 0.0
  %3162 = vmatprep.subr.mxu0 0.0
  %3163 = vmatpush1.msra.mxu0 0.0
  %3164 = vmatprep.subr.mxu0 0.0
  %3165 = vmatpush1.msra.mxu0 0.0
  %3166 = vmatprep.subr.mxu0 0.0
  %3167 = vmatpush1.msra.mxu0 0.0
  %3168 = vmatprep.subr.mxu0 0.0
  %3169 = vmatpush1.msra.mxu0 0.0
  %3170 = vmatprep.subr.mxu0 0.0
  %3171 = vmatpush1.msra.mxu0 0.0
  %3172 = vmatprep.subr.mxu0 0.0
  %3173 = vmatpush1.msra.mxu0 0.0
  %3174 = vmatprep.subr.mxu0 0.0
  %3175 = vmatpush1.msra.mxu0 0.0
  %3176 = vmatprep.subr.mxu0 0.0
  %3177 = vmatpush1.msra.mxu0 0.0
  %3178 = vmatprep.subr.mxu0 0.0
  %3179 = vmatpush1.msra.mxu0 0.0
  %3180 = vmatprep.subr.mxu0 0.0
  %3181 = vmatpush1.msra.mxu0 0.0
  %3182 = vmatprep.subr.mxu0 0.0
  %3183 = vmatpush1.msra.mxu0 0.0
  %3184 = vmatprep.subr.mxu0 0.0
  %3185 = vmatpush1.msra.mxu0 0.0
  %3186 = vmatprep.subr.mxu0 0.0
  %3187 = vmatpush1.msra.mxu0 0.0
  %3188 = vmatprep.subr.mxu0 0.0
  %3189 = vmatpush1.msra.mxu0 0.0
  %3190 = vmatprep.mubr.f32.mxu0 0.0
  %3191 = vmatmul.mubr.f32.gmra.mrb[0].mxu0 %v3121
  %v3192 = vpop.f32.mrb[0].mxu0
  %v3193 = vadd.f32 0.0, %v3192
  %v3194 = vpop.f32.mrb[0].mxu0
  %3195 = vmatprep.mubr.f32.mxu0 0.0
  %3196 = vmatmul.mubr.f32.gmra.mrb[0].mxu0 %v3124
  %v3197 = vpop.f32.mrb[0].mxu0
  %v3198 = vadd.f32 0.0, %v3197
  %v3199 = vpop.f32.mrb[0].mxu0
  %3200 = vdwg.mxu0
  %v3201 = vsel %vm153, %v2950, 0.0
  %v3202 = vsel %vm153, %v3031, 0.0
  %v3203 = vadd.f32 %v3201, %v3202
  %v3204 = vsel %vm153, %v3112, 0.0
  %v3205 = vadd.f32 %v3203, %v3204
  %v3206 = vsel %vm153, %v3193, 0.0
  %v3207 = vadd.f32 %v3205, %v3206
  %v3208 = vsel %vm153, %v2955, 0.0
  %v3209 = vsel %vm153, %v3036, 0.0
  %v3210 = vadd.f32 %v3208, %v3209
  %v3211 = vsel %vm153, %v3117, 0.0
  %v3212 = vadd.f32 %v3210, %v3211
  %v3213 = vsel %vm153, %v3198, 0.0
  %v3214 = vadd.f32 %v3212, %v3213
  %s3215 = scalar_lea.vmem %s6, 32
  %v3216 = vld [vmem:[%s3215] sm:$0xff]
  %v3217 = vld [vmem:[%s3215 + $0x8] sm:$0xff]
  %v3218 = vld [vmem:[%s3215 + $0x10] sm:$0xff]
  %v3219 = vld [vmem:[%s3215 + $0x18] sm:$0xff]
  %3220 = vmatprep.subr.mxu0 0.0
  %3221 = vmatpush1.msra.mxu0 %v3216
  %3222 = vmatprep.subr.mxu0 0.0
  %3223 = vmatpush1.msra.mxu0 %v3217
  %3224 = vmatprep.subr.mxu0 0.0
  %3225 = vmatpush1.msra.mxu0 %v3218
  %3226 = vmatprep.subr.mxu0 0.0
  %3227 = vmatpush1.msra.mxu0 %v3219
  %3228 = vmatprep.subr.mxu0 0.0
  %3229 = vmatpush1.msra.mxu0 0.0
  %3230 = vmatprep.subr.mxu0 0.0
  %3231 = vmatpush1.msra.mxu0 0.0
  %3232 = vmatprep.subr.mxu0 0.0
  %3233 = vmatpush1.msra.mxu0 0.0
  %3234 = vmatprep.subr.mxu0 0.0
  %3235 = vmatpush1.msra.mxu0 0.0
  %3236 = vmatprep.subr.mxu0 0.0
  %3237 = vmatpush1.msra.mxu0 0.0
  %3238 = vmatprep.subr.mxu0 0.0
  %3239 = vmatpush1.msra.mxu0 0.0
  %3240 = vmatprep.subr.mxu0 0.0
  %3241 = vmatpush1.msra.mxu0 0.0
  %3242 = vmatprep.subr.mxu0 0.0
  %3243 = vmatpush1.msra.mxu0 0.0
  %3244 = vmatprep.subr.mxu0 0.0
  %3245 = vmatpush1.msra.mxu0 0.0
  %3246 = vmatprep.subr.mxu0 0.0
  %3247 = vmatpush1.msra.mxu0 0.0
  %3248 = vmatprep.subr.mxu0 0.0
  %3249 = vmatpush1.msra.mxu0 0.0
  %3250 = vmatprep.subr.mxu0 0.0
  %3251 = vmatpush1.msra.mxu0 0.0
  %3252 = vmatprep.subr.mxu0 0.0
  %3253 = vmatpush1.msra.mxu0 0.0
  %3254 = vmatprep.subr.mxu0 0.0
  %3255 = vmatpush1.msra.mxu0 0.0
  %3256 = vmatprep.subr.mxu0 0.0
  %3257 = vmatpush1.msra.mxu0 0.0
  %3258 = vmatprep.subr.mxu0 0.0
  %3259 = vmatpush1.msra.mxu0 0.0
  %3260 = vmatprep.subr.mxu0 0.0
  %3261 = vmatpush1.msra.mxu0 0.0
  %3262 = vmatprep.subr.mxu0 0.0
  %3263 = vmatpush1.msra.mxu0 0.0
  %3264 = vmatprep.subr.mxu0 0.0
  %3265 = vmatpush1.msra.mxu0 0.0
  %3266 = vmatprep.subr.mxu0 0.0
  %3267 = vmatpush1.msra.mxu0 0.0
  %3268 = vmatprep.subr.mxu0 0.0
  %3269 = vmatpush1.msra.mxu0 0.0
  %3270 = vmatprep.subr.mxu0 0.0
  %3271 = vmatpush1.msra.mxu0 0.0
  %3272 = vmatprep.subr.mxu0 0.0
  %3273 = vmatpush1.msra.mxu0 0.0
  %3274 = vmatprep.subr.mxu0 0.0
  %3275 = vmatpush1.msra.mxu0 0.0
  %3276 = vmatprep.subr.mxu0 0.0
  %3277 = vmatpush1.msra.mxu0 0.0
  %3278 = vmatprep.subr.mxu0 0.0
  %3279 = vmatpush1.msra.mxu0 0.0
  %3280 = vmatprep.subr.mxu0 0.0
  %3281 = vmatpush1.msra.mxu0 0.0
  %3282 = vmatprep.subr.mxu0 0.0
  %3283 = vmatpush1.msra.mxu0 0.0
  %3284 = vmatprep.mubr.f32.mxu0 0.0
  %3285 = vmatmul.mubr.f32.gmra.mrb[0].mxu0 %v1759
  %v3286 = vpop.f32.mrb[0].mxu0
  %v3287 = vadd.f32 %v3207, %v3286
  %v3288 = vpop.f32.mrb[0].mxu0
  %3289 = vmatprep.mubr.f32.mxu0 0.0
  %3290 = vmatmul.mubr.f32.gmra.mrb[0].mxu0 %v1762
  %v3291 = vpop.f32.mrb[0].mxu0
  %v3292 = vadd.f32 %v3214, %v3291
  %v3293 = vpop.f32.mrb[0].mxu0
  %3294 = vdwg.mxu0
  %v3295 = vlaneseq
  %v3296 = vshrl.u32 %v3295, 7
  %v3297 = vsub.s32 0, %v3296
  %v3298 = vrot.slane %v1738, %v3297
  %v3299 = vadd.f32 %v3287, %v3298
  %v3300 = vadd.f32 %v3292, %v3298
  %v3301 = vadd.f32 %v3299, %v1736
  %v3302 = vadd.f32 %v3300, %v1737
  %v3303 = vsel %vm153, %v3301, 0.0
  %3304 = vadd.xlane.f32.xlu0 %v3303
  %v3305 = vpop.xlane.xlu0 %3304
  %v3306 = vsel %vm153, %v3302, 0.0
  %3307 = vadd.xlane.f32.xlu0 %v3306
  %v3308 = vpop.xlane.xlu0 %3307
  %v3309 = vmul.f32 %v3305, %v1705
  %v3310 = vmul.f32 %v3308, %v1705
  %v3311 = vsub.f32 %v3301, %v3309
  %v3312 = vsub.f32 %v3302, %v3310
  %v3313 = vmul.f32 %v3311, %v3311
  %v3314 = vmul.f32 %v3312, %v3312
  %v3315 = vsel %vm153, %v3313, 0.0
  %3316 = vadd.xlane.f32.xlu0 %v3315
  %v3317 = vpop.xlane.xlu0 %3316
  %v3318 = vsel %vm153, %v3314, 0.0
  %3319 = vadd.xlane.f32.xlu0 %v3318
  %v3320 = vpop.xlane.xlu0 %3319
  %v3321 = vmul.f32 %v3317, %v1705
  %v3322 = vmul.f32 %v3320, %v1705
  %v3323 = vadd.f32 %v3321, 1e-05
  %v3324 = vadd.f32 %v3322, 1e-05
  %v3325 = vrsqrt.pop %v3323
  %v3326 = vrsqrt.pop %v3324
  %v3327 = vmul.f32 %v3311, %v3325
  %v3328 = vmul.f32 %v3312, %v3326
  %v3329 = vlaneseq
  %v3330 = vshrl.u32 %v3329, 7
  %v3331 = vsub.s32 0, %v3330
  %v3332 = vrot.slane %v1739, %v3331
  %v3333 = vmul.f32 %v3327, %v3332
  %v3334 = vmul.f32 %v3328, %v3332
  %v3335 = vlaneseq
  %v3336 = vshrl.u32 %v3335, 7
  %v3337 = vsub.s32 0, %v3336
  %v3338 = vrot.slane %v1740, %v3337
  %v3339 = vadd.f32 %v3333, %v3338
  %v3340 = vadd.f32 %v3334, %v3338
  %v3341 = vld [vmem:[%s3] sm:$0x3]
  %v3343 = vsel %vm833, %v3341, 0
  %3345 = vmatprep.subr.mxu0 0.0
  %3346 = vmatpush1.msra.mxu0 %v3339
  %3347 = vmatprep.subr.mxu0 0.0
  %3348 = vmatpush1.msra.mxu0 %v3340
  %3349 = vmatprep.subr.mxu0 0.0
  %3350 = vmatpush1.msra.mxu0 0.0
  %3351 = vmatprep.subr.mxu0 0.0
  %3352 = vmatpush1.msra.mxu0 0.0
  %3353 = vmatprep.subr.mxu0 0.0
  %3354 = vmatpush1.msra.mxu0 0.0
  %3355 = vmatprep.subr.mxu0 0.0
  %3356 = vmatpush1.msra.mxu0 0.0
  %3357 = vmatprep.subr.mxu0 0.0
  %3358 = vmatpush1.msra.mxu0 0.0
  %3359 = vmatprep.subr.mxu0 0.0
  %3360 = vmatpush1.msra.mxu0 0.0
  %3361 = vmatprep.subr.mxu0 0.0
  %3362 = vmatpush1.msra.mxu0 0.0
  %3363 = vmatprep.subr.mxu0 0.0
  %3364 = vmatpush1.msra.mxu0 0.0
  %3365 = vmatprep.subr.mxu0 0.0
  %3366 = vmatpush1.msra.mxu0 0.0
  %3367 = vmatprep.subr.mxu0 0.0
  %3368 = vmatpush1.msra.mxu0 0.0
  %3369 = vmatprep.subr.mxu0 0.0
  %3370 = vmatpush1.msra.mxu0 0.0
  %3371 = vmatprep.subr.mxu0 0.0
  %3372 = vmatpush1.msra.mxu0 0.0
  %3373 = vmatprep.subr.mxu0 0.0
  %3374 = vmatpush1.msra.mxu0 0.0
  %3375 = vmatprep.subr.mxu0 0.0
  %3376 = vmatpush1.msra.mxu0 0.0
  %3377 = vmatprep.subr.mxu0 0.0
  %3378 = vmatpush1.msra.mxu0 0.0
  %3379 = vmatprep.subr.mxu0 0.0
  %3380 = vmatpush1.msra.mxu0 0.0
  %3381 = vmatprep.subr.mxu0 0.0
  %3382 = vmatpush1.msra.mxu0 0.0
  %3383 = vmatprep.subr.mxu0 0.0
  %3384 = vmatpush1.msra.mxu0 0.0
  %3385 = vmatprep.subr.mxu0 0.0
  %3386 = vmatpush1.msra.mxu0 0.0
  %3387 = vmatprep.subr.mxu0 0.0
  %3388 = vmatpush1.msra.mxu0 0.0
  %3389 = vmatprep.subr.mxu0 0.0
  %3390 = vmatpush1.msra.mxu0 0.0
  %3391 = vmatprep.subr.mxu0 0.0
  %3392 = vmatpush1.msra.mxu0 0.0
  %3393 = vmatprep.subr.mxu0 0.0
  %3394 = vmatpush1.msra.mxu0 0.0
  %3395 = vmatprep.subr.mxu0 0.0
  %3396 = vmatpush1.msra.mxu0 0.0
  %3397 = vmatprep.subr.mxu0 0.0
  %3398 = vmatpush1.msra.mxu0 0.0
  %3399 = vmatprep.subr.mxu0 0.0
  %3400 = vmatpush1.msra.mxu0 0.0
  %3401 = vmatprep.subr.mxu0 0.0
  %3402 = vmatpush1.msra.mxu0 0.0
  %3403 = vmatprep.subr.mxu0 0.0
  %3404 = vmatpush1.msra.mxu0 0.0
  %3405 = vmatprep.subr.mxu0 0.0
  %3406 = vmatpush1.msra.mxu0 0.0
  %3407 = vmatprep.subr.mxu0 0.0
  %3408 = vmatpush1.msra.mxu0 0.0
  %3409 = vmatprep.mubr.f32.mxu0 0.0
  %3410 = vmatmul.mubr.f32.gmra.mrb[0].mxu0 %v3343
  %v3411 = vpop.f32.mrb[0].mxu0
  %v3412 = vadd.f32 0.0, %v3411
  %v3413 = vpop.f32.mrb[0].mxu0
  %3414 = vdwg.mxu0
  %v3415 = vld [vmem:[%s10 + $0x7] sm:$0x1]
  %v3416 = vld [vmem:[%s8] sm:$0xff]
  %v3417 = vld [vmem:[%s8 + $0x8] sm:$0xff]
  %v3418 = vld [vmem:[%s8 + $0x10] sm:$0xff]
  %v3419 = vld [vmem:[%s8 + $0x18] sm:$0xff]
  %v3420 = vlaneseq
  %v3421 = vshrl.u32 %v3420, 7
  %v3422 = vsub.s32 0, %v3421
  %v3423 = vrot.slane %v3415, %v3422
  %v3425 = vsel %vm153, %v3412, 0
  %3427 = vmatprep.subr.mxu0 0.0
  %3428 = vmatpush1.msra.mxu0 %v3416
  %3429 = vmatprep.subr.mxu0 0.0
  %3430 = vmatpush1.msra.mxu0 %v3417
  %3431 = vmatprep.subr.mxu0 0.0
  %3432 = vmatpush1.msra.mxu0 %v3418
  %3433 = vmatprep.subr.mxu0 0.0
  %3434 = vmatpush1.msra.mxu0 %v3419
  %3435 = vmatprep.subr.mxu0 0.0
  %3436 = vmatpush1.msra.mxu0 0.0
  %3437 = vmatprep.subr.mxu0 0.0
  %3438 = vmatpush1.msra.mxu0 0.0
  %3439 = vmatprep.subr.mxu0 0.0
  %3440 = vmatpush1.msra.mxu0 0.0
  %3441 = vmatprep.subr.mxu0 0.0
  %3442 = vmatpush1.msra.mxu0 0.0
  %3443 = vmatprep.subr.mxu0 0.0
  %3444 = vmatpush1.msra.mxu0 0.0
  %3445 = vmatprep.subr.mxu0 0.0
  %3446 = vmatpush1.msra.mxu0 0.0
  %3447 = vmatprep.subr.mxu0 0.0
  %3448 = vmatpush1.msra.mxu0 0.0
  %3449 = vmatprep.subr.mxu0 0.0
  %3450 = vmatpush1.msra.mxu0 0.0
  %3451 = vmatprep.subr.mxu0 0.0
  %3452 = vmatpush1.msra.mxu0 0.0
  %3453 = vmatprep.subr.mxu0 0.0
  %3454 = vmatpush1.msra.mxu0 0.0
  %3455 = vmatprep.subr.mxu0 0.0
  %3456 = vmatpush1.msra.mxu0 0.0
  %3457 = vmatprep.subr.mxu0 0.0
  %3458 = vmatpush1.msra.mxu0 0.0
  %3459 = vmatprep.subr.mxu0 0.0
  %3460 = vmatpush1.msra.mxu0 0.0
  %3461 = vmatprep.subr.mxu0 0.0
  %3462 = vmatpush1.msra.mxu0 0.0
  %3463 = vmatprep.subr.mxu0 0.0
  %3464 = vmatpush1.msra.mxu0 0.0
  %3465 = vmatprep.subr.mxu0 0.0
  %3466 = vmatpush1.msra.mxu0 0.0
  %3467 = vmatprep.subr.mxu0 0.0
  %3468 = vmatpush1.msra.mxu0 0.0
  %3469 = vmatprep.subr.mxu0 0.0
  %3470 = vmatpush1.msra.mxu0 0.0
  %3471 = vmatprep.subr.mxu0 0.0
  %3472 = vmatpush1.msra.mxu0 0.0
  %3473 = vmatprep.subr.mxu0 0.0
  %3474 = vmatpush1.msra.mxu0 0.0
  %3475 = vmatprep.subr.mxu0 0.0
  %3476 = vmatpush1.msra.mxu0 0.0
  %3477 = vmatprep.subr.mxu0 0.0
  %3478 = vmatpush1.msra.mxu0 0.0
  %3479 = vmatprep.subr.mxu0 0.0
  %3480 = vmatpush1.msra.mxu0 0.0
  %3481 = vmatprep.subr.mxu0 0.0
  %3482 = vmatpush1.msra.mxu0 0.0
  %3483 = vmatprep.subr.mxu0 0.0
  %3484 = vmatpush1.msra.mxu0 0.0
  %3485 = vmatprep.subr.mxu0 0.0
  %3486 = vmatpush1.msra.mxu0 0.0
  %3487 = vmatprep.subr.mxu0 0.0
  %3488 = vmatpush1.msra.mxu0 0.0
  %3489 = vmatprep.subr.mxu0 0.0
  %3490 = vmatpush1.msra.mxu0 0.0
  %3491 = vmatprep.mubr.f32.mxu0 0.0
  %3492 = vmatmul.mubr.f32.gmra.mrb[0].mxu0 %v3425
  %v3493 = vpop.f32.mrb[0].mxu0
  %v3494 = vadd.f32 %v3423, %v3493
  %v3495 = vpop.f32.mrb[0].mxu0
  %3496 = vdwg.mxu0
  %v3497 = vmax.f32 %v3494, 0.0
  %v3498 = vld [vmem:[%s10 + $0x8] sm:$0x1]
  %v3499 = vld [vmem:[%s9] sm:$0xff]
  %v3500 = vld [vmem:[%s9 + $0x8] sm:$0xff]
  %v3501 = vld [vmem:[%s9 + $0x10] sm:$0xff]
  %v3502 = vld [vmem:[%s9 + $0x18] sm:$0xff]
  %v3503 = vlaneseq
  %v3504 = vshrl.u32 %v3503, 7
  %v3505 = vsub.s32 0, %v3504
  %v3506 = vrot.slane %v3498, %v3505
  %v3508 = vsel %vm153, %v3497, 0
  %3510 = vmatprep.subr.mxu0 0.0
  %3511 = vmatpush1.msra.mxu0 %v3499
  %3512 = vmatprep.subr.mxu0 0.0
  %3513 = vmatpush1.msra.mxu0 %v3500
  %3514 = vmatprep.subr.mxu0 0.0
  %3515 = vmatpush1.msra.mxu0 %v3501
  %3516 = vmatprep.subr.mxu0 0.0
  %3517 = vmatpush1.msra.mxu0 %v3502
  %3518 = vmatprep.subr.mxu0 0.0
  %3519 = vmatpush1.msra.mxu0 0.0
  %3520 = vmatprep.subr.mxu0 0.0
  %3521 = vmatpush1.msra.mxu0 0.0
  %3522 = vmatprep.subr.mxu0 0.0
  %3523 = vmatpush1.msra.mxu0 0.0
  %3524 = vmatprep.subr.mxu0 0.0
  %3525 = vmatpush1.msra.mxu0 0.0
  %3526 = vmatprep.subr.mxu0 0.0
  %3527 = vmatpush1.msra.mxu0 0.0
  %3528 = vmatprep.subr.mxu0 0.0
  %3529 = vmatpush1.msra.mxu0 0.0
  %3530 = vmatprep.subr.mxu0 0.0
  %3531 = vmatpush1.msra.mxu0 0.0
  %3532 = vmatprep.subr.mxu0 0.0
  %3533 = vmatpush1.msra.mxu0 0.0
  %3534 = vmatprep.subr.mxu0 0.0
  %3535 = vmatpush1.msra.mxu0 0.0
  %3536 = vmatprep.subr.mxu0 0.0
  %3537 = vmatpush1.msra.mxu0 0.0
  %3538 = vmatprep.subr.mxu0 0.0
  %3539 = vmatpush1.msra.mxu0 0.0
  %3540 = vmatprep.subr.mxu0 0.0
  %3541 = vmatpush1.msra.mxu0 0.0
  %3542 = vmatprep.subr.mxu0 0.0
  %3543 = vmatpush1.msra.mxu0 0.0
  %3544 = vmatprep.subr.mxu0 0.0
  %3545 = vmatpush1.msra.mxu0 0.0
  %3546 = vmatprep.subr.mxu0 0.0
  %3547 = vmatpush1.msra.mxu0 0.0
  %3548 = vmatprep.subr.mxu0 0.0
  %3549 = vmatpush1.msra.mxu0 0.0
  %3550 = vmatprep.subr.mxu0 0.0
  %3551 = vmatpush1.msra.mxu0 0.0
  %3552 = vmatprep.subr.mxu0 0.0
  %3553 = vmatpush1.msra.mxu0 0.0
  %3554 = vmatprep.subr.mxu0 0.0
  %3555 = vmatpush1.msra.mxu0 0.0
  %3556 = vmatprep.subr.mxu0 0.0
  %3557 = vmatpush1.msra.mxu0 0.0
  %3558 = vmatprep.subr.mxu0 0.0
  %3559 = vmatpush1.msra.mxu0 0.0
  %3560 = vmatprep.subr.mxu0 0.0
  %3561 = vmatpush1.msra.mxu0 0.0
  %3562 = vmatprep.subr.mxu0 0.0
  %3563 = vmatpush1.msra.mxu0 0.0
  %3564 = vmatprep.subr.mxu0 0.0
  %3565 = vmatpush1.msra.mxu0 0.0
  %3566 = vmatprep.subr.mxu0 0.0
  %3567 = vmatpush1.msra.mxu0 0.0
  %3568 = vmatprep.subr.mxu0 0.0
  %3569 = vmatpush1.msra.mxu0 0.0
  %3570 = vmatprep.subr.mxu0 0.0
  %3571 = vmatpush1.msra.mxu0 0.0
  %3572 = vmatprep.subr.mxu0 0.0
  %3573 = vmatpush1.msra.mxu0 0.0
  %3574 = vmatprep.mubr.f32.mxu0 0.0
  %3575 = vmatmul.mubr.f32.gmra.mrb[0].mxu0 %v3508
  %v3576 = vpop.f32.mrb[0].mxu0
  %v3577 = vadd.f32 %v3506, %v3576
  %v3578 = vpop.f32.mrb[0].mxu0
  %3579 = vdwg.mxu0
  %v3580 = vld [vmem:[%s1] sm:$0x3]
  %v3581 = vmul.f32 %v3577, 0.5
  %v3582 = vmul.f32 %v3581, 1.442695
  %v3583 = vpow.pop %v3582
  %3585 = vrot.lane.b32.xlu0 %v3583, 112
  %v3586 = vpop.permute.xlu0 %3585
  %v3588 = vmul.f32 %v3580, %v3586
  %v3589 = vadd.f32 %v3588, %v3577
  %3591 = vrot.lane.b32.xlu0 %v3589, 32
  %v3592 = vpop.permute.xlu0 %3591
  %v3594 = vsel %vm153, %v3577, %v3592
  %vm3595 = vcmask 386048
  %3596 = vst.msk [vmem:[%s11] sm:$0x3] %vm3595, %v3594
  // Predicated region
  $region46: #{latent_encoder_forward.1} parent=0 // pred_check
    _
  $region47: #{latent_encoder_forward.1} parent=0 // pred_check_branch
    %3598 = sbr.rel (0) target = $region49
  $region48: #{latent_encoder_forward.1} parent=0 // pred_region
    _
  $region49: #{latent_encoder_forward.1} parent=0 // pred_fallthru
    _
  // Predicated region
  $region50: #{latent_encoder_forward.1} parent=0 // pred_check
    _
  $region51: #{latent_encoder_forward.1} parent=0 // pred_check_branch
    %3600 = sbr.rel (0) target = $region53
  $region52: #{latent_encoder_forward.1} parent=0 // pred_region
    _
  $region53: #{latent_encoder_forward.1} parent=0 // pred_fallthru
    _

</llo_original>
